<compile_context>
chip_gen: v7x
topology: tpu7x:2x2x1
jax: 0.10.0
libtpu: 0.0.40
codegen_flags: <defaults>
</compile_context>

<pallas_src>
import functools

import jax
import jax.numpy as jnp
from jax import lax
from jax.experimental import pallas as pl
from jax.experimental.pallas import tpu as pltpu


# ----------------------------------------------------------------------------
# helpers
# ----------------------------------------------------------------------------
def _pick_row_block(m):
    """Row-block size for the input projection (second-minor => multiple of 8)."""
    if m <= 1024:
        return m
    for bm in (1024, 512, 256, 128):
        if m % bm == 0:
            return bm
    return m


def _pick_time_chunk(s):
    """Time-chunk size for the recurrence grid axis."""
    if s <= 128:
        return s
    for t in (128, 64, 32, 16, 8):
        if s % t == 0:
            return t
    return s


# ----------------------------------------------------------------------------
# Kernel 1: hoisted input projection (tiled over M = S*B rows, both directions)
#   gx_f = x_fwd_order  @ W_ih_fwd^T      (bf16, no bias)
#   gx_b = x_rev_order  @ W_ih_bwd^T      (bf16, no bias; rows are reversed time)
# ----------------------------------------------------------------------------
def input_proj_kernel(*refs, n_parts):
    xf = refs[0:n_parts]
    xb = refs[n_parts:2 * n_parts]
    wf = refs[2 * n_parts:3 * n_parts]
    wb = refs[3 * n_parts:4 * n_parts]
    of_ref = refs[4 * n_parts]
    ob_ref = refs[4 * n_parts + 1]

    accf = jnp.dot(xf[0][...], wf[0][...], preferred_element_type=jnp.float32)
    accb = jnp.dot(xb[0][...], wb[0][...], preferred_element_type=jnp.float32)
    for p in range(1, n_parts):
        accf = accf + jnp.dot(xf[p][...], wf[p][...],
                              preferred_element_type=jnp.float32)
        accb = accb + jnp.dot(xb[p][...], wb[p][...],
                              preferred_element_type=jnp.float32)
    of_ref[...] = accf.astype(of_ref.dtype)
    ob_ref[...] = accb.astype(ob_ref.dtype)


def run_input_proj(xf_parts, xb_parts, wf_parts, wb_parts):
    n = len(xf_parts)
    m = xf_parts[0].shape[0]
    g = wf_parts[0].shape[1]          # 4H
    bm = _pick_row_block(m)
    grid = (m // bm,)

    x_specs = [pl.BlockSpec((bm, p.shape[1]), lambda i: (i, 0))
               for p in (xf_parts + xb_parts)]
    w_specs = [pl.BlockSpec(p.shape, lambda i: (0, 0))
               for p in (wf_parts + wb_parts)]

    return pl.pallas_call(
        functools.partial(input_proj_kernel, n_parts=n),
        out_shape=(jax.ShapeDtypeStruct((m, g), jnp.bfloat16),
                   jax.ShapeDtypeStruct((m, g), jnp.bfloat16)),
        grid_spec=pltpu.PrefetchScalarGridSpec(
            num_scalar_prefetch=0,
            grid=grid,
            in_specs=x_specs + w_specs,
            out_specs=(pl.BlockSpec((bm, g), lambda i: (i, 0)),
                       pl.BlockSpec((bm, g), lambda i: (i, 0))),
        ),
        compiler_params=pltpu.CompilerParams(
            dimension_semantics=("parallel",)),
    )(*xf_parts, *xb_parts, *wf_parts, *wb_parts)


# ----------------------------------------------------------------------------
# Kernel 2: the sequential recurrence, both directions fused in one body.
# Grid = (n_time_chunks,) "arbitrary".  gx_b / out_b use reversed-time order so
# both directions walk kernel time s = 0..T-1 with static indices.
# ----------------------------------------------------------------------------
def bilstm_recurrence_kernel(gxf_ref, gxb_ref, whhf_ref, whhb_ref, bias_ref,
                             h0_ref, c0_ref, outf_ref, outb_ref, h_scr, c_scr):
    T, B, _ = gxf_ref.shape
    H = whhf_ref.shape[0]

    @pl.when(pl.program_id(0) == 0)
    def _init():
        h_scr[...] = h0_ref[...]
        c_scr[...] = c0_ref[...]

    whh_f = whhf_ref[...]                                   # (H, 4H) bf16
    whh_b = whhb_ref[...]
    bias_f = jnp.broadcast_to(bias_ref[0], (B, 4 * H))      # f32, hoisted
    bias_b = jnp.broadcast_to(bias_ref[1], (B, 4 * H))

    # carries live in vregs for the whole chunk
    h_f = h_scr[0]
    c_f = c_scr[0]
    h_b = h_scr[1]
    c_b = c_scr[1]

    def cell(gates, c_prev):
        i_g = jax.nn.sigmoid(gates[:, 0 * H:1 * H])
        f_g = jax.nn.sigmoid(gates[:, 1 * H:2 * H])
        g_g = jnp.tanh(gates[:, 2 * H:3 * H])
        o_g = jax.nn.sigmoid(gates[:, 3 * H:4 * H])
        c_new = f_g * c_prev + i_g * g_g
        h_new = o_g * jnp.tanh(c_new)
        return h_new, c_new

    def step(s, h_f, c_f, h_b, c_b):
        gf = (gxf_ref[s].astype(jnp.float32) + bias_f
              + jnp.dot(h_f.astype(whh_f.dtype), whh_f,
                        preferred_element_type=jnp.float32))
        gb = (gxb_ref[s].astype(jnp.float32) + bias_b
              + jnp.dot(h_b.astype(whh_b.dtype), whh_b,
                        preferred_element_type=jnp.float32))
        h_f, c_f = cell(gf, c_f)
        h_b, c_b = cell(gb, c_b)
        outf_ref[s] = h_f.astype(outf_ref.dtype)
        outb_ref[s] = h_b.astype(outb_ref.dtype)
        return h_f, c_f, h_b, c_b

    if T <= 64:
        # fully static unroll: concrete gx/out indices, best scheduling
        for s in range(T):
            h_f, c_f, h_b, c_b = step(s, h_f, c_f, h_b, c_b)
    else:
        def body(s, carry):
            return step(s, *carry)
        h_f, c_f, h_b, c_b = lax.fori_loop(
            0, T, body, (h_f, c_f, h_b, c_b), unroll=8)

    # persist carries for the next time chunk
    h_scr[0] = h_f
    c_scr[0] = c_f
    h_scr[1] = h_b
    c_scr[1] = c_b


def run_bilstm_recurrence(gx_f, gx_b, whh_f, whh_b, bias, h0_l, c0_l,
                          out_dtype=jnp.bfloat16):
    S, B, G = gx_f.shape
    H = whh_f.shape[0]
    T = _pick_time_chunk(S)
    n_chunks = S // T

    return pl.pallas_call(
        bilstm_recurrence_kernel,
        out_shape=(jax.ShapeDtypeStruct((S, B, H), out_dtype),
                   jax.ShapeDtypeStruct((S, B, H), out_dtype)),
        grid_spec=pltpu.PrefetchScalarGridSpec(
            num_scalar_prefetch=0,
            grid=(n_chunks,),
            in_specs=[
                pl.BlockSpec((T, B, G), lambda c: (c, 0, 0)),     # gx fwd
                pl.BlockSpec((T, B, G), lambda c: (c, 0, 0)),     # gx bwd (rev)
                pl.BlockSpec((H, G), lambda c: (0, 0)),           # W_hh fwd
                pl.BlockSpec((H, G), lambda c: (0, 0)),           # W_hh bwd
                pl.BlockSpec((2, 1, G), lambda c: (0, 0, 0)),     # biases (f32)
                pl.BlockSpec((2, B, H), lambda c: (0, 0, 0)),     # h0
                pl.BlockSpec((2, B, H), lambda c: (0, 0, 0)),     # c0
            ],
            out_specs=(pl.BlockSpec((T, B, H), lambda c: (c, 0, 0)),
                       pl.BlockSpec((T, B, H), lambda c: (c, 0, 0))),
            scratch_shapes=[pltpu.VMEM((2, B, H), jnp.float32),   # h carry
                            pltpu.VMEM((2, B, H), jnp.float32)],  # c carry
        ),
        compiler_params=pltpu.CompilerParams(
            dimension_semantics=("arbitrary",)),
    )(gx_f, gx_b, whh_f, whh_b, bias, h0_l, c0_l)


# ----------------------------------------------------------------------------
# Kernel 3: fused mean-over-directions + Linear head
#   pred = (h_fwd + h_bwd) @ (0.5*W^T) + b      (single matmul, lane-padded)
# ----------------------------------------------------------------------------
def head_kernel(hf_ref, hb_ref, w_ref, b_ref, o_ref):
    hsum = hf_ref[...].astype(jnp.float32) + hb_ref[...].astype(jnp.float32)
    o_ref[...] = (jnp.dot(hsum.astype(w_ref.dtype), w_ref[...],
                          preferred_element_type=jnp.float32) + b_ref[...])


def run_head(h_fwd, h_bwd, w_pad, b_pad):
    B = h_fwd.shape[0]
    o_pad = w_pad.shape[1]
    return pl.pallas_call(
        head_kernel,
        out_shape=jax.ShapeDtypeStruct((B, o_pad), jnp.float32),
    )(h_fwd, h_bwd, w_pad, b_pad)


# ----------------------------------------------------------------------------
# Model wrapper (mirrors the PyTorch BiLSTM forward pass)
# ----------------------------------------------------------------------------
class BiLSTMPallas:

    def __init__(self, input_size, hidden_size, num_layers, output_size, key):
        self.input_size = input_size
        self.hidden_size = hidden_size
        self.num_layers = num_layers
        self.output_size = output_size
        self.num_directions = 2

        H = hidden_size
        k = 1.0 / jnp.sqrt(jnp.float32(H))

        self.layers = []
        for layer in range(num_layers):
            in_feat = input_size if layer == 0 else 2 * H
            per_dir = []
            for _ in range(self.num_directions):
                key, k1, k2, k3, k4 = jax.random.split(key, 5)
                w_ih = jax.random.uniform(k1, (4 * H, in_feat), jnp.float32, -k, k)
                w_hh = jax.random.uniform(k2, (4 * H, H), jnp.float32, -k, k)
                b_ih = jax.random.uniform(k3, (4 * H,), jnp.float32, -k, k)
                b_hh = jax.random.uniform(k4, (4 * H,), jnp.float32, -k, k)
                per_dir.append((w_ih.T, w_hh.T, b_ih + b_hh))
            wih_f, whh_f, bias_f = per_dir[0]
            wih_b, whh_b, bias_b = per_dir[1]
            if layer == 0:
                wf_parts = [wih_f.astype(jnp.bfloat16)]
                wb_parts = [wih_b.astype(jnp.bfloat16)]
            else:
                # rows [0:H] act on the previous layer's fwd features, rows
                # [H:2H] on its bwd features (PyTorch concat order) -> lets us
                # skip materializing an (S,B,2H) concat between layers.
                wf_parts = [wih_f[:H].astype(jnp.bfloat16),
                            wih_f[H:].astype(jnp.bfloat16)]
                wb_parts = [wih_b[:H].astype(jnp.bfloat16),
                            wih_b[H:].astype(jnp.bfloat16)]
            self.layers.append({
                "wf_parts": wf_parts,
                "wb_parts": wb_parts,
                "bias": jnp.stack([bias_f, bias_b])[:, None, :],      # (2,1,4H) f32
                "whh_f": whh_f.astype(jnp.bfloat16),                  # (H,4H)
                "whh_b": whh_b.astype(jnp.bfloat16),
            })

        key, kw, kb = jax.random.split(key, 3)
        kl = 1.0 / jnp.sqrt(jnp.float32(H))
        w_lin = jax.random.uniform(kw, (output_size, H), jnp.float32, -kl, kl)
        b_lin = jax.random.uniform(kb, (output_size,), jnp.float32, -kl, kl)
        o_pad = max(128, ((output_size + 127) // 128) * 128)  # lane-dense store
        # fold the 0.5 (mean over the two directions) into the head weights
        w_pad = jnp.zeros((H, o_pad), jnp.float32).at[:, :output_size].set(0.5 * w_lin.T)
        b_pad = jnp.zeros((1, o_pad), jnp.float32).at[:, :output_size].set(b_lin)
        self.w_head = w_pad.astype(jnp.bfloat16)
        self.b_head = b_pad
        self._state_key = key

    def __call__(self, input_seq):
        # input_seq: (B, S, input_size), batch-first like the PyTorch module.
        B, S = input_seq.shape[0], input_seq.shape[1]
        H = self.hidden_size
        x = input_seq.reshape(B, S, self.input_size).astype(jnp.float32)

        # TODO(synk): PyTorch draws fresh torch.randn h_0/c_0 every forward
        # (non-deterministic); here we use a fixed deterministic draw of the
        # same shape.
        h0 = jax.random.normal(jax.random.fold_in(self._state_key, 0),
                               (self.num_directions * self.num_layers, B, H),
                               jnp.float32)
        c0 = jax.random.normal(jax.random.fold_in(self._state_key, 1),
                               (self.num_directions * self.num_layers, B, H),
                               jnp.float32)

        x_tm = jnp.transpose(x, (1, 0, 2)).astype(jnp.bfloat16)       # (S,B,F)
        # forward-time features (for the fwd direction's gates) and
        # reversed-time features (for the bwd direction's gates)
        xf_parts = [x_tm.reshape(S * B, self.input_size)]
        xb_parts = [jnp.flip(x_tm, axis=0).reshape(S * B, self.input_size)]

        out_f = out_b = None
        for layer in range(self.num_layers):
            p = self.layers[layer]
            gx_f, gx_b = run_input_proj(xf_parts, xb_parts,
                                        p["wf_parts"], p["wb_parts"])
            gx_f = gx_f.reshape(S, B, 4 * H)      # free reshapes
            gx_b = gx_b.reshape(S, B, 4 * H)      # bwd rows already reversed time
            h0_l = h0[2 * layer:2 * layer + 2]    # (2,B,H): [fwd, bwd]
            c0_l = c0[2 * layer:2 * layer + 2]
            # out_f: fwd hidden in absolute time order; out_b: bwd hidden in
            # reversed time order (out_b[s] == absolute t = S-1-s)
            out_f, out_b = run_bilstm_recurrence(
                gx_f, gx_b, p["whh_f"], p["whh_b"], p["bias"], h0_l, c0_l)

            if layer + 1 < self.num_layers:
                out_b_abs = jnp.flip(out_b, axis=0)   # bwd features, absolute order
                out_f_rev = jnp.flip(out_f, axis=0)   # fwd features, reversed order
                xf_parts = [out_f.reshape(S * B, H), out_b_abs.reshape(S * B, H)]
                xb_parts = [out_f_rev.reshape(S * B, H), out_b.reshape(S * B, H)]

        # output.view(B,S,2,H).mean(dim=2) -> linear -> last step (t = S-1)
        h_f_last = out_f[S - 1]            # fwd hidden at t = S-1
        h_b_last = out_b[0]                # bwd hidden at absolute t = S-1
        pred_pad = run_head(h_f_last, h_b_last, self.w_head, self.b_head)
        return pred_pad[:, :self.output_size]


# ----------------------------------------------------------------------------
# Demo
# ----------------------------------------------------------------------------
if __name__ == "__main__":
    key = jax.random.PRNGKey(0)
    key, data_key, model_key = jax.random.split(key, 3)

    batch, seq_len = 2, 8
    input_size, hidden_size, num_layers, output_size = 4, 32, 2, 3

    x = jax.random.normal(data_key, (batch, seq_len, input_size), jnp.float32)

    model = BiLSTMPallas(input_size, hidden_size, num_layers, output_size,
                         model_key)
    fwd = jax.jit(model.__call__)
    pred = jax.block_until_ready(fwd(x))
    assert pred.shape == (batch, output_size)
    assert bool(jnp.all(jnp.isfinite(pred)))
    print("KERNEL_OK")
</pallas_src>

<mosaic_0001>
module attributes {stable_mosaic.version = 11 : i64} {
  func.func @input_proj_kernel(%arg0: i32, %arg1: memref<16x4xbf16, #tpu.memory_space<vmem>>, %arg2: memref<16x4xbf16, #tpu.memory_space<vmem>>, %arg3: memref<4x128xbf16, #tpu.memory_space<vmem>>, %arg4: memref<4x128xbf16, #tpu.memory_space<vmem>>, %arg5: memref<16x128xbf16, #tpu.memory_space<vmem>>, %arg6: memref<16x128xbf16, #tpu.memory_space<vmem>>) attributes {dimension_semantics = [#tpu.dimension_semantics<parallel>], iteration_bounds = array<i64: 1>, scalar_prefetch = 0 : i64, scratch_operands = 0 : i64, tpu.core_type = #tpu.core_type<tc>, window_params = [{transform_indices = @transform_0, window_bounds = array<i64: 16, 4>}, {transform_indices = @transform_1, window_bounds = array<i64: 16, 4>}, {pipeline_mode = #tpu.pipeline_mode<synchronous>, transform_indices = @transform_2, window_bounds = array<i64: 4, 128>}, {pipeline_mode = #tpu.pipeline_mode<synchronous>, transform_indices = @transform_3, window_bounds = array<i64: 4, 128>}, {transform_indices = @transform_4, window_bounds = array<i64: 16, 128>}, {transform_indices = @transform_5, window_bounds = array<i64: 16, 128>}]} {
    %c0 = arith.constant 0 : index
    %c0_0 = arith.constant 0 : index
    %0 = vector.load %arg1[%c0, %c0_0] : memref<16x4xbf16, #tpu.memory_space<vmem>>, vector<16x4xbf16>
    %c0_1 = arith.constant 0 : index
    %c0_2 = arith.constant 0 : index
    %1 = vector.load %arg3[%c0_1, %c0_2] : memref<4x128xbf16, #tpu.memory_space<vmem>>, vector<4x128xbf16>
    %cst = arith.constant dense<0.000000e+00> : vector<16x128xf32>
    %2 = tpu.matmul %0, %1, %cst {dimension_numbers = #tpu.dot_dimension_numbers<[1], [0], [0], [1], [0, 0, 1, 1], [], []>} : vector<16x4xbf16>, vector<4x128xbf16>, vector<16x128xf32> -> vector<16x128xf32>
    %c0_3 = arith.constant 0 : index
    %c0_4 = arith.constant 0 : index
    %3 = vector.load %arg2[%c0_3, %c0_4] : memref<16x4xbf16, #tpu.memory_space<vmem>>, vector<16x4xbf16>
    %c0_5 = arith.constant 0 : index
    %c0_6 = arith.constant 0 : index
    %4 = vector.load %arg4[%c0_5, %c0_6] : memref<4x128xbf16, #tpu.memory_space<vmem>>, vector<4x128xbf16>
    %cst_7 = arith.constant dense<0.000000e+00> : vector<16x128xf32>
    %5 = tpu.matmul %3, %4, %cst_7 {dimension_numbers = #tpu.dot_dimension_numbers<[1], [0], [0], [1], [0, 0, 1, 1], [], []>} : vector<16x4xbf16>, vector<4x128xbf16>, vector<16x128xf32> -> vector<16x128xf32>
    %6 = arith.truncf %2 : vector<16x128xf32> to vector<16x128xbf16>
    %c0_8 = arith.constant 0 : index
    %c0_9 = arith.constant 0 : index
    %7 = vector.load %arg5[%c0_8, %c0_9] : memref<16x128xbf16, #tpu.memory_space<vmem>>, vector<16x128xbf16>
    tpu.vector_store %arg5[%c0_8, %c0_9], %6 {strides = array<i32>} : memref<16x128xbf16, #tpu.memory_space<vmem>>, vector<16x128xbf16>,
    %8 = arith.truncf %5 : vector<16x128xf32> to vector<16x128xbf16>
    %c0_10 = arith.constant 0 : index
    %c0_11 = arith.constant 0 : index
    %9 = vector.load %arg6[%c0_10, %c0_11] : memref<16x128xbf16, #tpu.memory_space<vmem>>, vector<16x128xbf16>
    tpu.vector_store %arg6[%c0_10, %c0_11], %8 {strides = array<i32>} : memref<16x128xbf16, #tpu.memory_space<vmem>>, vector<16x128xbf16>,
    return
  }
  func.func @transform_0(%arg0: i32) -> (i32, i32) {
    %c0_i32 = arith.constant 0 : i32
    %c0_i32_0 = arith.constant 0 : i32
    return %arg0, %c0_i32 : i32, i32
  }
  func.func @transform_1(%arg0: i32) -> (i32, i32) {
    %c0_i32 = arith.constant 0 : i32
    %c0_i32_0 = arith.constant 0 : i32
    return %arg0, %c0_i32 : i32, i32
  }
  func.func @transform_2(%arg0: i32) -> (i32, i32) {
    %c0_i32 = arith.constant 0 : i32
    %c0_i32_0 = arith.constant 0 : i32
    %c0_i32_1 = arith.constant 0 : i32
    return %c0_i32, %c0_i32_0 : i32, i32
  }
  func.func @transform_3(%arg0: i32) -> (i32, i32) {
    %c0_i32 = arith.constant 0 : i32
    %c0_i32_0 = arith.constant 0 : i32
    %c0_i32_1 = arith.constant 0 : i32
    return %c0_i32, %c0_i32_0 : i32, i32
  }
  func.func @transform_4(%arg0: i32) -> (i32, i32) {
    %c0_i32 = arith.constant 0 : i32
    %c0_i32_0 = arith.constant 0 : i32
    return %arg0, %c0_i32 : i32, i32
  }
  func.func @transform_5(%arg0: i32) -> (i32, i32) {
    %c0_i32 = arith.constant 0 : i32
    %c0_i32_0 = arith.constant 0 : i32
    return %arg0, %c0_i32 : i32, i32
  }
}

module attributes {stable_mosaic.version = 11 : i64} {
  func.func @input_proj_kernel(%arg0: i32, %arg1: memref<16x32xbf16, #tpu.memory_space<vmem>>, %arg2: memref<16x32xbf16, #tpu.memory_space<vmem>>, %arg3: memref<16x32xbf16, #tpu.memory_space<vmem>>, %arg4: memref<16x32xbf16, #tpu.memory_space<vmem>>, %arg5: memref<32x128xbf16, #tpu.memory_space<vmem>>, %arg6: memref<32x128xbf16, #tpu.memory_space<vmem>>, %arg7: memref<32x128xbf16, #tpu.memory_space<vmem>>, %arg8: memref<32x128xbf16, #tpu.memory_space<vmem>>, %arg9: memref<16x128xbf16, #tpu.memory_space<vmem>>, %arg10: memref<16x128xbf16, #tpu.memory_space<vmem>>) attributes {dimension_semantics = [#tpu.dimension_semantics<parallel>], iteration_bounds = array<i64: 1>, scalar_prefetch = 0 : i64, scratch_operands = 0 : i64, tpu.core_type = #tpu.core_type<tc>, window_params = [{transform_indices = @transform_0, window_bounds = array<i64: 16, 32>}, {transform_indices = @transform_1, window_bounds = array<i64: 16, 32>}, {transform_indices = @transform_2, window_bounds = array<i64: 16, 32>}, {transform_indices = @transform_3, window_bounds = array<i64: 16, 32>}, {pipeline_mode = #tpu.pipeline_mode<synchronous>, transform_indices = @transform_4, window_bounds = array<i64: 32, 128>}, {pipeline_mode = #tpu.pipeline_mode<synchronous>, transform_indices = @transform_5, window_bounds = array<i64: 32, 128>}, {pipeline_mode = #tpu.pipeline_mode<synchronous>, transform_indices = @transform_6, window_bounds = array<i64: 32, 128>}, {pipeline_mode = #tpu.pipeline_mode<synchronous>, transform_indices = @transform_7, window_bounds = array<i64: 32, 128>}, {transform_indices = @transform_8, window_bounds = array<i64: 16, 128>}, {transform_indices = @transform_9, window_bounds = array<i64: 16, 128>}]} {
    %c0 = arith.constant 0 : index
    %c0_0 = arith.constant 0 : index
    %0 = vector.load %arg1[%c0, %c0_0] : memref<16x32xbf16, #tpu.memory_space<vmem>>, vector<16x32xbf16>
    %c0_1 = arith.constant 0 : index
    %c0_2 = arith.constant 0 : index
    %1 = vector.load %arg5[%c0_1, %c0_2] : memref<32x128xbf16, #tpu.memory_space<vmem>>, vector<32x128xbf16>
    %cst = arith.constant dense<0.000000e+00> : vector<16x128xf32>
    %2 = tpu.matmul %0, %1, %cst {dimension_numbers = #tpu.dot_dimension_numbers<[1], [0], [0], [1], [0, 0, 1, 1], [], []>} : vector<16x32xbf16>, vector<32x128xbf16>, vector<16x128xf32> -> vector<16x128xf32>
    %c0_3 = arith.constant 0 : index
    %c0_4 = arith.constant 0 : index
    %3 = vector.load %arg3[%c0_3, %c0_4] : memref<16x32xbf16, #tpu.memory_space<vmem>>, vector<16x32xbf16>
    %c0_5 = arith.constant 0 : index
    %c0_6 = arith.constant 0 : index
    %4 = vector.load %arg7[%c0_5, %c0_6] : memref<32x128xbf16, #tpu.memory_space<vmem>>, vector<32x128xbf16>
    %cst_7 = arith.constant dense<0.000000e+00> : vector<16x128xf32>
    %5 = tpu.matmul %3, %4, %cst_7 {dimension_numbers = #tpu.dot_dimension_numbers<[1], [0], [0], [1], [0, 0, 1, 1], [], []>} : vector<16x32xbf16>, vector<32x128xbf16>, vector<16x128xf32> -> vector<16x128xf32>
    %c0_8 = arith.constant 0 : index
    %c0_9 = arith.constant 0 : index
    %6 = vector.load %arg2[%c0_8, %c0_9] : memref<16x32xbf16, #tpu.memory_space<vmem>>, vector<16x32xbf16>
    %c0_10 = arith.constant 0 : index
    %c0_11 = arith.constant 0 : index
    %7 = vector.load %arg6[%c0_10, %c0_11] : memref<32x128xbf16, #tpu.memory_space<vmem>>, vector<32x128xbf16>
    %cst_12 = arith.constant dense<0.000000e+00> : vector<16x128xf32>
    %8 = tpu.matmul %6, %7, %cst_12 {dimension_numbers = #tpu.dot_dimension_numbers<[1], [0], [0], [1], [0, 0, 1, 1], [], []>} : vector<16x32xbf16>, vector<32x128xbf16>, vector<16x128xf32> -> vector<16x128xf32>
    %9 = arith.addf %2, %8 : vector<16x128xf32>
    %c0_13 = arith.constant 0 : index
    %c0_14 = arith.constant 0 : index
    %10 = vector.load %arg4[%c0_13, %c0_14] : memref<16x32xbf16, #tpu.memory_space<vmem>>, vector<16x32xbf16>
    %c0_15 = arith.constant 0 : index
    %c0_16 = arith.constant 0 : index
    %11 = vector.load %arg8[%c0_15, %c0_16] : memref<32x128xbf16, #tpu.memory_space<vmem>>, vector<32x128xbf16>
    %cst_17 = arith.constant dense<0.000000e+00> : vector<16x128xf32>
    %12 = tpu.matmul %10, %11, %cst_17 {dimension_numbers = #tpu.dot_dimension_numbers<[1], [0], [0], [1], [0, 0, 1, 1], [], []>} : vector<16x32xbf16>, vector<32x128xbf16>, vector<16x128xf32> -> vector<16x128xf32>
    %13 = arith.addf %5, %12 : vector<16x128xf32>
    %14 = arith.truncf %9 : vector<16x128xf32> to vector<16x128xbf16>
    %c0_18 = arith.constant 0 : index
    %c0_19 = arith.constant 0 : index
    %15 = vector.load %arg9[%c0_18, %c0_19] : memref<16x128xbf16, #tpu.memory_space<vmem>>, vector<16x128xbf16>
    tpu.vector_store %arg9[%c0_18, %c0_19], %14 {strides = array<i32>} : memref<16x128xbf16, #tpu.memory_space<vmem>>, vector<16x128xbf16>,
    %16 = arith.truncf %13 : vector<16x128xf32> to vector<16x128xbf16>
    %c0_20 = arith.constant 0 : index
    %c0_21 = arith.constant 0 : index
    %17 = vector.load %arg10[%c0_20, %c0_21] : memref<16x128xbf16, #tpu.memory_space<vmem>>, vector<16x128xbf16>
    tpu.vector_store %arg10[%c0_20, %c0_21], %16 {strides = array<i32>} : memref<16x128xbf16, #tpu.memory_space<vmem>>, vector<16x128xbf16>,
    return
  }
  func.func @transform_0(%arg0: i32) -> (i32, i32) {
    %c0_i32 = arith.constant 0 : i32
    %c0_i32_0 = arith.constant 0 : i32
    return %arg0, %c0_i32 : i32, i32
  }
  func.func @transform_1(%arg0: i32) -> (i32, i32) {
    %c0_i32 = arith.constant 0 : i32
    %c0_i32_0 = arith.constant 0 : i32
    return %arg0, %c0_i32 : i32, i32
  }
  func.func @transform_2(%arg0: i32) -> (i32, i32) {
    %c0_i32 = arith.constant 0 : i32
    %c0_i32_0 = arith.constant 0 : i32
    return %arg0, %c0_i32 : i32, i32
  }
  func.func @transform_3(%arg0: i32) -> (i32, i32) {
    %c0_i32 = arith.constant 0 : i32
    %c0_i32_0 = arith.constant 0 : i32
    return %arg0, %c0_i32 : i32, i32
  }
  func.func @transform_4(%arg0: i32) -> (i32, i32) {
    %c0_i32 = arith.constant 0 : i32
    %c0_i32_0 = arith.constant 0 : i32
    %c0_i32_1 = arith.constant 0 : i32
    return %c0_i32, %c0_i32_0 : i32, i32
  }
  func.func @transform_5(%arg0: i32) -> (i32, i32) {
    %c0_i32 = arith.constant 0 : i32
    %c0_i32_0 = arith.constant 0 : i32
    %c0_i32_1 = arith.constant 0 : i32
    return %c0_i32, %c0_i32_0 : i32, i32
  }
  func.func @transform_6(%arg0: i32) -> (i32, i32) {
    %c0_i32 = arith.constant 0 : i32
    %c0_i32_0 = arith.constant 0 : i32
    %c0_i32_1 = arith.constant 0 : i32
    return %c0_i32, %c0_i32_0 : i32, i32
  }
  func.func @transform_7(%arg0: i32) -> (i32, i32) {
    %c0_i32 = arith.constant 0 : i32
    %c0_i32_0 = arith.constant 0 : i32
    %c0_i32_1 = arith.constant 0 : i32
    return %c0_i32, %c0_i32_0 : i32, i32
  }
  func.func @transform_8(%arg0: i32) -> (i32, i32) {
    %c0_i32 = arith.constant 0 : i32
    %c0_i32_0 = arith.constant 0 : i32
    return %arg0, %c0_i32 : i32, i32
  }
  func.func @transform_9(%arg0: i32) -> (i32, i32) {
    %c0_i32 = arith.constant 0 : i32
    %c0_i32_0 = arith.constant 0 : i32
    return %arg0, %c0_i32 : i32, i32
  }
}

module attributes {stable_mosaic.version = 11 : i64} {
  func.func @bilstm_recurrence_kernel(%arg0: i32, %arg1: memref<8x2x128xbf16, #tpu.memory_space<vmem>>, %arg2: memref<8x2x128xbf16, #tpu.memory_space<vmem>>, %arg3: memref<32x128xbf16, #tpu.memory_space<vmem>>, %arg4: memref<32x128xbf16, #tpu.memory_space<vmem>>, %arg5: memref<2x1x128xf32, #tpu.memory_space<vmem>>, %arg6: memref<2x2x32xf32, #tpu.memory_space<vmem>>, %arg7: memref<2x2x32xf32, #tpu.memory_space<vmem>>, %arg8: memref<8x2x32xbf16, #tpu.memory_space<vmem>>, %arg9: memref<8x2x32xbf16, #tpu.memory_space<vmem>>, %arg10: memref<2x2x32xf32, #tpu.memory_space<vmem>>, %arg11: memref<2x2x32xf32, #tpu.memory_space<vmem>>) attributes {dimension_semantics = [#tpu.dimension_semantics<arbitrary>], iteration_bounds = array<i64: 1>, scalar_prefetch = 0 : i64, scratch_operands = 2 : i64, tpu.core_type = #tpu.core_type<tc>, window_params = [{transform_indices = @transform_0, window_bounds = array<i64: 8, 2, 128>}, {transform_indices = @transform_1, window_bounds = array<i64: 8, 2, 128>}, {pipeline_mode = #tpu.pipeline_mode<synchronous>, transform_indices = @transform_2, window_bounds = array<i64: 32, 128>}, {pipeline_mode = #tpu.pipeline_mode<synchronous>, transform_indices = @transform_3, window_bounds = array<i64: 32, 128>}, {pipeline_mode = #tpu.pipeline_mode<synchronous>, transform_indices = @transform_4, window_bounds = array<i64: 2, 1, 128>}, {pipeline_mode = #tpu.pipeline_mode<synchronous>, transform_indices = @transform_5, window_bounds = array<i64: 2, 2, 32>}, {pipeline_mode = #tpu.pipeline_mode<synchronous>, transform_indices = @transform_6, window_bounds = array<i64: 2, 2, 32>}, {transform_indices = @transform_7, window_bounds = array<i64: 8, 2, 32>}, {transform_indices = @transform_8, window_bounds = array<i64: 8, 2, 32>}]} {
    %c0_i32 = arith.constant 0 : i32
    %0 = arith.cmpi eq, %arg0, %c0_i32 : i32
    %1 = arith.extui %0 : i1 to i32
    %c0_i32_0 = arith.constant 0 : i32
    %2 = arith.cmpi ne, %1, %c0_i32_0 : i32
    scf.if %2 {
      %c0_186 = arith.constant 0 : index
      %c0_187 = arith.constant 0 : index
      %c0_188 = arith.constant 0 : index
      %609 = vector.load %arg6[%c0_186, %c0_187, %c0_188] : memref<2x2x32xf32, #tpu.memory_space<vmem>>, vector<2x2x32xf32>
      %c0_189 = arith.constant 0 : index
      %c0_190 = arith.constant 0 : index
      %c0_191 = arith.constant 0 : index
      %610 = vector.load %arg10[%c0_189, %c0_190, %c0_191] : memref<2x2x32xf32, #tpu.memory_space<vmem>>, vector<2x2x32xf32>
      tpu.vector_store %arg10[%c0_189, %c0_190, %c0_191], %609 {strides = array<i32>} : memref<2x2x32xf32, #tpu.memory_space<vmem>>, vector<2x2x32xf32>,
      %c0_192 = arith.constant 0 : index
      %c0_193 = arith.constant 0 : index
      %c0_194 = arith.constant 0 : index
      %611 = vector.load %arg7[%c0_192, %c0_193, %c0_194] : memref<2x2x32xf32, #tpu.memory_space<vmem>>, vector<2x2x32xf32>
      %c0_195 = arith.constant 0 : index
      %c0_196 = arith.constant 0 : index
      %c0_197 = arith.constant 0 : index
      %612 = vector.load %arg11[%c0_195, %c0_196, %c0_197] : memref<2x2x32xf32, #tpu.memory_space<vmem>>, vector<2x2x32xf32>
      tpu.vector_store %arg11[%c0_195, %c0_196, %c0_197], %611 {strides = array<i32>} : memref<2x2x32xf32, #tpu.memory_space<vmem>>, vector<2x2x32xf32>,
    } else {
    }
    %c0 = arith.constant 0 : index
    %c0_1 = arith.constant 0 : index
    %3 = vector.load %arg3[%c0, %c0_1] : memref<32x128xbf16, #tpu.memory_space<vmem>>, vector<32x128xbf16>
    %c0_2 = arith.constant 0 : index
    %c0_3 = arith.constant 0 : index
    %4 = vector.load %arg4[%c0_2, %c0_3] : memref<32x128xbf16, #tpu.memory_space<vmem>>, vector<32x128xbf16>
    %c0_4 = arith.constant 0 : index
    %c0_5 = arith.constant 0 : index
    %c0_6 = arith.constant 0 : index
    %5 = vector.load %arg5[%c0_4, %c0_5, %c0_6] : memref<2x1x128xf32, #tpu.memory_space<vmem>>, vector<1x1x128xf32>
    %6 = vector.shape_cast %5 : vector<1x1x128xf32> to vector<1x128xf32>
    %7 = vector.shape_cast %6 : vector<1x128xf32> to vector<1x128xf32>
    %8 = vector.broadcast %7 : vector<1x128xf32> to vector<2x128xf32>
    %c1 = arith.constant 1 : index
    %c0_7 = arith.constant 0 : index
    %c0_8 = arith.constant 0 : index
    %9 = vector.load %arg5[%c1, %c0_7, %c0_8] : memref<2x1x128xf32, #tpu.memory_space<vmem>>, vector<1x1x128xf32>
    %10 = vector.shape_cast %9 : vector<1x1x128xf32> to vector<1x128xf32>
    %11 = vector.shape_cast %10 : vector<1x128xf32> to vector<1x128xf32>
    %12 = vector.broadcast %11 : vector<1x128xf32> to vector<2x128xf32>
    %c0_9 = arith.constant 0 : index
    %c0_10 = arith.constant 0 : index
    %c0_11 = arith.constant 0 : index
    %13 = vector.load %arg10[%c0_9, %c0_10, %c0_11] : memref<2x2x32xf32, #tpu.memory_space<vmem>>, vector<1x2x32xf32>
    %14 = vector.shape_cast %13 : vector<1x2x32xf32> to vector<2x32xf32>
    %c0_12 = arith.constant 0 : index
    %c0_13 = arith.constant 0 : index
    %c0_14 = arith.constant 0 : index
    %15 = vector.load %arg11[%c0_12, %c0_13, %c0_14] : memref<2x2x32xf32, #tpu.memory_space<vmem>>, vector<1x2x32xf32>
    %16 = vector.shape_cast %15 : vector<1x2x32xf32> to vector<2x32xf32>
    %c1_15 = arith.constant 1 : index
    %c0_16 = arith.constant 0 : index
    %c0_17 = arith.constant 0 : index
    %17 = vector.load %arg10[%c1_15, %c0_16, %c0_17] : memref<2x2x32xf32, #tpu.memory_space<vmem>>, vector<1x2x32xf32>
    %18 = vector.shape_cast %17 : vector<1x2x32xf32> to vector<2x32xf32>
    %c1_18 = arith.constant 1 : index
    %c0_19 = arith.constant 0 : index
    %c0_20 = arith.constant 0 : index
    %19 = vector.load %arg11[%c1_18, %c0_19, %c0_20] : memref<2x2x32xf32, #tpu.memory_space<vmem>>, vector<1x2x32xf32>
    %20 = vector.shape_cast %19 : vector<1x2x32xf32> to vector<2x32xf32>
    %c0_21 = arith.constant 0 : index
    %c0_22 = arith.constant 0 : index
    %c0_23 = arith.constant 0 : index
    %21 = vector.load %arg1[%c0_21, %c0_22, %c0_23] : memref<8x2x128xbf16, #tpu.memory_space<vmem>>, vector<1x2x128xbf16>
    %22 = vector.shape_cast %21 : vector<1x2x128xbf16> to vector<2x128xbf16>
    %23 = arith.extf %22 : vector<2x128xbf16> to vector<2x128xf32>
    %24 = arith.addf %23, %8 : vector<2x128xf32>
    %25 = arith.truncf %14 : vector<2x32xf32> to vector<2x32xbf16>
    %cst = arith.constant dense<0.000000e+00> : vector<2x128xf32>
    %26 = tpu.matmul %25, %3, %cst {dimension_numbers = #tpu.dot_dimension_numbers<[1], [0], [0], [1], [0, 0, 1, 1], [], []>} : vector<2x32xbf16>, vector<32x128xbf16>, vector<2x128xf32> -> vector<2x128xf32>
    %27 = arith.addf %24, %26 : vector<2x128xf32>
    %c0_24 = arith.constant 0 : index
    %c0_25 = arith.constant 0 : index
    %c0_26 = arith.constant 0 : index
    %28 = vector.load %arg2[%c0_24, %c0_25, %c0_26] : memref<8x2x128xbf16, #tpu.memory_space<vmem>>, vector<1x2x128xbf16>
    %29 = vector.shape_cast %28 : vector<1x2x128xbf16> to vector<2x128xbf16>
    %30 = arith.extf %29 : vector<2x128xbf16> to vector<2x128xf32>
    %31 = arith.addf %30, %12 : vector<2x128xf32>
    %32 = arith.truncf %18 : vector<2x32xf32> to vector<2x32xbf16>
    %cst_27 = arith.constant dense<0.000000e+00> : vector<2x128xf32>
    %33 = tpu.matmul %32, %4, %cst_27 {dimension_numbers = #tpu.dot_dimension_numbers<[1], [0], [0], [1], [0, 0, 1, 1], [], []>} : vector<2x32xbf16>, vector<32x128xbf16>, vector<2x128xf32> -> vector<2x128xf32>
    %34 = arith.addf %31, %33 : vector<2x128xf32>
    %35 = vector.extract_strided_slice %27 {offsets = [0, 0], sizes = [2, 32], strides = [1, 1]} : vector<2x128xf32> to vector<2x32xf32>
    %36 = arith.negf %35 : vector<2x32xf32>
    %37 = math.exp %36 : vector<2x32xf32>
    %cst_28 = arith.constant 1.000000e+00 : f32
    %38 = vector.broadcast %cst_28 : f32 to vector<2x32xf32>
    %39 = arith.addf %38, %37 : vector<2x32xf32>
    %40 = arith.divf %38, %39 : vector<2x32xf32>
    %41 = vector.extract_strided_slice %27 {offsets = [0, 32], sizes = [2, 32], strides = [1, 1]} : vector<2x128xf32> to vector<2x32xf32>
    %42 = arith.negf %41 : vector<2x32xf32>
    %43 = math.exp %42 : vector<2x32xf32>
    %cst_29 = arith.constant 1.000000e+00 : f32
    %44 = vector.broadcast %cst_29 : f32 to vector<2x32xf32>
    %45 = arith.addf %44, %43 : vector<2x32xf32>
    %46 = arith.divf %44, %45 : vector<2x32xf32>
    %47 = vector.extract_strided_slice %27 {offsets = [0, 64], sizes = [2, 32], strides = [1, 1]} : vector<2x128xf32> to vector<2x32xf32>
    %48 = math.tanh %47 : vector<2x32xf32>
    %49 = vector.extract_strided_slice %27 {offsets = [0, 96], sizes = [2, 32], strides = [1, 1]} : vector<2x128xf32> to vector<2x32xf32>
    %50 = arith.negf %49 : vector<2x32xf32>
    %51 = math.exp %50 : vector<2x32xf32>
    %cst_30 = arith.constant 1.000000e+00 : f32
    %52 = vector.broadcast %cst_30 : f32 to vector<2x32xf32>
    %53 = arith.addf %52, %51 : vector<2x32xf32>
    %54 = arith.divf %52, %53 : vector<2x32xf32>
    %55 = arith.mulf %46, %16 : vector<2x32xf32>
    %56 = arith.mulf %40, %48 : vector<2x32xf32>
    %57 = arith.addf %55, %56 : vector<2x32xf32>
    %58 = math.tanh %57 : vector<2x32xf32>
    %59 = arith.mulf %54, %58 : vector<2x32xf32>
    %60 = vector.extract_strided_slice %34 {offsets = [0, 0], sizes = [2, 32], strides = [1, 1]} : vector<2x128xf32> to vector<2x32xf32>
    %61 = arith.negf %60 : vector<2x32xf32>
    %62 = math.exp %61 : vector<2x32xf32>
    %cst_31 = arith.constant 1.000000e+00 : f32
    %63 = vector.broadcast %cst_31 : f32 to vector<2x32xf32>
    %64 = arith.addf %63, %62 : vector<2x32xf32>
    %65 = arith.divf %63, %64 : vector<2x32xf32>
    %66 = vector.extract_strided_slice %34 {offsets = [0, 32], sizes = [2, 32], strides = [1, 1]} : vector<2x128xf32> to vector<2x32xf32>
    %67 = arith.negf %66 : vector<2x32xf32>
    %68 = math.exp %67 : vector<2x32xf32>
    %cst_32 = arith.constant 1.000000e+00 : f32
    %69 = vector.broadcast %cst_32 : f32 to vector<2x32xf32>
    %70 = arith.addf %69, %68 : vector<2x32xf32>
    %71 = arith.divf %69, %70 : vector<2x32xf32>
    %72 = vector.extract_strided_slice %34 {offsets = [0, 64], sizes = [2, 32], strides = [1, 1]} : vector<2x128xf32> to vector<2x32xf32>
    %73 = math.tanh %72 : vector<2x32xf32>
    %74 = vector.extract_strided_slice %34 {offsets = [0, 96], sizes = [2, 32], strides = [1, 1]} : vector<2x128xf32> to vector<2x32xf32>
    %75 = arith.negf %74 : vector<2x32xf32>
    %76 = math.exp %75 : vector<2x32xf32>
    %cst_33 = arith.constant 1.000000e+00 : f32
    %77 = vector.broadcast %cst_33 : f32 to vector<2x32xf32>
    %78 = arith.addf %77, %76 : vector<2x32xf32>
    %79 = arith.divf %77, %78 : vector<2x32xf32>
    %80 = arith.mulf %71, %20 : vector<2x32xf32>
    %81 = arith.mulf %65, %73 : vector<2x32xf32>
    %82 = arith.addf %80, %81 : vector<2x32xf32>
    %83 = math.tanh %82 : vector<2x32xf32>
    %84 = arith.mulf %79, %83 : vector<2x32xf32>
    %85 = arith.truncf %59 : vector<2x32xf32> to vector<2x32xbf16>
    %c0_34 = arith.constant 0 : index
    %c0_35 = arith.constant 0 : index
    %c0_36 = arith.constant 0 : index
    %86 = vector.load %arg8[%c0_34, %c0_35, %c0_36] : memref<8x2x32xbf16, #tpu.memory_space<vmem>>, vector<1x2x32xbf16>
    %87 = vector.shape_cast %86 : vector<1x2x32xbf16> to vector<2x32xbf16>
    %88 = vector.shape_cast %85 : vector<2x32xbf16> to vector<1x2x32xbf16>
    tpu.vector_store %arg8[%c0_34, %c0_35, %c0_36], %88 {strides = array<i32>} : memref<8x2x32xbf16, #tpu.memory_space<vmem>>, vector<1x2x32xbf16>,
    %89 = arith.truncf %84 : vector<2x32xf32> to vector<2x32xbf16>
    %c0_37 = arith.constant 0 : index
    %c0_38 = arith.constant 0 : index
    %c0_39 = arith.constant 0 : index
    %90 = vector.load %arg9[%c0_37, %c0_38, %c0_39] : memref<8x2x32xbf16, #tpu.memory_space<vmem>>, vector<1x2x32xbf16>
    %91 = vector.shape_cast %90 : vector<1x2x32xbf16> to vector<2x32xbf16>
    %92 = vector.shape_cast %89 : vector<2x32xbf16> to vector<1x2x32xbf16>
    tpu.vector_store %arg9[%c0_37, %c0_38, %c0_39], %92 {strides = array<i32>} : memref<8x2x32xbf16, #tpu.memory_space<vmem>>, vector<1x2x32xbf16>,
    %c1_40 = arith.constant 1 : index
    %c0_41 = arith.constant 0 : index
    %c0_42 = arith.constant 0 : index
    %93 = vector.load %arg1[%c1_40, %c0_41, %c0_42] : memref<8x2x128xbf16, #tpu.memory_space<vmem>>, vector<1x2x128xbf16>
    %94 = vector.shape_cast %93 : vector<1x2x128xbf16> to vector<2x128xbf16>
    %95 = arith.extf %94 : vector<2x128xbf16> to vector<2x128xf32>
    %96 = arith.addf %95, %8 : vector<2x128xf32>
    %97 = arith.truncf %59 : vector<2x32xf32> to vector<2x32xbf16>
    %cst_43 = arith.constant dense<0.000000e+00> : vector<2x128xf32>
    %98 = tpu.matmul %97, %3, %cst_43 {dimension_numbers = #tpu.dot_dimension_numbers<[1], [0], [0], [1], [0, 0, 1, 1], [], []>} : vector<2x32xbf16>, vector<32x128xbf16>, vector<2x128xf32> -> vector<2x128xf32>
    %99 = arith.addf %96, %98 : vector<2x128xf32>
    %c1_44 = arith.constant 1 : index
    %c0_45 = arith.constant 0 : index
    %c0_46 = arith.constant 0 : index
    %100 = vector.load %arg2[%c1_44, %c0_45, %c0_46] : memref<8x2x128xbf16, #tpu.memory_space<vmem>>, vector<1x2x128xbf16>
    %101 = vector.shape_cast %100 : vector<1x2x128xbf16> to vector<2x128xbf16>
    %102 = arith.extf %101 : vector<2x128xbf16> to vector<2x128xf32>
    %103 = arith.addf %102, %12 : vector<2x128xf32>
    %104 = arith.truncf %84 : vector<2x32xf32> to vector<2x32xbf16>
    %cst_47 = arith.constant dense<0.000000e+00> : vector<2x128xf32>
    %105 = tpu.matmul %104, %4, %cst_47 {dimension_numbers = #tpu.dot_dimension_numbers<[1], [0], [0], [1], [0, 0, 1, 1], [], []>} : vector<2x32xbf16>, vector<32x128xbf16>, vector<2x128xf32> -> vector<2x128xf32>
    %106 = arith.addf %103, %105 : vector<2x128xf32>
    %107 = vector.extract_strided_slice %99 {offsets = [0, 0], sizes = [2, 32], strides = [1, 1]} : vector<2x128xf32> to vector<2x32xf32>
    %108 = arith.negf %107 : vector<2x32xf32>
    %109 = math.exp %108 : vector<2x32xf32>
    %cst_48 = arith.constant 1.000000e+00 : f32
    %110 = vector.broadcast %cst_48 : f32 to vector<2x32xf32>
    %111 = arith.addf %110, %109 : vector<2x32xf32>
    %112 = arith.divf %110, %111 : vector<2x32xf32>
    %113 = vector.extract_strided_slice %99 {offsets = [0, 32], sizes = [2, 32], strides = [1, 1]} : vector<2x128xf32> to vector<2x32xf32>
    %114 = arith.negf %113 : vector<2x32xf32>
    %115 = math.exp %114 : vector<2x32xf32>
    %cst_49 = arith.constant 1.000000e+00 : f32
    %116 = vector.broadcast %cst_49 : f32 to vector<2x32xf32>
    %117 = arith.addf %116, %115 : vector<2x32xf32>
    %118 = arith.divf %116, %117 : vector<2x32xf32>
    %119 = vector.extract_strided_slice %99 {offsets = [0, 64], sizes = [2, 32], strides = [1, 1]} : vector<2x128xf32> to vector<2x32xf32>
    %120 = math.tanh %119 : vector<2x32xf32>
    %121 = vector.extract_strided_slice %99 {offsets = [0, 96], sizes = [2, 32], strides = [1, 1]} : vector<2x128xf32> to vector<2x32xf32>
    %122 = arith.negf %121 : vector<2x32xf32>
    %123 = math.exp %122 : vector<2x32xf32>
    %cst_50 = arith.constant 1.000000e+00 : f32
    %124 = vector.broadcast %cst_50 : f32 to vector<2x32xf32>
    %125 = arith.addf %124, %123 : vector<2x32xf32>
    %126 = arith.divf %124, %125 : vector<2x32xf32>
    %127 = arith.mulf %118, %57 : vector<2x32xf32>
    %128 = arith.mulf %112, %120 : vector<2x32xf32>
    %129 = arith.addf %127, %128 : vector<2x32xf32>
    %130 = math.tanh %129 : vector<2x32xf32>
    %131 = arith.mulf %126, %130 : vector<2x32xf32>
    %132 = vector.extract_strided_slice %106 {offsets = [0, 0], sizes = [2, 32], strides = [1, 1]} : vector<2x128xf32> to vector<2x32xf32>
    %133 = arith.negf %132 : vector<2x32xf32>
    %134 = math.exp %133 : vector<2x32xf32>
    %cst_51 = arith.constant 1.000000e+00 : f32
    %135 = vector.broadcast %cst_51 : f32 to vector<2x32xf32>
    %136 = arith.addf %135, %134 : vector<2x32xf32>
    %137 = arith.divf %135, %136 : vector<2x32xf32>
    %138 = vector.extract_strided_slice %106 {offsets = [0, 32], sizes = [2, 32], strides = [1, 1]} : vector<2x128xf32> to vector<2x32xf32>
    %139 = arith.negf %138 : vector<2x32xf32>
    %140 = math.exp %139 : vector<2x32xf32>
    %cst_52 = arith.constant 1.000000e+00 : f32
    %141 = vector.broadcast %cst_52 : f32 to vector<2x32xf32>
    %142 = arith.addf %141, %140 : vector<2x32xf32>
    %143 = arith.divf %141, %142 : vector<2x32xf32>
    %144 = vector.extract_strided_slice %106 {offsets = [0, 64], sizes = [2, 32], strides = [1, 1]} : vector<2x128xf32> to vector<2x32xf32>
    %145 = math.tanh %144 : vector<2x32xf32>
    %146 = vector.extract_strided_slice %106 {offsets = [0, 96], sizes = [2, 32], strides = [1, 1]} : vector<2x128xf32> to vector<2x32xf32>
    %147 = arith.negf %146 : vector<2x32xf32>
    %148 = math.exp %147 : vector<2x32xf32>
    %cst_53 = arith.constant 1.000000e+00 : f32
    %149 = vector.broadcast %cst_53 : f32 to vector<2x32xf32>
    %150 = arith.addf %149, %148 : vector<2x32xf32>
    %151 = arith.divf %149, %150 : vector<2x32xf32>
    %152 = arith.mulf %143, %82 : vector<2x32xf32>
    %153 = arith.mulf %137, %145 : vector<2x32xf32>
    %154 = arith.addf %152, %153 : vector<2x32xf32>
    %155 = math.tanh %154 : vector<2x32xf32>
    %156 = arith.mulf %151, %155 : vector<2x32xf32>
    %157 = arith.truncf %131 : vector<2x32xf32> to vector<2x32xbf16>
    %c1_54 = arith.constant 1 : index
    %c0_55 = arith.constant 0 : index
    %c0_56 = arith.constant 0 : index
    %158 = vector.load %arg8[%c1_54, %c0_55, %c0_56] : memref<8x2x32xbf16, #tpu.memory_space<vmem>>, vector<1x2x32xbf16>
    %159 = vector.shape_cast %158 : vector<1x2x32xbf16> to vector<2x32xbf16>
    %160 = vector.shape_cast %157 : vector<2x32xbf16> to vector<1x2x32xbf16>
    tpu.vector_store %arg8[%c1_54, %c0_55, %c0_56], %160 {strides = array<i32>} : memref<8x2x32xbf16, #tpu.memory_space<vmem>>, vector<1x2x32xbf16>,
    %161 = arith.truncf %156 : vector<2x32xf32> to vector<2x32xbf16>
    %c1_57 = arith.constant 1 : index
    %c0_58 = arith.constant 0 : index
    %c0_59 = arith.constant 0 : index
    %162 = vector.load %arg9[%c1_57, %c0_58, %c0_59] : memref<8x2x32xbf16, #tpu.memory_space<vmem>>, vector<1x2x32xbf16>
    %163 = vector.shape_cast %162 : vector<1x2x32xbf16> to vector<2x32xbf16>
    %164 = vector.shape_cast %161 : vector<2x32xbf16> to vector<1x2x32xbf16>
    tpu.vector_store %arg9[%c1_57, %c0_58, %c0_59], %164 {strides = array<i32>} : memref<8x2x32xbf16, #tpu.memory_space<vmem>>, vector<1x2x32xbf16>,
    %c2 = arith.constant 2 : index
    %c0_60 = arith.constant 0 : index
    %c0_61 = arith.constant 0 : index
    %165 = vector.load %arg1[%c2, %c0_60, %c0_61] : memref<8x2x128xbf16, #tpu.memory_space<vmem>>, vector<1x2x128xbf16>
    %166 = vector.shape_cast %165 : vector<1x2x128xbf16> to vector<2x128xbf16>
    %167 = arith.extf %166 : vector<2x128xbf16> to vector<2x128xf32>
    %168 = arith.addf %167, %8 : vector<2x128xf32>
    %169 = arith.truncf %131 : vector<2x32xf32> to vector<2x32xbf16>
    %cst_62 = arith.constant dense<0.000000e+00> : vector<2x128xf32>
    %170 = tpu.matmul %169, %3, %cst_62 {dimension_numbers = #tpu.dot_dimension_numbers<[1], [0], [0], [1], [0, 0, 1, 1], [], []>} : vector<2x32xbf16>, vector<32x128xbf16>, vector<2x128xf32> -> vector<2x128xf32>
    %171 = arith.addf %168, %170 : vector<2x128xf32>
    %c2_63 = arith.constant 2 : index
    %c0_64 = arith.constant 0 : index
    %c0_65 = arith.constant 0 : index
    %172 = vector.load %arg2[%c2_63, %c0_64, %c0_65] : memref<8x2x128xbf16, #tpu.memory_space<vmem>>, vector<1x2x128xbf16>
    %173 = vector.shape_cast %172 : vector<1x2x128xbf16> to vector<2x128xbf16>
    %174 = arith.extf %173 : vector<2x128xbf16> to vector<2x128xf32>
    %175 = arith.addf %174, %12 : vector<2x128xf32>
    %176 = arith.truncf %156 : vector<2x32xf32> to vector<2x32xbf16>
    %cst_66 = arith.constant dense<0.000000e+00> : vector<2x128xf32>
    %177 = tpu.matmul %176, %4, %cst_66 {dimension_numbers = #tpu.dot_dimension_numbers<[1], [0], [0], [1], [0, 0, 1, 1], [], []>} : vector<2x32xbf16>, vector<32x128xbf16>, vector<2x128xf32> -> vector<2x128xf32>
    %178 = arith.addf %175, %177 : vector<2x128xf32>
    %179 = vector.extract_strided_slice %171 {offsets = [0, 0], sizes = [2, 32], strides = [1, 1]} : vector<2x128xf32> to vector<2x32xf32>
    %180 = arith.negf %179 : vector<2x32xf32>
    %181 = math.exp %180 : vector<2x32xf32>
    %cst_67 = arith.constant 1.000000e+00 : f32
    %182 = vector.broadcast %cst_67 : f32 to vector<2x32xf32>
    %183 = arith.addf %182, %181 : vector<2x32xf32>
    %184 = arith.divf %182, %183 : vector<2x32xf32>
    %185 = vector.extract_strided_slice %171 {offsets = [0, 32], sizes = [2, 32], strides = [1, 1]} : vector<2x128xf32> to vector<2x32xf32>
    %186 = arith.negf %185 : vector<2x32xf32>
    %187 = math.exp %186 : vector<2x32xf32>
    %cst_68 = arith.constant 1.000000e+00 : f32
    %188 = vector.broadcast %cst_68 : f32 to vector<2x32xf32>
    %189 = arith.addf %188, %187 : vector<2x32xf32>
    %190 = arith.divf %188, %189 : vector<2x32xf32>
    %191 = vector.extract_strided_slice %171 {offsets = [0, 64], sizes = [2, 32], strides = [1, 1]} : vector<2x128xf32> to vector<2x32xf32>
    %192 = math.tanh %191 : vector<2x32xf32>
    %193 = vector.extract_strided_slice %171 {offsets = [0, 96], sizes = [2, 32], strides = [1, 1]} : vector<2x128xf32> to vector<2x32xf32>
    %194 = arith.negf %193 : vector<2x32xf32>
    %195 = math.exp %194 : vector<2x32xf32>
    %cst_69 = arith.constant 1.000000e+00 : f32
    %196 = vector.broadcast %cst_69 : f32 to vector<2x32xf32>
    %197 = arith.addf %196, %195 : vector<2x32xf32>
    %198 = arith.divf %196, %197 : vector<2x32xf32>
    %199 = arith.mulf %190, %129 : vector<2x32xf32>
    %200 = arith.mulf %184, %192 : vector<2x32xf32>
    %201 = arith.addf %199, %200 : vector<2x32xf32>
    %202 = math.tanh %201 : vector<2x32xf32>
    %203 = arith.mulf %198, %202 : vector<2x32xf32>
    %204 = vector.extract_strided_slice %178 {offsets = [0, 0], sizes = [2, 32], strides = [1, 1]} : vector<2x128xf32> to vector<2x32xf32>
    %205 = arith.negf %204 : vector<2x32xf32>
    %206 = math.exp %205 : vector<2x32xf32>
    %cst_70 = arith.constant 1.000000e+00 : f32
    %207 = vector.broadcast %cst_70 : f32 to vector<2x32xf32>
    %208 = arith.addf %207, %206 : vector<2x32xf32>
    %209 = arith.divf %207, %208 : vector<2x32xf32>
    %210 = vector.extract_strided_slice %178 {offsets = [0, 32], sizes = [2, 32], strides = [1, 1]} : vector<2x128xf32> to vector<2x32xf32>
    %211 = arith.negf %210 : vector<2x32xf32>
    %212 = math.exp %211 : vector<2x32xf32>
    %cst_71 = arith.constant 1.000000e+00 : f32
    %213 = vector.broadcast %cst_71 : f32 to vector<2x32xf32>
    %214 = arith.addf %213, %212 : vector<2x32xf32>
    %215 = arith.divf %213, %214 : vector<2x32xf32>
    %216 = vector.extract_strided_slice %178 {offsets = [0, 64], sizes = [2, 32], strides = [1, 1]} : vector<2x128xf32> to vector<2x32xf32>
    %217 = math.tanh %216 : vector<2x32xf32>
    %218 = vector.extract_strided_slice %178 {offsets = [0, 96], sizes = [2, 32], strides = [1, 1]} : vector<2x128xf32> to vector<2x32xf32>
    %219 = arith.negf %218 : vector<2x32xf32>
    %220 = math.exp %219 : vector<2x32xf32>
    %cst_72 = arith.constant 1.000000e+00 : f32
    %221 = vector.broadcast %cst_72 : f32 to vector<2x32xf32>
    %222 = arith.addf %221, %220 : vector<2x32xf32>
    %223 = arith.divf %221, %222 : vector<2x32xf32>
    %224 = arith.mulf %215, %154 : vector<2x32xf32>
    %225 = arith.mulf %209, %217 : vector<2x32xf32>
    %226 = arith.addf %224, %225 : vector<2x32xf32>
    %227 = math.tanh %226 : vector<2x32xf32>
    %228 = arith.mulf %223, %227 : vector<2x32xf32>
    %229 = arith.truncf %203 : vector<2x32xf32> to vector<2x32xbf16>
    %c2_73 = arith.constant 2 : index
    %c0_74 = arith.constant 0 : index
    %c0_75 = arith.constant 0 : index
    %230 = vector.load %arg8[%c2_73, %c0_74, %c0_75] : memref<8x2x32xbf16, #tpu.memory_space<vmem>>, vector<1x2x32xbf16>
    %231 = vector.shape_cast %230 : vector<1x2x32xbf16> to vector<2x32xbf16>
    %232 = vector.shape_cast %229 : vector<2x32xbf16> to vector<1x2x32xbf16>
    tpu.vector_store %arg8[%c2_73, %c0_74, %c0_75], %232 {strides = array<i32>} : memref<8x2x32xbf16, #tpu.memory_space<vmem>>, vector<1x2x32xbf16>,
    %233 = arith.truncf %228 : vector<2x32xf32> to vector<2x32xbf16>
    %c2_76 = arith.constant 2 : index
    %c0_77 = arith.constant 0 : index
    %c0_78 = arith.constant 0 : index
    %234 = vector.load %arg9[%c2_76, %c0_77, %c0_78] : memref<8x2x32xbf16, #tpu.memory_space<vmem>>, vector<1x2x32xbf16>
    %235 = vector.shape_cast %234 : vector<1x2x32xbf16> to vector<2x32xbf16>
    %236 = vector.shape_cast %233 : vector<2x32xbf16> to vector<1x2x32xbf16>
    tpu.vector_store %arg9[%c2_76, %c0_77, %c0_78], %236 {strides = array<i32>} : memref<8x2x32xbf16, #tpu.memory_space<vmem>>, vector<1x2x32xbf16>,
    %c3 = arith.constant 3 : index
    %c0_79 = arith.constant 0 : index
    %c0_80 = arith.constant 0 : index
    %237 = vector.load %arg1[%c3, %c0_79, %c0_80] : memref<8x2x128xbf16, #tpu.memory_space<vmem>>, vector<1x2x128xbf16>
    %238 = vector.shape_cast %237 : vector<1x2x128xbf16> to vector<2x128xbf16>
    %239 = arith.extf %238 : vector<2x128xbf16> to vector<2x128xf32>
    %240 = arith.addf %239, %8 : vector<2x128xf32>
    %241 = arith.truncf %203 : vector<2x32xf32> to vector<2x32xbf16>
    %cst_81 = arith.constant dense<0.000000e+00> : vector<2x128xf32>
    %242 = tpu.matmul %241, %3, %cst_81 {dimension_numbers = #tpu.dot_dimension_numbers<[1], [0], [0], [1], [0, 0, 1, 1], [], []>} : vector<2x32xbf16>, vector<32x128xbf16>, vector<2x128xf32> -> vector<2x128xf32>
    %243 = arith.addf %240, %242 : vector<2x128xf32>
    %c3_82 = arith.constant 3 : index
    %c0_83 = arith.constant 0 : index
    %c0_84 = arith.constant 0 : index
    %244 = vector.load %arg2[%c3_82, %c0_83, %c0_84] : memref<8x2x128xbf16, #tpu.memory_space<vmem>>, vector<1x2x128xbf16>
    %245 = vector.shape_cast %244 : vector<1x2x128xbf16> to vector<2x128xbf16>
    %246 = arith.extf %245 : vector<2x128xbf16> to vector<2x128xf32>
    %247 = arith.addf %246, %12 : vector<2x128xf32>
    %248 = arith.truncf %228 : vector<2x32xf32> to vector<2x32xbf16>
    %cst_85 = arith.constant dense<0.000000e+00> : vector<2x128xf32>
    %249 = tpu.matmul %248, %4, %cst_85 {dimension_numbers = #tpu.dot_dimension_numbers<[1], [0], [0], [1], [0, 0, 1, 1], [], []>} : vector<2x32xbf16>, vector<32x128xbf16>, vector<2x128xf32> -> vector<2x128xf32>
    %250 = arith.addf %247, %249 : vector<2x128xf32>
    %251 = vector.extract_strided_slice %243 {offsets = [0, 0], sizes = [2, 32], strides = [1, 1]} : vector<2x128xf32> to vector<2x32xf32>
    %252 = arith.negf %251 : vector<2x32xf32>
    %253 = math.exp %252 : vector<2x32xf32>
    %cst_86 = arith.constant 1.000000e+00 : f32
    %254 = vector.broadcast %cst_86 : f32 to vector<2x32xf32>
    %255 = arith.addf %254, %253 : vector<2x32xf32>
    %256 = arith.divf %254, %255 : vector<2x32xf32>
    %257 = vector.extract_strided_slice %243 {offsets = [0, 32], sizes = [2, 32], strides = [1, 1]} : vector<2x128xf32> to vector<2x32xf32>
    %258 = arith.negf %257 : vector<2x32xf32>
    %259 = math.exp %258 : vector<2x32xf32>
    %cst_87 = arith.constant 1.000000e+00 : f32
    %260 = vector.broadcast %cst_87 : f32 to vector<2x32xf32>
    %261 = arith.addf %260, %259 : vector<2x32xf32>
    %262 = arith.divf %260, %261 : vector<2x32xf32>
    %263 = vector.extract_strided_slice %243 {offsets = [0, 64], sizes = [2, 32], strides = [1, 1]} : vector<2x128xf32> to vector<2x32xf32>
    %264 = math.tanh %263 : vector<2x32xf32>
    %265 = vector.extract_strided_slice %243 {offsets = [0, 96], sizes = [2, 32], strides = [1, 1]} : vector<2x128xf32> to vector<2x32xf32>
    %266 = arith.negf %265 : vector<2x32xf32>
    %267 = math.exp %266 : vector<2x32xf32>
    %cst_88 = arith.constant 1.000000e+00 : f32
    %268 = vector.broadcast %cst_88 : f32 to vector<2x32xf32>
    %269 = arith.addf %268, %267 : vector<2x32xf32>
    %270 = arith.divf %268, %269 : vector<2x32xf32>
    %271 = arith.mulf %262, %201 : vector<2x32xf32>
    %272 = arith.mulf %256, %264 : vector<2x32xf32>
    %273 = arith.addf %271, %272 : vector<2x32xf32>
    %274 = math.tanh %273 : vector<2x32xf32>
    %275 = arith.mulf %270, %274 : vector<2x32xf32>
    %276 = vector.extract_strided_slice %250 {offsets = [0, 0], sizes = [2, 32], strides = [1, 1]} : vector<2x128xf32> to vector<2x32xf32>
    %277 = arith.negf %276 : vector<2x32xf32>
    %278 = math.exp %277 : vector<2x32xf32>
    %cst_89 = arith.constant 1.000000e+00 : f32
    %279 = vector.broadcast %cst_89 : f32 to vector<2x32xf32>
    %280 = arith.addf %279, %278 : vector<2x32xf32>
    %281 = arith.divf %279, %280 : vector<2x32xf32>
    %282 = vector.extract_strided_slice %250 {offsets = [0, 32], sizes = [2, 32], strides = [1, 1]} : vector<2x128xf32> to vector<2x32xf32>
    %283 = arith.negf %282 : vector<2x32xf32>
    %284 = math.exp %283 : vector<2x32xf32>
    %cst_90 = arith.constant 1.000000e+00 : f32
    %285 = vector.broadcast %cst_90 : f32 to vector<2x32xf32>
    %286 = arith.addf %285, %284 : vector<2x32xf32>
    %287 = arith.divf %285, %286 : vector<2x32xf32>
    %288 = vector.extract_strided_slice %250 {offsets = [0, 64], sizes = [2, 32], strides = [1, 1]} : vector<2x128xf32> to vector<2x32xf32>
    %289 = math.tanh %288 : vector<2x32xf32>
    %290 = vector.extract_strided_slice %250 {offsets = [0, 96], sizes = [2, 32], strides = [1, 1]} : vector<2x128xf32> to vector<2x32xf32>
    %291 = arith.negf %290 : vector<2x32xf32>
    %292 = math.exp %291 : vector<2x32xf32>
    %cst_91 = arith.constant 1.000000e+00 : f32
    %293 = vector.broadcast %cst_91 : f32 to vector<2x32xf32>
    %294 = arith.addf %293, %292 : vector<2x32xf32>
    %295 = arith.divf %293, %294 : vector<2x32xf32>
    %296 = arith.mulf %287, %226 : vector<2x32xf32>
    %297 = arith.mulf %281, %289 : vector<2x32xf32>
    %298 = arith.addf %296, %297 : vector<2x32xf32>
    %299 = math.tanh %298 : vector<2x32xf32>
    %300 = arith.mulf %295, %299 : vector<2x32xf32>
    %301 = arith.truncf %275 : vector<2x32xf32> to vector<2x32xbf16>
    %c3_92 = arith.constant 3 : index
    %c0_93 = arith.constant 0 : index
    %c0_94 = arith.constant 0 : index
    %302 = vector.load %arg8[%c3_92, %c0_93, %c0_94] : memref<8x2x32xbf16, #tpu.memory_space<vmem>>, vector<1x2x32xbf16>
    %303 = vector.shape_cast %302 : vector<1x2x32xbf16> to vector<2x32xbf16>
    %304 = vector.shape_cast %301 : vector<2x32xbf16> to vector<1x2x32xbf16>
    tpu.vector_store %arg8[%c3_92, %c0_93, %c0_94], %304 {strides = array<i32>} : memref<8x2x32xbf16, #tpu.memory_space<vmem>>, vector<1x2x32xbf16>,
    %305 = arith.truncf %300 : vector<2x32xf32> to vector<2x32xbf16>
    %c3_95 = arith.constant 3 : index
    %c0_96 = arith.constant 0 : index
    %c0_97 = arith.constant 0 : index
    %306 = vector.load %arg9[%c3_95, %c0_96, %c0_97] : memref<8x2x32xbf16, #tpu.memory_space<vmem>>, vector<1x2x32xbf16>
    %307 = vector.shape_cast %306 : vector<1x2x32xbf16> to vector<2x32xbf16>
    %308 = vector.shape_cast %305 : vector<2x32xbf16> to vector<1x2x32xbf16>
    tpu.vector_store %arg9[%c3_95, %c0_96, %c0_97], %308 {strides = array<i32>} : memref<8x2x32xbf16, #tpu.memory_space<vmem>>, vector<1x2x32xbf16>,
    %c4 = arith.constant 4 : index
    %c0_98 = arith.constant 0 : index
    %c0_99 = arith.constant 0 : index
    %309 = vector.load %arg1[%c4, %c0_98, %c0_99] : memref<8x2x128xbf16, #tpu.memory_space<vmem>>, vector<1x2x128xbf16>
    %310 = vector.shape_cast %309 : vector<1x2x128xbf16> to vector<2x128xbf16>
    %311 = arith.extf %310 : vector<2x128xbf16> to vector<2x128xf32>
    %312 = arith.addf %311, %8 : vector<2x128xf32>
    %313 = arith.truncf %275 : vector<2x32xf32> to vector<2x32xbf16>
    %cst_100 = arith.constant dense<0.000000e+00> : vector<2x128xf32>
    %314 = tpu.matmul %313, %3, %cst_100 {dimension_numbers = #tpu.dot_dimension_numbers<[1], [0], [0], [1], [0, 0, 1, 1], [], []>} : vector<2x32xbf16>, vector<32x128xbf16>, vector<2x128xf32> -> vector<2x128xf32>
    %315 = arith.addf %312, %314 : vector<2x128xf32>
    %c4_101 = arith.constant 4 : index
    %c0_102 = arith.constant 0 : index
    %c0_103 = arith.constant 0 : index
    %316 = vector.load %arg2[%c4_101, %c0_102, %c0_103] : memref<8x2x128xbf16, #tpu.memory_space<vmem>>, vector<1x2x128xbf16>
    %317 = vector.shape_cast %316 : vector<1x2x128xbf16> to vector<2x128xbf16>
    %318 = arith.extf %317 : vector<2x128xbf16> to vector<2x128xf32>
    %319 = arith.addf %318, %12 : vector<2x128xf32>
    %320 = arith.truncf %300 : vector<2x32xf32> to vector<2x32xbf16>
    %cst_104 = arith.constant dense<0.000000e+00> : vector<2x128xf32>
    %321 = tpu.matmul %320, %4, %cst_104 {dimension_numbers = #tpu.dot_dimension_numbers<[1], [0], [0], [1], [0, 0, 1, 1], [], []>} : vector<2x32xbf16>, vector<32x128xbf16>, vector<2x128xf32> -> vector<2x128xf32>
    %322 = arith.addf %319, %321 : vector<2x128xf32>
    %323 = vector.extract_strided_slice %315 {offsets = [0, 0], sizes = [2, 32], strides = [1, 1]} : vector<2x128xf32> to vector<2x32xf32>
    %324 = arith.negf %323 : vector<2x32xf32>
    %325 = math.exp %324 : vector<2x32xf32>
    %cst_105 = arith.constant 1.000000e+00 : f32
    %326 = vector.broadcast %cst_105 : f32 to vector<2x32xf32>
    %327 = arith.addf %326, %325 : vector<2x32xf32>
    %328 = arith.divf %326, %327 : vector<2x32xf32>
    %329 = vector.extract_strided_slice %315 {offsets = [0, 32], sizes = [2, 32], strides = [1, 1]} : vector<2x128xf32> to vector<2x32xf32>
    %330 = arith.negf %329 : vector<2x32xf32>
    %331 = math.exp %330 : vector<2x32xf32>
    %cst_106 = arith.constant 1.000000e+00 : f32
    %332 = vector.broadcast %cst_106 : f32 to vector<2x32xf32>
    %333 = arith.addf %332, %331 : vector<2x32xf32>
    %334 = arith.divf %332, %333 : vector<2x32xf32>
    %335 = vector.extract_strided_slice %315 {offsets = [0, 64], sizes = [2, 32], strides = [1, 1]} : vector<2x128xf32> to vector<2x32xf32>
    %336 = math.tanh %335 : vector<2x32xf32>
    %337 = vector.extract_strided_slice %315 {offsets = [0, 96], sizes = [2, 32], strides = [1, 1]} : vector<2x128xf32> to vector<2x32xf32>
    %338 = arith.negf %337 : vector<2x32xf32>
    %339 = math.exp %338 : vector<2x32xf32>
    %cst_107 = arith.constant 1.000000e+00 : f32
    %340 = vector.broadcast %cst_107 : f32 to vector<2x32xf32>
    %341 = arith.addf %340, %339 : vector<2x32xf32>
    %342 = arith.divf %340, %341 : vector<2x32xf32>
    %343 = arith.mulf %334, %273 : vector<2x32xf32>
    %344 = arith.mulf %328, %336 : vector<2x32xf32>
    %345 = arith.addf %343, %344 : vector<2x32xf32>
    %346 = math.tanh %345 : vector<2x32xf32>
    %347 = arith.mulf %342, %346 : vector<2x32xf32>
    %348 = vector.extract_strided_slice %322 {offsets = [0, 0], sizes = [2, 32], strides = [1, 1]} : vector<2x128xf32> to vector<2x32xf32>
    %349 = arith.negf %348 : vector<2x32xf32>
    %350 = math.exp %349 : vector<2x32xf32>
    %cst_108 = arith.constant 1.000000e+00 : f32
    %351 = vector.broadcast %cst_108 : f32 to vector<2x32xf32>
    %352 = arith.addf %351, %350 : vector<2x32xf32>
    %353 = arith.divf %351, %352 : vector<2x32xf32>
    %354 = vector.extract_strided_slice %322 {offsets = [0, 32], sizes = [2, 32], strides = [1, 1]} : vector<2x128xf32> to vector<2x32xf32>
    %355 = arith.negf %354 : vector<2x32xf32>
    %356 = math.exp %355 : vector<2x32xf32>
    %cst_109 = arith.constant 1.000000e+00 : f32
    %357 = vector.broadcast %cst_109 : f32 to vector<2x32xf32>
    %358 = arith.addf %357, %356 : vector<2x32xf32>
    %359 = arith.divf %357, %358 : vector<2x32xf32>
    %360 = vector.extract_strided_slice %322 {offsets = [0, 64], sizes = [2, 32], strides = [1, 1]} : vector<2x128xf32> to vector<2x32xf32>
    %361 = math.tanh %360 : vector<2x32xf32>
    %362 = vector.extract_strided_slice %322 {offsets = [0, 96], sizes = [2, 32], strides = [1, 1]} : vector<2x128xf32> to vector<2x32xf32>
    %363 = arith.negf %362 : vector<2x32xf32>
    %364 = math.exp %363 : vector<2x32xf32>
    %cst_110 = arith.constant 1.000000e+00 : f32
    %365 = vector.broadcast %cst_110 : f32 to vector<2x32xf32>
    %366 = arith.addf %365, %364 : vector<2x32xf32>
    %367 = arith.divf %365, %366 : vector<2x32xf32>
    %368 = arith.mulf %359, %298 : vector<2x32xf32>
    %369 = arith.mulf %353, %361 : vector<2x32xf32>
    %370 = arith.addf %368, %369 : vector<2x32xf32>
    %371 = math.tanh %370 : vector<2x32xf32>
    %372 = arith.mulf %367, %371 : vector<2x32xf32>
    %373 = arith.truncf %347 : vector<2x32xf32> to vector<2x32xbf16>
    %c4_111 = arith.constant 4 : index
    %c0_112 = arith.constant 0 : index
    %c0_113 = arith.constant 0 : index
    %374 = vector.load %arg8[%c4_111, %c0_112, %c0_113] : memref<8x2x32xbf16, #tpu.memory_space<vmem>>, vector<1x2x32xbf16>
    %375 = vector.shape_cast %374 : vector<1x2x32xbf16> to vector<2x32xbf16>
    %376 = vector.shape_cast %373 : vector<2x32xbf16> to vector<1x2x32xbf16>
    tpu.vector_store %arg8[%c4_111, %c0_112, %c0_113], %376 {strides = array<i32>} : memref<8x2x32xbf16, #tpu.memory_space<vmem>>, vector<1x2x32xbf16>,
    %377 = arith.truncf %372 : vector<2x32xf32> to vector<2x32xbf16>
    %c4_114 = arith.constant 4 : index
    %c0_115 = arith.constant 0 : index
    %c0_116 = arith.constant 0 : index
    %378 = vector.load %arg9[%c4_114, %c0_115, %c0_116] : memref<8x2x32xbf16, #tpu.memory_space<vmem>>, vector<1x2x32xbf16>
    %379 = vector.shape_cast %378 : vector<1x2x32xbf16> to vector<2x32xbf16>
    %380 = vector.shape_cast %377 : vector<2x32xbf16> to vector<1x2x32xbf16>
    tpu.vector_store %arg9[%c4_114, %c0_115, %c0_116], %380 {strides = array<i32>} : memref<8x2x32xbf16, #tpu.memory_space<vmem>>, vector<1x2x32xbf16>,
    %c5 = arith.constant 5 : index
    %c0_117 = arith.constant 0 : index
    %c0_118 = arith.constant 0 : index
    %381 = vector.load %arg1[%c5, %c0_117, %c0_118] : memref<8x2x128xbf16, #tpu.memory_space<vmem>>, vector<1x2x128xbf16>
    %382 = vector.shape_cast %381 : vector<1x2x128xbf16> to vector<2x128xbf16>
    %383 = arith.extf %382 : vector<2x128xbf16> to vector<2x128xf32>
    %384 = arith.addf %383, %8 : vector<2x128xf32>
    %385 = arith.truncf %347 : vector<2x32xf32> to vector<2x32xbf16>
    %cst_119 = arith.constant dense<0.000000e+00> : vector<2x128xf32>
    %386 = tpu.matmul %385, %3, %cst_119 {dimension_numbers = #tpu.dot_dimension_numbers<[1], [0], [0], [1], [0, 0, 1, 1], [], []>} : vector<2x32xbf16>, vector<32x128xbf16>, vector<2x128xf32> -> vector<2x128xf32>
    %387 = arith.addf %384, %386 : vector<2x128xf32>
    %c5_120 = arith.constant 5 : index
    %c0_121 = arith.constant 0 : index
    %c0_122 = arith.constant 0 : index
    %388 = vector.load %arg2[%c5_120, %c0_121, %c0_122] : memref<8x2x128xbf16, #tpu.memory_space<vmem>>, vector<1x2x128xbf16>
    %389 = vector.shape_cast %388 : vector<1x2x128xbf16> to vector<2x128xbf16>
    %390 = arith.extf %389 : vector<2x128xbf16> to vector<2x128xf32>
    %391 = arith.addf %390, %12 : vector<2x128xf32>
    %392 = arith.truncf %372 : vector<2x32xf32> to vector<2x32xbf16>
    %cst_123 = arith.constant dense<0.000000e+00> : vector<2x128xf32>
    %393 = tpu.matmul %392, %4, %cst_123 {dimension_numbers = #tpu.dot_dimension_numbers<[1], [0], [0], [1], [0, 0, 1, 1], [], []>} : vector<2x32xbf16>, vector<32x128xbf16>, vector<2x128xf32> -> vector<2x128xf32>
    %394 = arith.addf %391, %393 : vector<2x128xf32>
    %395 = vector.extract_strided_slice %387 {offsets = [0, 0], sizes = [2, 32], strides = [1, 1]} : vector<2x128xf32> to vector<2x32xf32>
    %396 = arith.negf %395 : vector<2x32xf32>
    %397 = math.exp %396 : vector<2x32xf32>
    %cst_124 = arith.constant 1.000000e+00 : f32
    %398 = vector.broadcast %cst_124 : f32 to vector<2x32xf32>
    %399 = arith.addf %398, %397 : vector<2x32xf32>
    %400 = arith.divf %398, %399 : vector<2x32xf32>
    %401 = vector.extract_strided_slice %387 {offsets = [0, 32], sizes = [2, 32], strides = [1, 1]} : vector<2x128xf32> to vector<2x32xf32>
    %402 = arith.negf %401 : vector<2x32xf32>
    %403 = math.exp %402 : vector<2x32xf32>
    %cst_125 = arith.constant 1.000000e+00 : f32
    %404 = vector.broadcast %cst_125 : f32 to vector<2x32xf32>
    %405 = arith.addf %404, %403 : vector<2x32xf32>
    %406 = arith.divf %404, %405 : vector<2x32xf32>
    %407 = vector.extract_strided_slice %387 {offsets = [0, 64], sizes = [2, 32], strides = [1, 1]} : vector<2x128xf32> to vector<2x32xf32>
    %408 = math.tanh %407 : vector<2x32xf32>
    %409 = vector.extract_strided_slice %387 {offsets = [0, 96], sizes = [2, 32], strides = [1, 1]} : vector<2x128xf32> to vector<2x32xf32>
    %410 = arith.negf %409 : vector<2x32xf32>
    %411 = math.exp %410 : vector<2x32xf32>
    %cst_126 = arith.constant 1.000000e+00 : f32
    %412 = vector.broadcast %cst_126 : f32 to vector<2x32xf32>
    %413 = arith.addf %412, %411 : vector<2x32xf32>
    %414 = arith.divf %412, %413 : vector<2x32xf32>
    %415 = arith.mulf %406, %345 : vector<2x32xf32>
    %416 = arith.mulf %400, %408 : vector<2x32xf32>
    %417 = arith.addf %415, %416 : vector<2x32xf32>
    %418 = math.tanh %417 : vector<2x32xf32>
    %419 = arith.mulf %414, %418 : vector<2x32xf32>
    %420 = vector.extract_strided_slice %394 {offsets = [0, 0], sizes = [2, 32], strides = [1, 1]} : vector<2x128xf32> to vector<2x32xf32>
    %421 = arith.negf %420 : vector<2x32xf32>
    %422 = math.exp %421 : vector<2x32xf32>
    %cst_127 = arith.constant 1.000000e+00 : f32
    %423 = vector.broadcast %cst_127 : f32 to vector<2x32xf32>
    %424 = arith.addf %423, %422 : vector<2x32xf32>
    %425 = arith.divf %423, %424 : vector<2x32xf32>
    %426 = vector.extract_strided_slice %394 {offsets = [0, 32], sizes = [2, 32], strides = [1, 1]} : vector<2x128xf32> to vector<2x32xf32>
    %427 = arith.negf %426 : vector<2x32xf32>
    %428 = math.exp %427 : vector<2x32xf32>
    %cst_128 = arith.constant 1.000000e+00 : f32
    %429 = vector.broadcast %cst_128 : f32 to vector<2x32xf32>
    %430 = arith.addf %429, %428 : vector<2x32xf32>
    %431 = arith.divf %429, %430 : vector<2x32xf32>
    %432 = vector.extract_strided_slice %394 {offsets = [0, 64], sizes = [2, 32], strides = [1, 1]} : vector<2x128xf32> to vector<2x32xf32>
    %433 = math.tanh %432 : vector<2x32xf32>
    %434 = vector.extract_strided_slice %394 {offsets = [0, 96], sizes = [2, 32], strides = [1, 1]} : vector<2x128xf32> to vector<2x32xf32>
    %435 = arith.negf %434 : vector<2x32xf32>
    %436 = math.exp %435 : vector<2x32xf32>
    %cst_129 = arith.constant 1.000000e+00 : f32
    %437 = vector.broadcast %cst_129 : f32 to vector<2x32xf32>
    %438 = arith.addf %437, %436 : vector<2x32xf32>
    %439 = arith.divf %437, %438 : vector<2x32xf32>
    %440 = arith.mulf %431, %370 : vector<2x32xf32>
    %441 = arith.mulf %425, %433 : vector<2x32xf32>
    %442 = arith.addf %440, %441 : vector<2x32xf32>
    %443 = math.tanh %442 : vector<2x32xf32>
    %444 = arith.mulf %439, %443 : vector<2x32xf32>
    %445 = arith.truncf %419 : vector<2x32xf32> to vector<2x32xbf16>
    %c5_130 = arith.constant 5 : index
    %c0_131 = arith.constant 0 : index
    %c0_132 = arith.constant 0 : index
    %446 = vector.load %arg8[%c5_130, %c0_131, %c0_132] : memref<8x2x32xbf16, #tpu.memory_space<vmem>>, vector<1x2x32xbf16>
    %447 = vector.shape_cast %446 : vector<1x2x32xbf16> to vector<2x32xbf16>
    %448 = vector.shape_cast %445 : vector<2x32xbf16> to vector<1x2x32xbf16>
    tpu.vector_store %arg8[%c5_130, %c0_131, %c0_132], %448 {strides = array<i32>} : memref<8x2x32xbf16, #tpu.memory_space<vmem>>, vector<1x2x32xbf16>,
    %449 = arith.truncf %444 : vector<2x32xf32> to vector<2x32xbf16>
    %c5_133 = arith.constant 5 : index
    %c0_134 = arith.constant 0 : index
    %c0_135 = arith.constant 0 : index
    %450 = vector.load %arg9[%c5_133, %c0_134, %c0_135] : memref<8x2x32xbf16, #tpu.memory_space<vmem>>, vector<1x2x32xbf16>
    %451 = vector.shape_cast %450 : vector<1x2x32xbf16> to vector<2x32xbf16>
    %452 = vector.shape_cast %449 : vector<2x32xbf16> to vector<1x2x32xbf16>
    tpu.vector_store %arg9[%c5_133, %c0_134, %c0_135], %452 {strides = array<i32>} : memref<8x2x32xbf16, #tpu.memory_space<vmem>>, vector<1x2x32xbf16>,
    %c6 = arith.constant 6 : index
    %c0_136 = arith.constant 0 : index
    %c0_137 = arith.constant 0 : index
    %453 = vector.load %arg1[%c6, %c0_136, %c0_137] : memref<8x2x128xbf16, #tpu.memory_space<vmem>>, vector<1x2x128xbf16>
    %454 = vector.shape_cast %453 : vector<1x2x128xbf16> to vector<2x128xbf16>
    %455 = arith.extf %454 : vector<2x128xbf16> to vector<2x128xf32>
    %456 = arith.addf %455, %8 : vector<2x128xf32>
    %457 = arith.truncf %419 : vector<2x32xf32> to vector<2x32xbf16>
    %cst_138 = arith.constant dense<0.000000e+00> : vector<2x128xf32>
    %458 = tpu.matmul %457, %3, %cst_138 {dimension_numbers = #tpu.dot_dimension_numbers<[1], [0], [0], [1], [0, 0, 1, 1], [], []>} : vector<2x32xbf16>, vector<32x128xbf16>, vector<2x128xf32> -> vector<2x128xf32>
    %459 = arith.addf %456, %458 : vector<2x128xf32>
    %c6_139 = arith.constant 6 : index
    %c0_140 = arith.constant 0 : index
    %c0_141 = arith.constant 0 : index
    %460 = vector.load %arg2[%c6_139, %c0_140, %c0_141] : memref<8x2x128xbf16, #tpu.memory_space<vmem>>, vector<1x2x128xbf16>
    %461 = vector.shape_cast %460 : vector<1x2x128xbf16> to vector<2x128xbf16>
    %462 = arith.extf %461 : vector<2x128xbf16> to vector<2x128xf32>
    %463 = arith.addf %462, %12 : vector<2x128xf32>
    %464 = arith.truncf %444 : vector<2x32xf32> to vector<2x32xbf16>
    %cst_142 = arith.constant dense<0.000000e+00> : vector<2x128xf32>
    %465 = tpu.matmul %464, %4, %cst_142 {dimension_numbers = #tpu.dot_dimension_numbers<[1], [0], [0], [1], [0, 0, 1, 1], [], []>} : vector<2x32xbf16>, vector<32x128xbf16>, vector<2x128xf32> -> vector<2x128xf32>
    %466 = arith.addf %463, %465 : vector<2x128xf32>
    %467 = vector.extract_strided_slice %459 {offsets = [0, 0], sizes = [2, 32], strides = [1, 1]} : vector<2x128xf32> to vector<2x32xf32>
    %468 = arith.negf %467 : vector<2x32xf32>
    %469 = math.exp %468 : vector<2x32xf32>
    %cst_143 = arith.constant 1.000000e+00 : f32
    %470 = vector.broadcast %cst_143 : f32 to vector<2x32xf32>
    %471 = arith.addf %470, %469 : vector<2x32xf32>
    %472 = arith.divf %470, %471 : vector<2x32xf32>
    %473 = vector.extract_strided_slice %459 {offsets = [0, 32], sizes = [2, 32], strides = [1, 1]} : vector<2x128xf32> to vector<2x32xf32>
    %474 = arith.negf %473 : vector<2x32xf32>
    %475 = math.exp %474 : vector<2x32xf32>
    %cst_144 = arith.constant 1.000000e+00 : f32
    %476 = vector.broadcast %cst_144 : f32 to vector<2x32xf32>
    %477 = arith.addf %476, %475 : vector<2x32xf32>
    %478 = arith.divf %476, %477 : vector<2x32xf32>
    %479 = vector.extract_strided_slice %459 {offsets = [0, 64], sizes = [2, 32], strides = [1, 1]} : vector<2x128xf32> to vector<2x32xf32>
    %480 = math.tanh %479 : vector<2x32xf32>
    %481 = vector.extract_strided_slice %459 {offsets = [0, 96], sizes = [2, 32], strides = [1, 1]} : vector<2x128xf32> to vector<2x32xf32>
    %482 = arith.negf %481 : vector<2x32xf32>
    %483 = math.exp %482 : vector<2x32xf32>
    %cst_145 = arith.constant 1.000000e+00 : f32
    %484 = vector.broadcast %cst_145 : f32 to vector<2x32xf32>
    %485 = arith.addf %484, %483 : vector<2x32xf32>
    %486 = arith.divf %484, %485 : vector<2x32xf32>
    %487 = arith.mulf %478, %417 : vector<2x32xf32>
    %488 = arith.mulf %472, %480 : vector<2x32xf32>
    %489 = arith.addf %487, %488 : vector<2x32xf32>
    %490 = math.tanh %489 : vector<2x32xf32>
    %491 = arith.mulf %486, %490 : vector<2x32xf32>
    %492 = vector.extract_strided_slice %466 {offsets = [0, 0], sizes = [2, 32], strides = [1, 1]} : vector<2x128xf32> to vector<2x32xf32>
    %493 = arith.negf %492 : vector<2x32xf32>
    %494 = math.exp %493 : vector<2x32xf32>
    %cst_146 = arith.constant 1.000000e+00 : f32
    %495 = vector.broadcast %cst_146 : f32 to vector<2x32xf32>
    %496 = arith.addf %495, %494 : vector<2x32xf32>
    %497 = arith.divf %495, %496 : vector<2x32xf32>
    %498 = vector.extract_strided_slice %466 {offsets = [0, 32], sizes = [2, 32], strides = [1, 1]} : vector<2x128xf32> to vector<2x32xf32>
    %499 = arith.negf %498 : vector<2x32xf32>
    %500 = math.exp %499 : vector<2x32xf32>
    %cst_147 = arith.constant 1.000000e+00 : f32
    %501 = vector.broadcast %cst_147 : f32 to vector<2x32xf32>
    %502 = arith.addf %501, %500 : vector<2x32xf32>
    %503 = arith.divf %501, %502 : vector<2x32xf32>
    %504 = vector.extract_strided_slice %466 {offsets = [0, 64], sizes = [2, 32], strides = [1, 1]} : vector<2x128xf32> to vector<2x32xf32>
    %505 = math.tanh %504 : vector<2x32xf32>
    %506 = vector.extract_strided_slice %466 {offsets = [0, 96], sizes = [2, 32], strides = [1, 1]} : vector<2x128xf32> to vector<2x32xf32>
    %507 = arith.negf %506 : vector<2x32xf32>
    %508 = math.exp %507 : vector<2x32xf32>
    %cst_148 = arith.constant 1.000000e+00 : f32
    %509 = vector.broadcast %cst_148 : f32 to vector<2x32xf32>
    %510 = arith.addf %509, %508 : vector<2x32xf32>
    %511 = arith.divf %509, %510 : vector<2x32xf32>
    %512 = arith.mulf %503, %442 : vector<2x32xf32>
    %513 = arith.mulf %497, %505 : vector<2x32xf32>
    %514 = arith.addf %512, %513 : vector<2x32xf32>
    %515 = math.tanh %514 : vector<2x32xf32>
    %516 = arith.mulf %511, %515 : vector<2x32xf32>
    %517 = arith.truncf %491 : vector<2x32xf32> to vector<2x32xbf16>
    %c6_149 = arith.constant 6 : index
    %c0_150 = arith.constant 0 : index
    %c0_151 = arith.constant 0 : index
    %518 = vector.load %arg8[%c6_149, %c0_150, %c0_151] : memref<8x2x32xbf16, #tpu.memory_space<vmem>>, vector<1x2x32xbf16>
    %519 = vector.shape_cast %518 : vector<1x2x32xbf16> to vector<2x32xbf16>
    %520 = vector.shape_cast %517 : vector<2x32xbf16> to vector<1x2x32xbf16>
    tpu.vector_store %arg8[%c6_149, %c0_150, %c0_151], %520 {strides = array<i32>} : memref<8x2x32xbf16, #tpu.memory_space<vmem>>, vector<1x2x32xbf16>,
    %521 = arith.truncf %516 : vector<2x32xf32> to vector<2x32xbf16>
    %c6_152 = arith.constant 6 : index
    %c0_153 = arith.constant 0 : index
    %c0_154 = arith.constant 0 : index
    %522 = vector.load %arg9[%c6_152, %c0_153, %c0_154] : memref<8x2x32xbf16, #tpu.memory_space<vmem>>, vector<1x2x32xbf16>
    %523 = vector.shape_cast %522 : vector<1x2x32xbf16> to vector<2x32xbf16>
    %524 = vector.shape_cast %521 : vector<2x32xbf16> to vector<1x2x32xbf16>
    tpu.vector_store %arg9[%c6_152, %c0_153, %c0_154], %524 {strides = array<i32>} : memref<8x2x32xbf16, #tpu.memory_space<vmem>>, vector<1x2x32xbf16>,
    %c7 = arith.constant 7 : index
    %c0_155 = arith.constant 0 : index
    %c0_156 = arith.constant 0 : index
    %525 = vector.load %arg1[%c7, %c0_155, %c0_156] : memref<8x2x128xbf16, #tpu.memory_space<vmem>>, vector<1x2x128xbf16>
    %526 = vector.shape_cast %525 : vector<1x2x128xbf16> to vector<2x128xbf16>
    %527 = arith.extf %526 : vector<2x128xbf16> to vector<2x128xf32>
    %528 = arith.addf %527, %8 : vector<2x128xf32>
    %529 = arith.truncf %491 : vector<2x32xf32> to vector<2x32xbf16>
    %cst_157 = arith.constant dense<0.000000e+00> : vector<2x128xf32>
    %530 = tpu.matmul %529, %3, %cst_157 {dimension_numbers = #tpu.dot_dimension_numbers<[1], [0], [0], [1], [0, 0, 1, 1], [], []>} : vector<2x32xbf16>, vector<32x128xbf16>, vector<2x128xf32> -> vector<2x128xf32>
    %531 = arith.addf %528, %530 : vector<2x128xf32>
    %c7_158 = arith.constant 7 : index
    %c0_159 = arith.constant 0 : index
    %c0_160 = arith.constant 0 : index
    %532 = vector.load %arg2[%c7_158, %c0_159, %c0_160] : memref<8x2x128xbf16, #tpu.memory_space<vmem>>, vector<1x2x128xbf16>
    %533 = vector.shape_cast %532 : vector<1x2x128xbf16> to vector<2x128xbf16>
    %534 = arith.extf %533 : vector<2x128xbf16> to vector<2x128xf32>
    %535 = arith.addf %534, %12 : vector<2x128xf32>
    %536 = arith.truncf %516 : vector<2x32xf32> to vector<2x32xbf16>
    %cst_161 = arith.constant dense<0.000000e+00> : vector<2x128xf32>
    %537 = tpu.matmul %536, %4, %cst_161 {dimension_numbers = #tpu.dot_dimension_numbers<[1], [0], [0], [1], [0, 0, 1, 1], [], []>} : vector<2x32xbf16>, vector<32x128xbf16>, vector<2x128xf32> -> vector<2x128xf32>
    %538 = arith.addf %535, %537 : vector<2x128xf32>
    %539 = vector.extract_strided_slice %531 {offsets = [0, 0], sizes = [2, 32], strides = [1, 1]} : vector<2x128xf32> to vector<2x32xf32>
    %540 = arith.negf %539 : vector<2x32xf32>
    %541 = math.exp %540 : vector<2x32xf32>
    %cst_162 = arith.constant 1.000000e+00 : f32
    %542 = vector.broadcast %cst_162 : f32 to vector<2x32xf32>
    %543 = arith.addf %542, %541 : vector<2x32xf32>
    %544 = arith.divf %542, %543 : vector<2x32xf32>
    %545 = vector.extract_strided_slice %531 {offsets = [0, 32], sizes = [2, 32], strides = [1, 1]} : vector<2x128xf32> to vector<2x32xf32>
    %546 = arith.negf %545 : vector<2x32xf32>
    %547 = math.exp %546 : vector<2x32xf32>
    %cst_163 = arith.constant 1.000000e+00 : f32
    %548 = vector.broadcast %cst_163 : f32 to vector<2x32xf32>
    %549 = arith.addf %548, %547 : vector<2x32xf32>
    %550 = arith.divf %548, %549 : vector<2x32xf32>
    %551 = vector.extract_strided_slice %531 {offsets = [0, 64], sizes = [2, 32], strides = [1, 1]} : vector<2x128xf32> to vector<2x32xf32>
    %552 = math.tanh %551 : vector<2x32xf32>
    %553 = vector.extract_strided_slice %531 {offsets = [0, 96], sizes = [2, 32], strides = [1, 1]} : vector<2x128xf32> to vector<2x32xf32>
    %554 = arith.negf %553 : vector<2x32xf32>
    %555 = math.exp %554 : vector<2x32xf32>
    %cst_164 = arith.constant 1.000000e+00 : f32
    %556 = vector.broadcast %cst_164 : f32 to vector<2x32xf32>
    %557 = arith.addf %556, %555 : vector<2x32xf32>
    %558 = arith.divf %556, %557 : vector<2x32xf32>
    %559 = arith.mulf %550, %489 : vector<2x32xf32>
    %560 = arith.mulf %544, %552 : vector<2x32xf32>
    %561 = arith.addf %559, %560 : vector<2x32xf32>
    %562 = math.tanh %561 : vector<2x32xf32>
    %563 = arith.mulf %558, %562 : vector<2x32xf32>
    %564 = vector.extract_strided_slice %538 {offsets = [0, 0], sizes = [2, 32], strides = [1, 1]} : vector<2x128xf32> to vector<2x32xf32>
    %565 = arith.negf %564 : vector<2x32xf32>
    %566 = math.exp %565 : vector<2x32xf32>
    %cst_165 = arith.constant 1.000000e+00 : f32
    %567 = vector.broadcast %cst_165 : f32 to vector<2x32xf32>
    %568 = arith.addf %567, %566 : vector<2x32xf32>
    %569 = arith.divf %567, %568 : vector<2x32xf32>
    %570 = vector.extract_strided_slice %538 {offsets = [0, 32], sizes = [2, 32], strides = [1, 1]} : vector<2x128xf32> to vector<2x32xf32>
    %571 = arith.negf %570 : vector<2x32xf32>
    %572 = math.exp %571 : vector<2x32xf32>
    %cst_166 = arith.constant 1.000000e+00 : f32
    %573 = vector.broadcast %cst_166 : f32 to vector<2x32xf32>
    %574 = arith.addf %573, %572 : vector<2x32xf32>
    %575 = arith.divf %573, %574 : vector<2x32xf32>
    %576 = vector.extract_strided_slice %538 {offsets = [0, 64], sizes = [2, 32], strides = [1, 1]} : vector<2x128xf32> to vector<2x32xf32>
    %577 = math.tanh %576 : vector<2x32xf32>
    %578 = vector.extract_strided_slice %538 {offsets = [0, 96], sizes = [2, 32], strides = [1, 1]} : vector<2x128xf32> to vector<2x32xf32>
    %579 = arith.negf %578 : vector<2x32xf32>
    %580 = math.exp %579 : vector<2x32xf32>
    %cst_167 = arith.constant 1.000000e+00 : f32
    %581 = vector.broadcast %cst_167 : f32 to vector<2x32xf32>
    %582 = arith.addf %581, %580 : vector<2x32xf32>
    %583 = arith.divf %581, %582 : vector<2x32xf32>
    %584 = arith.mulf %575, %514 : vector<2x32xf32>
    %585 = arith.mulf %569, %577 : vector<2x32xf32>
    %586 = arith.addf %584, %585 : vector<2x32xf32>
    %587 = math.tanh %586 : vector<2x32xf32>
    %588 = arith.mulf %583, %587 : vector<2x32xf32>
    %589 = arith.truncf %563 : vector<2x32xf32> to vector<2x32xbf16>
    %c7_168 = arith.constant 7 : index
    %c0_169 = arith.constant 0 : index
    %c0_170 = arith.constant 0 : index
    %590 = vector.load %arg8[%c7_168, %c0_169, %c0_170] : memref<8x2x32xbf16, #tpu.memory_space<vmem>>, vector<1x2x32xbf16>
    %591 = vector.shape_cast %590 : vector<1x2x32xbf16> to vector<2x32xbf16>
    %592 = vector.shape_cast %589 : vector<2x32xbf16> to vector<1x2x32xbf16>
    tpu.vector_store %arg8[%c7_168, %c0_169, %c0_170], %592 {strides = array<i32>} : memref<8x2x32xbf16, #tpu.memory_space<vmem>>, vector<1x2x32xbf16>,
    %593 = arith.truncf %588 : vector<2x32xf32> to vector<2x32xbf16>
    %c7_171 = arith.constant 7 : index
    %c0_172 = arith.constant 0 : index
    %c0_173 = arith.constant 0 : index
    %594 = vector.load %arg9[%c7_171, %c0_172, %c0_173] : memref<8x2x32xbf16, #tpu.memory_space<vmem>>, vector<1x2x32xbf16>
    %595 = vector.shape_cast %594 : vector<1x2x32xbf16> to vector<2x32xbf16>
    %596 = vector.shape_cast %593 : vector<2x32xbf16> to vector<1x2x32xbf16>
    tpu.vector_store %arg9[%c7_171, %c0_172, %c0_173], %596 {strides = array<i32>} : memref<8x2x32xbf16, #tpu.memory_space<vmem>>, vector<1x2x32xbf16>,
    %c0_174 = arith.constant 0 : index
    %c0_175 = arith.constant 0 : index
    %c0_176 = arith.constant 0 : index
    %597 = vector.load %arg10[%c0_174, %c0_175, %c0_176] : memref<2x2x32xf32, #tpu.memory_space<vmem>>, vector<1x2x32xf32>
    %598 = vector.shape_cast %597 : vector<1x2x32xf32> to vector<2x32xf32>
    %599 = vector.shape_cast %563 : vector<2x32xf32> to vector<1x2x32xf32>
    tpu.vector_store %arg10[%c0_174, %c0_175, %c0_176], %599 {strides = array<i32>} : memref<2x2x32xf32, #tpu.memory_space<vmem>>, vector<1x2x32xf32>,
    %c0_177 = arith.constant 0 : index
    %c0_178 = arith.constant 0 : index
    %c0_179 = arith.constant 0 : index
    %600 = vector.load %arg11[%c0_177, %c0_178, %c0_179] : memref<2x2x32xf32, #tpu.memory_space<vmem>>, vector<1x2x32xf32>
    %601 = vector.shape_cast %600 : vector<1x2x32xf32> to vector<2x32xf32>
    %602 = vector.shape_cast %561 : vector<2x32xf32> to vector<1x2x32xf32>
    tpu.vector_store %arg11[%c0_177, %c0_178, %c0_179], %602 {strides = array<i32>} : memref<2x2x32xf32, #tpu.memory_space<vmem>>, vector<1x2x32xf32>,
    %c1_180 = arith.constant 1 : index
    %c0_181 = arith.constant 0 : index
    %c0_182 = arith.constant 0 : index
    %603 = vector.load %arg10[%c1_180, %c0_181, %c0_182] : memref<2x2x32xf32, #tpu.memory_space<vmem>>, vector<1x2x32xf32>
    %604 = vector.shape_cast %603 : vector<1x2x32xf32> to vector<2x32xf32>
    %605 = vector.shape_cast %588 : vector<2x32xf32> to vector<1x2x32xf32>
    tpu.vector_store %arg10[%c1_180, %c0_181, %c0_182], %605 {strides = array<i32>} : memref<2x2x32xf32, #tpu.memory_space<vmem>>, vector<1x2x32xf32>,
    %c1_183 = arith.constant 1 : index
    %c0_184 = arith.constant 0 : index
    %c0_185 = arith.constant 0 : index
    %606 = vector.load %arg11[%c1_183, %c0_184, %c0_185] : memref<2x2x32xf32, #tpu.memory_space<vmem>>, vector<1x2x32xf32>
    %607 = vector.shape_cast %606 : vector<1x2x32xf32> to vector<2x32xf32>
    %608 = vector.shape_cast %586 : vector<2x32xf32> to vector<1x2x32xf32>
    tpu.vector_store %arg11[%c1_183, %c0_184, %c0_185], %608 {strides = array<i32>} : memref<2x2x32xf32, #tpu.memory_space<vmem>>, vector<1x2x32xf32>,
    return
  }
  func.func @transform_0(%arg0: i32) -> (i32, i32, i32) {
    %c0_i32 = arith.constant 0 : i32
    %c0_i32_0 = arith.constant 0 : i32
    %c0_i32_1 = arith.constant 0 : i32
    return %arg0, %c0_i32, %c0_i32_0 : i32, i32, i32
  }
  func.func @transform_1(%arg0: i32) -> (i32, i32, i32) {
    %c0_i32 = arith.constant 0 : i32
    %c0_i32_0 = arith.constant 0 : i32
    %c0_i32_1 = arith.constant 0 : i32
    return %arg0, %c0_i32, %c0_i32_0 : i32, i32, i32
  }
  func.func @transform_2(%arg0: i32) -> (i32, i32) {
    %c0_i32 = arith.constant 0 : i32
    %c0_i32_0 = arith.constant 0 : i32
    %c0_i32_1 = arith.constant 0 : i32
    return %c0_i32, %c0_i32_0 : i32, i32
  }
  func.func @transform_3(%arg0: i32) -> (i32, i32) {
    %c0_i32 = arith.constant 0 : i32
    %c0_i32_0 = arith.constant 0 : i32
    %c0_i32_1 = arith.constant 0 : i32
    return %c0_i32, %c0_i32_0 : i32, i32
  }
  func.func @transform_4(%arg0: i32) -> (i32, i32, i32) {
    %c0_i32 = arith.constant 0 : i32
    %c0_i32_0 = arith.constant 0 : i32
    %c0_i32_1 = arith.constant 0 : i32
    %c0_i32_2 = arith.constant 0 : i32
    return %c0_i32, %c0_i32_0, %c0_i32_1 : i32, i32, i32
  }
  func.func @transform_5(%arg0: i32) -> (i32, i32, i32) {
    %c0_i32 = arith.constant 0 : i32
    %c0_i32_0 = arith.constant 0 : i32
    %c0_i32_1 = arith.constant 0 : i32
    %c0_i32_2 = arith.constant 0 : i32
    return %c0_i32, %c0_i32_0, %c0_i32_1 : i32, i32, i32
  }
  func.func @transform_6(%arg0: i32) -> (i32, i32, i32) {
    %c0_i32 = arith.constant 0 : i32
    %c0_i32_0 = arith.constant 0 : i32
    %c0_i32_1 = arith.constant 0 : i32
    %c0_i32_2 = arith.constant 0 : i32
    return %c0_i32, %c0_i32_0, %c0_i32_1 : i32, i32, i32
  }
  func.func @transform_7(%arg0: i32) -> (i32, i32, i32) {
    %c0_i32 = arith.constant 0 : i32
    %c0_i32_0 = arith.constant 0 : i32
    %c0_i32_1 = arith.constant 0 : i32
    return %arg0, %c0_i32, %c0_i32_0 : i32, i32, i32
  }
  func.func @transform_8(%arg0: i32) -> (i32, i32, i32) {
    %c0_i32 = arith.constant 0 : i32
    %c0_i32_0 = arith.constant 0 : i32
    %c0_i32_1 = arith.constant 0 : i32
    return %arg0, %c0_i32, %c0_i32_0 : i32, i32, i32
  }
}

module attributes {stable_mosaic.version = 11 : i64} {
  func.func @head_kernel(%arg0: memref<2x32xbf16, #tpu.memory_space<vmem>>, %arg1: memref<2x32xbf16, #tpu.memory_space<vmem>>, %arg2: memref<32x128xbf16, #tpu.memory_space<vmem>>, %arg3: memref<1x128xf32, #tpu.memory_space<vmem>>, %arg4: memref<2x128xf32, #tpu.memory_space<vmem>>) attributes {dimension_semantics = [], scalar_prefetch = 0 : i64, scratch_operands = 0 : i64, tpu.core_type = #tpu.core_type<tc>} {
    %c0 = arith.constant 0 : index
    %c0_0 = arith.constant 0 : index
    %0 = vector.load %arg0[%c0, %c0_0] : memref<2x32xbf16, #tpu.memory_space<vmem>>, vector<2x32xbf16>
    %1 = arith.extf %0 : vector<2x32xbf16> to vector<2x32xf32>
    %c0_1 = arith.constant 0 : index
    %c0_2 = arith.constant 0 : index
    %2 = vector.load %arg1[%c0_1, %c0_2] : memref<2x32xbf16, #tpu.memory_space<vmem>>, vector<2x32xbf16>
    %3 = arith.extf %2 : vector<2x32xbf16> to vector<2x32xf32>
    %4 = arith.addf %1, %3 : vector<2x32xf32>
    %5 = arith.truncf %4 : vector<2x32xf32> to vector<2x32xbf16>
    %c0_3 = arith.constant 0 : index
    %c0_4 = arith.constant 0 : index
    %6 = vector.load %arg2[%c0_3, %c0_4] : memref<32x128xbf16, #tpu.memory_space<vmem>>, vector<32x128xbf16>
    %cst = arith.constant dense<0.000000e+00> : vector<2x128xf32>
    %7 = tpu.matmul %5, %6, %cst {dimension_numbers = #tpu.dot_dimension_numbers<[1], [0], [0], [1], [0, 0, 1, 1], [], []>} : vector<2x32xbf16>, vector<32x128xbf16>, vector<2x128xf32> -> vector<2x128xf32>
    %c0_5 = arith.constant 0 : index
    %c0_6 = arith.constant 0 : index
    %8 = vector.load %arg3[%c0_5, %c0_6] : memref<1x128xf32, #tpu.memory_space<vmem>>, vector<1x128xf32>
    %9 = vector.broadcast %8 : vector<1x128xf32> to vector<2x128xf32>
    %10 = arith.addf %7, %9 : vector<2x128xf32>
    %c0_7 = arith.constant 0 : index
    %c0_8 = arith.constant 0 : index
    %11 = vector.load %arg4[%c0_7, %c0_8] : memref<2x128xf32, #tpu.memory_space<vmem>>, vector<2x128xf32>
    tpu.vector_store %arg4[%c0_7, %c0_8], %10 {strides = array<i32>} : memref<2x128xf32, #tpu.memory_space<vmem>>, vector<2x128xf32>,
    return
  }
}

</mosaic_0001>

<llo_original>
// kernel: a_call__.5
$region0: #{a_call__.5}
  #allocation0 [shape = 'u32[]', space=smem, size = 0x4, offset = 0x4, fixed_abs, tag = 'smem constant byte address 0x4 - core index']
  #allocation1 [shape = 'u32[144,128]{1,0:T(1,128)}', space=vmem, size = 0x12000, scoped, tag = 'internal scratch']
  %s0 = inlined_call_operand.vmem [shape: bf16[16,4], index: 0, kind: input, shape index: {}]
  %s1 = inlined_call_operand.vmem [shape: bf16[16,4], index: 1, kind: input, shape index: {}]
  %s2 = inlined_call_operand.vmem [shape: bf16[4,128], index: 2, kind: input, shape index: {}]
  %s3 = inlined_call_operand.vmem [shape: bf16[4,128], index: 3, kind: input, shape index: {}]
  %s4 = inlined_call_operand.vmem [shape: bf16[16,128], index: 4, kind: output, shape index: {0}]
  %s5 = inlined_call_operand.vmem [shape: bf16[16,128], index: 5, kind: output, shape index: {1}]
  %6 = xla_tuple %s4, %s5
  %s7 = sld [smem:[#allocation0]]
  $region34: #{a_call__.5} parent=0
    _
  %s9 = ssub.s32 1, %s7
  %s10 = scalar_select 0, %s9, %s7
  // Predicated region
  $region2: #{a_call__.5} parent=0 // pred_check
    _
  $region3: #{a_call__.5} parent=0 // pred_check_branch
    %12 = sbr.rel (0) target = $region5
  $region4: #{a_call__.5} parent=0 // pred_region
    _
  $region5: #{a_call__.5} parent=0 // pred_fallthru
    _
  // Predicated region
  $region6: #{a_call__.5} parent=0 // pred_check
    _
  $region7: #{a_call__.5} parent=0 // pred_check_branch
    %14 = sbr.rel (0) target = $region9
  $region8: #{a_call__.5} parent=0 // pred_region
    _
  $region9: #{a_call__.5} parent=0 // pred_fallthru
    _
  // Predicated region
  $region10: #{a_call__.5} parent=0 // pred_check
    _
  $region11: #{a_call__.5} parent=0 // pred_check_branch
    %16 = sbr.rel (0) target = $region13
  $region12: #{a_call__.5} parent=0 // pred_region
    _
  $region13: #{a_call__.5} parent=0 // pred_fallthru
    _
  // Predicated region
  $region14: #{a_call__.5} parent=0 // pred_check
    _
  $region15: #{a_call__.5} parent=0 // pred_check_branch
    %18 = sbr.rel (0) target = $region17
  $region16: #{a_call__.5} parent=0 // pred_region
    _
  $region17: #{a_call__.5} parent=0 // pred_fallthru
    _
  %v20 = vld [vmem:[%s0] sm:$0xf]
  %v21 = vld [vmem:[%s0 + $0x4] sm:$0xf]
  %v22 = vld [vmem:[%s2] sm:$0x3]
  %v25 = vunpack.c.l.b16 %v20
  %v26 = vunpack.c.l.b16 %v21
  %v27 = vpack.c.b16 %v26, %v25
  %vm28 = vcmask 31744
  %v30 = vsel %vm28, %v27, 0
  %vm32 = vcmask 1041408
  %v34 = vsel %vm32, %v22, 0
  %36 = vmatprep.subr.bf16.mxu0 0
  %37 = vmatpush1.bf16.msra.mxu0 %v34
  %38 = vmatprep.subr.bf16.mxu0 0
  %39 = vmatpush1.bf16.msra.mxu0 0
  %40 = vmatprep.subr.bf16.mxu0 0
  %41 = vmatpush1.bf16.msra.mxu0 0
  %42 = vmatprep.subr.bf16.mxu0 0
  %43 = vmatpush1.bf16.msra.mxu0 0
  %44 = vmatprep.subr.bf16.mxu0 0
  %45 = vmatpush1.bf16.msra.mxu0 0
  %46 = vmatprep.subr.bf16.mxu0 0
  %47 = vmatpush1.bf16.msra.mxu0 0
  %48 = vmatprep.subr.bf16.mxu0 0
  %49 = vmatpush1.bf16.msra.mxu0 0
  %50 = vmatprep.subr.bf16.mxu0 0
  %51 = vmatpush1.bf16.msra.mxu0 0
  %52 = vmatprep.subr.bf16.mxu0 0
  %53 = vmatpush1.bf16.msra.mxu0 0
  %54 = vmatprep.subr.bf16.mxu0 0
  %55 = vmatpush1.bf16.msra.mxu0 0
  %56 = vmatprep.subr.bf16.mxu0 0
  %57 = vmatpush1.bf16.msra.mxu0 0
  %58 = vmatprep.subr.bf16.mxu0 0
  %59 = vmatpush1.bf16.msra.mxu0 0
  %60 = vmatprep.subr.bf16.mxu0 0
  %61 = vmatpush1.bf16.msra.mxu0 0
  %62 = vmatprep.subr.bf16.mxu0 0
  %63 = vmatpush1.bf16.msra.mxu0 0
  %64 = vmatprep.subr.bf16.mxu0 0
  %65 = vmatpush1.bf16.msra.mxu0 0
  %66 = vmatprep.subr.bf16.mxu0 0
  %67 = vmatpush1.bf16.msra.mxu0 0
  %68 = vmatprep.mubr.bf16.mxu0 0
  %69 = vmatmul.mubr.bf16.gmra.mrb[0].mxu0 %v30
  %v70 = vpop.f32.mrb[0].mxu0
  %v71 = vadd.f32 0.0, %v70
  %v72 = vpop.f32.mrb[0].mxu0
  %v73 = vpop.f32.mrb[0].mxu0
  %v74 = vadd.f32 0.0, %v73
  %v75 = vpop.f32.mrb[0].mxu0
  %76 = vdwg.mxu0
  %v77 = vld [vmem:[%s1] sm:$0xf]
  %v78 = vld [vmem:[%s1 + $0x4] sm:$0xf]
  %v79 = vld [vmem:[%s3] sm:$0x3]
  %v82 = vunpack.c.l.b16 %v77
  %v83 = vunpack.c.l.b16 %v78
  %v84 = vpack.c.b16 %v83, %v82
  %v86 = vsel %vm28, %v84, 0
  %v89 = vsel %vm32, %v79, 0
  %91 = vmatprep.subr.bf16.mxu0 0
  %92 = vmatpush1.bf16.msra.mxu0 %v89
  %93 = vmatprep.subr.bf16.mxu0 0
  %94 = vmatpush1.bf16.msra.mxu0 0
  %95 = vmatprep.subr.bf16.mxu0 0
  %96 = vmatpush1.bf16.msra.mxu0 0
  %97 = vmatprep.subr.bf16.mxu0 0
  %98 = vmatpush1.bf16.msra.mxu0 0
  %99 = vmatprep.subr.bf16.mxu0 0
  %100 = vmatpush1.bf16.msra.mxu0 0
  %101 = vmatprep.subr.bf16.mxu0 0
  %102 = vmatpush1.bf16.msra.mxu0 0
  %103 = vmatprep.subr.bf16.mxu0 0
  %104 = vmatpush1.bf16.msra.mxu0 0
  %105 = vmatprep.subr.bf16.mxu0 0
  %106 = vmatpush1.bf16.msra.mxu0 0
  %107 = vmatprep.subr.bf16.mxu0 0
  %108 = vmatpush1.bf16.msra.mxu0 0
  %109 = vmatprep.subr.bf16.mxu0 0
  %110 = vmatpush1.bf16.msra.mxu0 0
  %111 = vmatprep.subr.bf16.mxu0 0
  %112 = vmatpush1.bf16.msra.mxu0 0
  %113 = vmatprep.subr.bf16.mxu0 0
  %114 = vmatpush1.bf16.msra.mxu0 0
  %115 = vmatprep.subr.bf16.mxu0 0
  %116 = vmatpush1.bf16.msra.mxu0 0
  %117 = vmatprep.subr.bf16.mxu0 0
  %118 = vmatpush1.bf16.msra.mxu0 0
  %119 = vmatprep.subr.bf16.mxu0 0
  %120 = vmatpush1.bf16.msra.mxu0 0
  %121 = vmatprep.subr.bf16.mxu0 0
  %122 = vmatpush1.bf16.msra.mxu0 0
  %123 = vmatprep.mubr.bf16.mxu0 0
  %124 = vmatmul.mubr.bf16.gmra.mrb[0].mxu0 %v86
  %v125 = vpop.f32.mrb[0].mxu0
  %v126 = vadd.f32 0.0, %v125
  %v127 = vpop.f32.mrb[0].mxu0
  %v128 = vpop.f32.mrb[0].mxu0
  %v129 = vadd.f32 0.0, %v128
  %v130 = vpop.f32.mrb[0].mxu0
  %131 = vdwg.mxu0
  %v132 = vpack.c.bf16 %v74, %v71
  %v134 = vunpack.c.l.b16 %v132
  %v135 = vunpack.c.h.b16 %v132
  %v136 = vpack.c.b16 %v134, %v134
  %v137 = vpack.c.b16 %v135, %v135
  %140 = vst [vmem:[%s4] sm:$0xf] %v136
  %141 = vst [vmem:[%s4 + $0x4] sm:$0xf] %v137
  %v142 = vpack.c.bf16 %v129, %v126
  %v144 = vunpack.c.l.b16 %v142
  %v145 = vunpack.c.h.b16 %v142
  %v146 = vpack.c.b16 %v144, %v144
  %v147 = vpack.c.b16 %v145, %v145
  %150 = vst [vmem:[%s5] sm:$0xf] %v146
  %151 = vst [vmem:[%s5 + $0x4] sm:$0xf] %v147
  // Predicated region
  $region18: #{a_call__.5} parent=0 // pred_check
    _
  $region19: #{a_call__.5} parent=0 // pred_check_branch
    %153 = sbr.rel (0) target = $region21
  $region20: #{a_call__.5} parent=0 // pred_region
    _
  $region21: #{a_call__.5} parent=0 // pred_fallthru
    _
  // Predicated region
  $region22: #{a_call__.5} parent=0 // pred_check
    _
  $region23: #{a_call__.5} parent=0 // pred_check_branch
    %155 = sbr.rel (0) target = $region25
  $region24: #{a_call__.5} parent=0 // pred_region
    _
  $region25: #{a_call__.5} parent=0 // pred_fallthru
    _
  // Predicated region
  $region26: #{a_call__.5} parent=0 // pred_check
    _
  $region27: #{a_call__.5} parent=0 // pred_check_branch
    %157 = sbr.rel (0) target = $region29
  $region28: #{a_call__.5} parent=0 // pred_region
    _
  $region29: #{a_call__.5} parent=0 // pred_fallthru
    _
  // Predicated region
  $region30: #{a_call__.5} parent=0 // pred_check
    _
  $region31: #{a_call__.5} parent=0 // pred_check_branch
    %159 = sbr.rel (0) target = $region33
  $region32: #{a_call__.5} parent=0 // pred_region
    _
  $region33: #{a_call__.5} parent=0 // pred_fallthru
    _

// kernel: a_call__.7
$region0: #{a_call__.7}
  #allocation0 [shape = 'u32[]', space=smem, size = 0x4, offset = 0x4, fixed_abs, tag = 'smem constant byte address 0x4 - core index']
  #allocation1 [shape = 'u32[144,128]{1,0:T(1,128)}', space=vmem, size = 0x12000, scoped, tag = 'internal scratch']
  %s0 = inlined_call_operand.vmem [shape: bf16[16,32], index: 0, kind: input, shape index: {}]
  %s1 = inlined_call_operand.vmem [shape: bf16[16,32], index: 1, kind: input, shape index: {}]
  %s2 = inlined_call_operand.vmem [shape: bf16[16,32], index: 2, kind: input, shape index: {}]
  %s3 = inlined_call_operand.vmem [shape: bf16[16,32], index: 3, kind: input, shape index: {}]
  %s4 = inlined_call_operand.vmem [shape: bf16[32,128], index: 4, kind: input, shape index: {}]
  %s5 = inlined_call_operand.vmem [shape: bf16[32,128], index: 5, kind: input, shape index: {}]
  %s6 = inlined_call_operand.vmem [shape: bf16[32,128], index: 6, kind: input, shape index: {}]
  %s7 = inlined_call_operand.vmem [shape: bf16[32,128], index: 7, kind: input, shape index: {}]
  %s8 = inlined_call_operand.vmem [shape: bf16[16,128], index: 8, kind: output, shape index: {0}]
  %s9 = inlined_call_operand.vmem [shape: bf16[16,128], index: 9, kind: output, shape index: {1}]
  %10 = xla_tuple %s8, %s9
  %s11 = sld [smem:[#allocation0]]
  $region50: #{a_call__.7} parent=0
    _
  %s13 = ssub.s32 1, %s11
  %s14 = scalar_select 0, %s13, %s11
  // Predicated region
  $region2: #{a_call__.7} parent=0 // pred_check
    _
  $region3: #{a_call__.7} parent=0 // pred_check_branch
    %16 = sbr.rel (0) target = $region5
  $region4: #{a_call__.7} parent=0 // pred_region
    _
  $region5: #{a_call__.7} parent=0 // pred_fallthru
    _
  // Predicated region
  $region6: #{a_call__.7} parent=0 // pred_check
    _
  $region7: #{a_call__.7} parent=0 // pred_check_branch
    %18 = sbr.rel (0) target = $region9
  $region8: #{a_call__.7} parent=0 // pred_region
    _
  $region9: #{a_call__.7} parent=0 // pred_fallthru
    _
  // Predicated region
  $region10: #{a_call__.7} parent=0 // pred_check
    _
  $region11: #{a_call__.7} parent=0 // pred_check_branch
    %20 = sbr.rel (0) target = $region13
  $region12: #{a_call__.7} parent=0 // pred_region
    _
  $region13: #{a_call__.7} parent=0 // pred_fallthru
    _
  // Predicated region
  $region14: #{a_call__.7} parent=0 // pred_check
    _
  $region15: #{a_call__.7} parent=0 // pred_check_branch
    %22 = sbr.rel (0) target = $region17
  $region16: #{a_call__.7} parent=0 // pred_region
    _
  $region17: #{a_call__.7} parent=0 // pred_fallthru
    _
  // Predicated region
  $region18: #{a_call__.7} parent=0 // pred_check
    _
  $region19: #{a_call__.7} parent=0 // pred_check_branch
    %24 = sbr.rel (0) target = $region21
  $region20: #{a_call__.7} parent=0 // pred_region
    _
  $region21: #{a_call__.7} parent=0 // pred_fallthru
    _
  // Predicated region
  $region22: #{a_call__.7} parent=0 // pred_check
    _
  $region23: #{a_call__.7} parent=0 // pred_check_branch
    %26 = sbr.rel (0) target = $region25
  $region24: #{a_call__.7} parent=0 // pred_region
    _
  $region25: #{a_call__.7} parent=0 // pred_fallthru
    _
  // Predicated region
  $region26: #{a_call__.7} parent=0 // pred_check
    _
  $region27: #{a_call__.7} parent=0 // pred_check_branch
    %28 = sbr.rel (0) target = $region29
  $region28: #{a_call__.7} parent=0 // pred_region
    _
  $region29: #{a_call__.7} parent=0 // pred_fallthru
    _
  // Predicated region
  $region30: #{a_call__.7} parent=0 // pred_check
    _
  $region31: #{a_call__.7} parent=0 // pred_check_branch
    %30 = sbr.rel (0) target = $region33
  $region32: #{a_call__.7} parent=0 // pred_region
    _
  $region33: #{a_call__.7} parent=0 // pred_fallthru
    _
  %v32 = vld [vmem:[%s0] sm:$0xf]
  %v33 = vld [vmem:[%s0 + $0x4] sm:$0xf]
  %v34 = vld [vmem:[%s4] sm:$0xf]
  %v35 = vld [vmem:[%s4 + $0x4] sm:$0xf]
  %v36 = vld [vmem:[%s4 + $0x8] sm:$0xf]
  %v37 = vld [vmem:[%s4 + $0xc] sm:$0xf]
  %v38 = vld [vmem:[%s2] sm:$0xf]
  %v39 = vld [vmem:[%s2 + $0x4] sm:$0xf]
  %v40 = vld [vmem:[%s6] sm:$0xf]
  %v41 = vld [vmem:[%s6 + $0x4] sm:$0xf]
  %v42 = vld [vmem:[%s6 + $0x8] sm:$0xf]
  %v43 = vld [vmem:[%s6 + $0xc] sm:$0xf]
  %v44 = vld [vmem:[%s1] sm:$0xf]
  %v45 = vld [vmem:[%s1 + $0x4] sm:$0xf]
  %v46 = vld [vmem:[%s5] sm:$0xf]
  %v47 = vld [vmem:[%s5 + $0x4] sm:$0xf]
  %v48 = vld [vmem:[%s5 + $0x8] sm:$0xf]
  %v49 = vld [vmem:[%s5 + $0xc] sm:$0xf]
  %v52 = vunpack.c.l.b16 %v44
  %v53 = vunpack.c.l.b16 %v45
  %v54 = vpack.c.b16 %v53, %v52
  %v59 = vunpack.c.l.b16 %v46
  %v60 = vunpack.c.l.b16 %v47
  %v61 = vunpack.c.l.b16 %v48
  %v62 = vunpack.c.l.b16 %v49
  %v63 = vpack.c.b16 %v60, %v59
  %v64 = vpack.c.b16 %v62, %v61
  %vm67 = vcmask 261120
  %v69 = vsel %vm67, %v54, 0
  %71 = vmatprep.subr.bf16.mxu0 0
  %72 = vmatpush1.bf16.msra.mxu0 %v63
  %73 = vmatprep.subr.bf16.mxu0 0
  %74 = vmatpush1.bf16.msra.mxu0 %v64
  %75 = vmatprep.subr.bf16.mxu0 0
  %76 = vmatpush1.bf16.msra.mxu0 0
  %77 = vmatprep.subr.bf16.mxu0 0
  %78 = vmatpush1.bf16.msra.mxu0 0
  %79 = vmatprep.subr.bf16.mxu0 0
  %80 = vmatpush1.bf16.msra.mxu0 0
  %81 = vmatprep.subr.bf16.mxu0 0
  %82 = vmatpush1.bf16.msra.mxu0 0
  %83 = vmatprep.subr.bf16.mxu0 0
  %84 = vmatpush1.bf16.msra.mxu0 0
  %85 = vmatprep.subr.bf16.mxu0 0
  %86 = vmatpush1.bf16.msra.mxu0 0
  %87 = vmatprep.subr.bf16.mxu0 0
  %88 = vmatpush1.bf16.msra.mxu0 0
  %89 = vmatprep.subr.bf16.mxu0 0
  %90 = vmatpush1.bf16.msra.mxu0 0
  %91 = vmatprep.subr.bf16.mxu0 0
  %92 = vmatpush1.bf16.msra.mxu0 0
  %93 = vmatprep.subr.bf16.mxu0 0
  %94 = vmatpush1.bf16.msra.mxu0 0
  %95 = vmatprep.subr.bf16.mxu0 0
  %96 = vmatpush1.bf16.msra.mxu0 0
  %97 = vmatprep.subr.bf16.mxu0 0
  %98 = vmatpush1.bf16.msra.mxu0 0
  %99 = vmatprep.subr.bf16.mxu0 0
  %100 = vmatpush1.bf16.msra.mxu0 0
  %101 = vmatprep.subr.bf16.mxu0 0
  %102 = vmatpush1.bf16.msra.mxu0 0
  %103 = vmatprep.mubr.bf16.mxu0 0
  %104 = vmatmul.mubr.bf16.gmra.mrb[0].mxu0 %v69
  %v105 = vpop.f32.mrb[0].mxu0
  %v106 = vadd.f32 0.0, %v105
  %v107 = vpop.f32.mrb[0].mxu0
  %v108 = vpop.f32.mrb[0].mxu0
  %v109 = vadd.f32 0.0, %v108
  %v110 = vpop.f32.mrb[0].mxu0
  %111 = vdwg.mxu0
  %v114 = vunpack.c.l.b16 %v32
  %v115 = vunpack.c.l.b16 %v33
  %v116 = vpack.c.b16 %v115, %v114
  %v121 = vunpack.c.l.b16 %v34
  %v122 = vunpack.c.l.b16 %v35
  %v123 = vunpack.c.l.b16 %v36
  %v124 = vunpack.c.l.b16 %v37
  %v125 = vpack.c.b16 %v122, %v121
  %v126 = vpack.c.b16 %v124, %v123
  %v130 = vsel %vm67, %v116, 0
  %132 = vmatprep.subr.bf16.mxu0 0
  %133 = vmatpush1.bf16.msra.mxu0 %v125
  %134 = vmatprep.subr.bf16.mxu0 0
  %135 = vmatpush1.bf16.msra.mxu0 %v126
  %136 = vmatprep.subr.bf16.mxu0 0
  %137 = vmatpush1.bf16.msra.mxu0 0
  %138 = vmatprep.subr.bf16.mxu0 0
  %139 = vmatpush1.bf16.msra.mxu0 0
  %140 = vmatprep.subr.bf16.mxu0 0
  %141 = vmatpush1.bf16.msra.mxu0 0
  %142 = vmatprep.subr.bf16.mxu0 0
  %143 = vmatpush1.bf16.msra.mxu0 0
  %144 = vmatprep.subr.bf16.mxu0 0
  %145 = vmatpush1.bf16.msra.mxu0 0
  %146 = vmatprep.subr.bf16.mxu0 0
  %147 = vmatpush1.bf16.msra.mxu0 0
  %148 = vmatprep.subr.bf16.mxu0 0
  %149 = vmatpush1.bf16.msra.mxu0 0
  %150 = vmatprep.subr.bf16.mxu0 0
  %151 = vmatpush1.bf16.msra.mxu0 0
  %152 = vmatprep.subr.bf16.mxu0 0
  %153 = vmatpush1.bf16.msra.mxu0 0
  %154 = vmatprep.subr.bf16.mxu0 0
  %155 = vmatpush1.bf16.msra.mxu0 0
  %156 = vmatprep.subr.bf16.mxu0 0
  %157 = vmatpush1.bf16.msra.mxu0 0
  %158 = vmatprep.subr.bf16.mxu0 0
  %159 = vmatpush1.bf16.msra.mxu0 0
  %160 = vmatprep.subr.bf16.mxu0 0
  %161 = vmatpush1.bf16.msra.mxu0 0
  %162 = vmatprep.subr.bf16.mxu0 0
  %163 = vmatpush1.bf16.msra.mxu0 0
  %164 = vmatprep.mubr.bf16.mxu0 0
  %165 = vmatmul.mubr.bf16.gmra.mrb[0].mxu0 %v130
  %v166 = vpop.f32.mrb[0].mxu0
  %v167 = vadd.f32 %v106, %v166
  %v168 = vpop.f32.mrb[0].mxu0
  %v169 = vpop.f32.mrb[0].mxu0
  %v170 = vadd.f32 %v109, %v169
  %v171 = vpop.f32.mrb[0].mxu0
  %172 = vdwg.mxu0
  %v173 = vld [vmem:[%s3] sm:$0xf]
  %v174 = vld [vmem:[%s3 + $0x4] sm:$0xf]
  %v175 = vld [vmem:[%s7] sm:$0xf]
  %v176 = vld [vmem:[%s7 + $0x4] sm:$0xf]
  %v177 = vld [vmem:[%s7 + $0x8] sm:$0xf]
  %v178 = vld [vmem:[%s7 + $0xc] sm:$0xf]
  %v181 = vunpack.c.l.b16 %v173
  %v182 = vunpack.c.l.b16 %v174
  %v183 = vpack.c.b16 %v182, %v181
  %v188 = vunpack.c.l.b16 %v175
  %v189 = vunpack.c.l.b16 %v176
  %v190 = vunpack.c.l.b16 %v177
  %v191 = vunpack.c.l.b16 %v178
  %v192 = vpack.c.b16 %v189, %v188
  %v193 = vpack.c.b16 %v191, %v190
  %v197 = vsel %vm67, %v183, 0
  %199 = vmatprep.subr.bf16.mxu0 0
  %200 = vmatpush1.bf16.msra.mxu0 %v192
  %201 = vmatprep.subr.bf16.mxu0 0
  %202 = vmatpush1.bf16.msra.mxu0 %v193
  %203 = vmatprep.subr.bf16.mxu0 0
  %204 = vmatpush1.bf16.msra.mxu0 0
  %205 = vmatprep.subr.bf16.mxu0 0
  %206 = vmatpush1.bf16.msra.mxu0 0
  %207 = vmatprep.subr.bf16.mxu0 0
  %208 = vmatpush1.bf16.msra.mxu0 0
  %209 = vmatprep.subr.bf16.mxu0 0
  %210 = vmatpush1.bf16.msra.mxu0 0
  %211 = vmatprep.subr.bf16.mxu0 0
  %212 = vmatpush1.bf16.msra.mxu0 0
  %213 = vmatprep.subr.bf16.mxu0 0
  %214 = vmatpush1.bf16.msra.mxu0 0
  %215 = vmatprep.subr.bf16.mxu0 0
  %216 = vmatpush1.bf16.msra.mxu0 0
  %217 = vmatprep.subr.bf16.mxu0 0
  %218 = vmatpush1.bf16.msra.mxu0 0
  %219 = vmatprep.subr.bf16.mxu0 0
  %220 = vmatpush1.bf16.msra.mxu0 0
  %221 = vmatprep.subr.bf16.mxu0 0
  %222 = vmatpush1.bf16.msra.mxu0 0
  %223 = vmatprep.subr.bf16.mxu0 0
  %224 = vmatpush1.bf16.msra.mxu0 0
  %225 = vmatprep.subr.bf16.mxu0 0
  %226 = vmatpush1.bf16.msra.mxu0 0
  %227 = vmatprep.subr.bf16.mxu0 0
  %228 = vmatpush1.bf16.msra.mxu0 0
  %229 = vmatprep.subr.bf16.mxu0 0
  %230 = vmatpush1.bf16.msra.mxu0 0
  %231 = vmatprep.mubr.bf16.mxu0 0
  %232 = vmatmul.mubr.bf16.gmra.mrb[0].mxu0 %v197
  %v233 = vpop.f32.mrb[0].mxu0
  %v234 = vadd.f32 0.0, %v233
  %v235 = vpop.f32.mrb[0].mxu0
  %v236 = vpop.f32.mrb[0].mxu0
  %v237 = vadd.f32 0.0, %v236
  %v238 = vpop.f32.mrb[0].mxu0
  %239 = vdwg.mxu0
  %v242 = vunpack.c.l.b16 %v38
  %v243 = vunpack.c.l.b16 %v39
  %v244 = vpack.c.b16 %v243, %v242
  %v249 = vunpack.c.l.b16 %v40
  %v250 = vunpack.c.l.b16 %v41
  %v251 = vunpack.c.l.b16 %v42
  %v252 = vunpack.c.l.b16 %v43
  %v253 = vpack.c.b16 %v250, %v249
  %v254 = vpack.c.b16 %v252, %v251
  %v258 = vsel %vm67, %v244, 0
  %260 = vmatprep.subr.bf16.mxu0 0
  %261 = vmatpush1.bf16.msra.mxu0 %v253
  %262 = vmatprep.subr.bf16.mxu0 0
  %263 = vmatpush1.bf16.msra.mxu0 %v254
  %264 = vmatprep.subr.bf16.mxu0 0
  %265 = vmatpush1.bf16.msra.mxu0 0
  %266 = vmatprep.subr.bf16.mxu0 0
  %267 = vmatpush1.bf16.msra.mxu0 0
  %268 = vmatprep.subr.bf16.mxu0 0
  %269 = vmatpush1.bf16.msra.mxu0 0
  %270 = vmatprep.subr.bf16.mxu0 0
  %271 = vmatpush1.bf16.msra.mxu0 0
  %272 = vmatprep.subr.bf16.mxu0 0
  %273 = vmatpush1.bf16.msra.mxu0 0
  %274 = vmatprep.subr.bf16.mxu0 0
  %275 = vmatpush1.bf16.msra.mxu0 0
  %276 = vmatprep.subr.bf16.mxu0 0
  %277 = vmatpush1.bf16.msra.mxu0 0
  %278 = vmatprep.subr.bf16.mxu0 0
  %279 = vmatpush1.bf16.msra.mxu0 0
  %280 = vmatprep.subr.bf16.mxu0 0
  %281 = vmatpush1.bf16.msra.mxu0 0
  %282 = vmatprep.subr.bf16.mxu0 0
  %283 = vmatpush1.bf16.msra.mxu0 0
  %284 = vmatprep.subr.bf16.mxu0 0
  %285 = vmatpush1.bf16.msra.mxu0 0
  %286 = vmatprep.subr.bf16.mxu0 0
  %287 = vmatpush1.bf16.msra.mxu0 0
  %288 = vmatprep.subr.bf16.mxu0 0
  %289 = vmatpush1.bf16.msra.mxu0 0
  %290 = vmatprep.subr.bf16.mxu0 0
  %291 = vmatpush1.bf16.msra.mxu0 0
  %292 = vmatprep.mubr.bf16.mxu0 0
  %293 = vmatmul.mubr.bf16.gmra.mrb[0].mxu0 %v258
  %v294 = vpop.f32.mrb[0].mxu0
  %v295 = vadd.f32 %v234, %v294
  %v296 = vpop.f32.mrb[0].mxu0
  %v297 = vpop.f32.mrb[0].mxu0
  %v298 = vadd.f32 %v237, %v297
  %v299 = vpop.f32.mrb[0].mxu0
  %300 = vdwg.mxu0
  %v301 = vpack.c.bf16 %v170, %v167
  %v303 = vunpack.c.l.b16 %v301
  %v304 = vunpack.c.h.b16 %v301
  %v305 = vpack.c.b16 %v303, %v303
  %v306 = vpack.c.b16 %v304, %v304
  %309 = vst [vmem:[%s8] sm:$0xf] %v305
  %310 = vst [vmem:[%s8 + $0x4] sm:$0xf] %v306
  %v311 = vpack.c.bf16 %v298, %v295
  %v313 = vunpack.c.l.b16 %v311
  %v314 = vunpack.c.h.b16 %v311
  %v315 = vpack.c.b16 %v313, %v313
  %v316 = vpack.c.b16 %v314, %v314
  %319 = vst [vmem:[%s9] sm:$0xf] %v315
  %320 = vst [vmem:[%s9 + $0x4] sm:$0xf] %v316
  // Predicated region
  $region34: #{a_call__.7} parent=0 // pred_check
    _
  $region35: #{a_call__.7} parent=0 // pred_check_branch
    %322 = sbr.rel (0) target = $region37
  $region36: #{a_call__.7} parent=0 // pred_region
    _
  $region37: #{a_call__.7} parent=0 // pred_fallthru
    _
  // Predicated region
  $region38: #{a_call__.7} parent=0 // pred_check
    _
  $region39: #{a_call__.7} parent=0 // pred_check_branch
    %324 = sbr.rel (0) target = $region41
  $region40: #{a_call__.7} parent=0 // pred_region
    _
  $region41: #{a_call__.7} parent=0 // pred_fallthru
    _
  // Predicated region
  $region42: #{a_call__.7} parent=0 // pred_check
    _
  $region43: #{a_call__.7} parent=0 // pred_check_branch
    %326 = sbr.rel (0) target = $region45
  $region44: #{a_call__.7} parent=0 // pred_region
    _
  $region45: #{a_call__.7} parent=0 // pred_fallthru
    _
  // Predicated region
  $region46: #{a_call__.7} parent=0 // pred_check
    _
  $region47: #{a_call__.7} parent=0 // pred_check_branch
    %328 = sbr.rel (0) target = $region49
  $region48: #{a_call__.7} parent=0 // pred_region
    _
  $region49: #{a_call__.7} parent=0 // pred_fallthru
    _

// kernel: a_call__.9
$region0: #{a_call__.9}
  #allocation0 [shape = 'u32[]', space=smem, size = 0x4, offset = 0x4, fixed_abs, tag = 'smem constant byte address 0x4 - core index']
  #allocation1 [shape = 'u32[144,128]{1,0:T(1,128)}', space=vmem, size = 0x12000, scoped, tag = 'internal scratch']
  %s0 = inlined_call_operand.vmem [shape: bf16[2,32], index: 0, kind: input, shape index: {}]
  %s1 = inlined_call_operand.vmem [shape: bf16[2,32], index: 1, kind: input, shape index: {}]
  %s2 = inlined_call_operand.vmem [shape: bf16[32,128], index: 2, kind: input, shape index: {}]
  %s3 = inlined_call_operand.vmem [shape: f32[1,128], index: 3, kind: input, shape index: {}]
  %s4 = inlined_call_operand.hbm [shape: f32[2,128], index: 4, kind: output, shape index: {}]
  %s5 = sld [smem:[#allocation0]]
  $region26: #{a_call__.9} parent=0
    _
  %s7 = ssub.s32 1, %s5
  %s8 = scalar_select 0, %s7, %s5
  $region1: #{a_call__.9} parent=0
    #allocation2 [shape = 'u8[1024]{0}', space=vmem, size = 0x400, scoped, tag = 'output window, operand 0, single buffered']
    #allocation3 [shape = 's32[1]{0}', space=sflag, size = 0x4, scoped, tag = 'scoped memory for a_call__.9']
    %9 = vsyncpa [#allocation3], 0
    // Predicated region
    $region2: #{a_call__.9} parent=1 // pred_check
      _
    $region3: #{a_call__.9} parent=1 // pred_check_branch
      %11 = sbr.rel (0) target = $region5
    $region4: #{a_call__.9} parent=1 // pred_region
      _
    $region5: #{a_call__.9} parent=1 // pred_fallthru
      _
    // Predicated region
    $region6: #{a_call__.9} parent=1 // pred_check
      _
    $region7: #{a_call__.9} parent=1 // pred_check_branch
      %13 = sbr.rel (0) target = $region9
    $region8: #{a_call__.9} parent=1 // pred_region
      _
    $region9: #{a_call__.9} parent=1 // pred_fallthru
      _
    // Predicated region
    $region10: #{a_call__.9} parent=1 // pred_check
      _
    $region11: #{a_call__.9} parent=1 // pred_check_branch
      %15 = sbr.rel (0) target = $region13
    $region12: #{a_call__.9} parent=1 // pred_region
      _
    $region13: #{a_call__.9} parent=1 // pred_fallthru
      _
    // Predicated region
    $region14: #{a_call__.9} parent=1 // pred_check
      _
    $region15: #{a_call__.9} parent=1 // pred_check_branch
      %17 = sbr.rel (0) target = $region17
    $region16: #{a_call__.9} parent=1 // pred_region
      _
    $region17: #{a_call__.9} parent=1 // pred_fallthru
      _
    %v19 = vld [vmem:[%s0] sm:$0x1]
    %v20 = vunpack.c.l.bf16 %v19
    %v21 = vld [vmem:[%s1] sm:$0x1]
    %v22 = vunpack.c.l.bf16 %v21
    %v23 = vadd.f32 %v20, %v22
    %v24 = vpack.c.bf16 %v23, %v23
    %v25 = vld [vmem:[%s2] sm:$0xf]
    %v26 = vld [vmem:[%s2 + $0x4] sm:$0xf]
    %v27 = vld [vmem:[%s2 + $0x8] sm:$0xf]
    %v28 = vld [vmem:[%s2 + $0xc] sm:$0xf]
    %v29 = vld [vmem:[%s3] sm:$0x1]
    %v31 = vlaneseq
    %v32 = vshrl.u32 %v31, 7
    %v33 = vsub.s32 0, %v32
    %v34 = vrot.slane %v29, %v33
    %v40 = vunpack.c.l.b16 %v25
    %v41 = vunpack.c.l.b16 %v26
    %v42 = vunpack.c.l.b16 %v27
    %v43 = vunpack.c.l.b16 %v28
    %v44 = vpack.c.b16 %v41, %v40
    %v45 = vpack.c.b16 %v43, %v42
    %vm48 = vcmask 261120
    %v50 = vsel %vm48, %v24, 0
    %52 = vmatprep.subr.bf16.mxu0 0
    %53 = vmatpush1.bf16.msra.mxu0 %v44
    %54 = vmatprep.subr.bf16.mxu0 0
    %55 = vmatpush1.bf16.msra.mxu0 %v45
    %56 = vmatprep.subr.bf16.mxu0 0
    %57 = vmatpush1.bf16.msra.mxu0 0
    %58 = vmatprep.subr.bf16.mxu0 0
    %59 = vmatpush1.bf16.msra.mxu0 0
    %60 = vmatprep.subr.bf16.mxu0 0
    %61 = vmatpush1.bf16.msra.mxu0 0
    %62 = vmatprep.subr.bf16.mxu0 0
    %63 = vmatpush1.bf16.msra.mxu0 0
    %64 = vmatprep.subr.bf16.mxu0 0
    %65 = vmatpush1.bf16.msra.mxu0 0
    %66 = vmatprep.subr.bf16.mxu0 0
    %67 = vmatpush1.bf16.msra.mxu0 0
    %68 = vmatprep.subr.bf16.mxu0 0
    %69 = vmatpush1.bf16.msra.mxu0 0
    %70 = vmatprep.subr.bf16.mxu0 0
    %71 = vmatpush1.bf16.msra.mxu0 0
    %72 = vmatprep.subr.bf16.mxu0 0
    %73 = vmatpush1.bf16.msra.mxu0 0
    %74 = vmatprep.subr.bf16.mxu0 0
    %75 = vmatpush1.bf16.msra.mxu0 0
    %76 = vmatprep.subr.bf16.mxu0 0
    %77 = vmatpush1.bf16.msra.mxu0 0
    %78 = vmatprep.subr.bf16.mxu0 0
    %79 = vmatpush1.bf16.msra.mxu0 0
    %80 = vmatprep.subr.bf16.mxu0 0
    %81 = vmatpush1.bf16.msra.mxu0 0
    %82 = vmatprep.subr.bf16.mxu0 0
    %83 = vmatpush1.bf16.msra.mxu0 0
    %84 = vmatprep.mubr.bf16.mxu0 0
    %85 = vmatmul.mubr.bf16.gmra.mrb[0].mxu0 %v50
    %v86 = vpop.f32.mrb[0].mxu0
    %v87 = vadd.f32 %v34, %v86
    %v88 = vpop.f32.mrb[0].mxu0
    %v89 = vpop.f32.mrb[0].mxu0
    %v90 = vpop.f32.mrb[0].mxu0
    %91 = vdwg.mxu0
    %92 = vst [vmem:[#allocation2] sm:$0x3] %v87
    // Predicated region
    $region18: #{a_call__.9} parent=1 // pred_check
      _
    $region19: #{a_call__.9} parent=1 // pred_check_branch
      %94 = sbr.rel (0) target = $region21
    $region20: #{a_call__.9} parent=1 // pred_region
      %s96 = ssub.s32 32, 32
      %97 = vsyncadd [#allocation3], %s96
      %s99 = sshll.u32 [#allocation2], 4
      %s100 = int_to_ptr.vmem [resolvable:$true] %s99
      %102 = dma.vmem_to_hbm [thread:$0]  %s100, 32, %s4, [#allocation3]
    $region21: #{a_call__.9} parent=1 // pred_fallthru
      _
    // Predicated region
    $region22: #{a_call__.9} parent=1 // pred_check
      _
    $region23: #{a_call__.9} parent=1 // pred_check_branch
      %104 = sbr.rel (0) target = $region25
    $region24: #{a_call__.9} parent=1 // pred_region
      %105 = dma.done [#allocation3], 32
    $region25: #{a_call__.9} parent=1 // pred_fallthru
      _
    %106 = vsyncpa [#allocation3], 1

// kernel: a_call__.6
$region0: #{a_call__.6}
  #allocation0 [shape = 'u32[]', space=smem, size = 0x4, offset = 0x4, fixed_abs, tag = 'smem constant byte address 0x4 - core index']
  #allocation1 [shape = 'u32[144,128]{1,0:T(1,128)}', space=vmem, size = 0x12000, scoped, tag = 'internal scratch']
  #allocation2 [shape = 'f32[2,2,32]{2,1,0:T(2,128)}', space=vmem, size = 0x800, scoped, tag = 'scratch operand']
  #allocation3 [shape = 'f32[2,2,32]{2,1,0:T(2,128)}', space=vmem, size = 0x800, scoped, tag = 'scratch operand']
  %s0 = inlined_call_operand.vmem [shape: bf16[8,2,128], index: 0, kind: input, shape index: {}]
  %s1 = inlined_call_operand.vmem [shape: bf16[8,2,128], index: 1, kind: input, shape index: {}]
  %s2 = inlined_call_operand.vmem [shape: bf16[32,128], index: 2, kind: input, shape index: {}]
  %s3 = inlined_call_operand.vmem [shape: bf16[32,128], index: 3, kind: input, shape index: {}]
  %s4 = inlined_call_operand.vmem [shape: f32[2,1,128], index: 4, kind: input, shape index: {}]
  %s5 = inlined_call_operand.vmem [shape: f32[2,2,32], index: 5, kind: input, shape index: {}]
  %s6 = inlined_call_operand.vmem [shape: f32[2,2,32], index: 6, kind: input, shape index: {}]
  %s7 = inlined_call_operand.vmem [shape: bf16[8,2,32], index: 7, kind: output, shape index: {0}]
  %s8 = inlined_call_operand.vmem [shape: bf16[8,2,32], index: 8, kind: output, shape index: {1}]
  %9 = xla_tuple %s7, %s8
  %s10 = sld [smem:[#allocation0]]
  $region50: #{a_call__.6} parent=0
    _
  %s12 = ssub.s32 1, %s10
  %s13 = scalar_select 0, %s12, %s10
  // Predicated region
  $region2: #{a_call__.6} parent=0 // pred_check
    _
  $region3: #{a_call__.6} parent=0 // pred_check_branch
    %15 = sbr.rel (0) target = $region5
  $region4: #{a_call__.6} parent=0 // pred_region
    _
  $region5: #{a_call__.6} parent=0 // pred_fallthru
    _
  // Predicated region
  $region6: #{a_call__.6} parent=0 // pred_check
    _
  $region7: #{a_call__.6} parent=0 // pred_check_branch
    %17 = sbr.rel (0) target = $region9
  $region8: #{a_call__.6} parent=0 // pred_region
    _
  $region9: #{a_call__.6} parent=0 // pred_fallthru
    _
  // Predicated region
  $region10: #{a_call__.6} parent=0 // pred_check
    _
  $region11: #{a_call__.6} parent=0 // pred_check_branch
    %19 = sbr.rel (0) target = $region13
  $region12: #{a_call__.6} parent=0 // pred_region
    _
  $region13: #{a_call__.6} parent=0 // pred_fallthru
    _
  // Predicated region
  $region14: #{a_call__.6} parent=0 // pred_check
    _
  $region15: #{a_call__.6} parent=0 // pred_check_branch
    %21 = sbr.rel (0) target = $region17
  $region16: #{a_call__.6} parent=0 // pred_region
    _
  $region17: #{a_call__.6} parent=0 // pred_fallthru
    _
  // Predicated region
  $region18: #{a_call__.6} parent=0 // pred_check
    _
  $region19: #{a_call__.6} parent=0 // pred_check_branch
    %23 = sbr.rel (0) target = $region21
  $region20: #{a_call__.6} parent=0 // pred_region
    _
  $region21: #{a_call__.6} parent=0 // pred_fallthru
    _
  // Predicated region
  $region22: #{a_call__.6} parent=0 // pred_check
    _
  $region23: #{a_call__.6} parent=0 // pred_check_branch
    %25 = sbr.rel (0) target = $region25
  $region24: #{a_call__.6} parent=0 // pred_region
    _
  $region25: #{a_call__.6} parent=0 // pred_fallthru
    _
  // Predicated region
  $region26: #{a_call__.6} parent=0 // pred_check
    _
  $region27: #{a_call__.6} parent=0 // pred_check_branch
    %27 = sbr.rel (0) target = $region29
  $region28: #{a_call__.6} parent=0 // pred_region
    _
  $region29: #{a_call__.6} parent=0 // pred_fallthru
    _
  %p29 = scmp.eq.s32.totalorder 0, 0
  // Predicated region
  $region30: #{a_call__.6} parent=0 // pred_check
    %p30 = pneg %p29
  $region31: #{a_call__.6} parent=0 // pred_check_branch
    %32 = sbr.rel (%p30) target = $region33
  $region32: #{a_call__.6} parent=0 // pred_region
    %v33 = vld [vmem:[%s5] sm:$0x3]
    %v34 = vld [vmem:[%s5 + $0x2] sm:$0x3]
    %vm35 = vcmask 254976
    %36 = vst.msk [vmem:[#allocation2] sm:$0x3] %vm35, %v33
    %37 = vst.msk [vmem:[#allocation2 + $0x2] sm:$0x3] %vm35, %v34
    %v38 = vld [vmem:[%s6] sm:$0x3]
    %v39 = vld [vmem:[%s6 + $0x2] sm:$0x3]
    %40 = vst.msk [vmem:[#allocation3] sm:$0x3] %vm35, %v38
    %41 = vst.msk [vmem:[#allocation3 + $0x2] sm:$0x3] %vm35, %v39
  $region33: #{a_call__.6} parent=0 // pred_fallthru
    _
  %v42 = vld [vmem:[%s2] sm:$0xf]
  %v43 = vld [vmem:[%s2 + $0x4] sm:$0xf]
  %v44 = vld [vmem:[%s2 + $0x8] sm:$0xf]
  %v45 = vld [vmem:[%s2 + $0xc] sm:$0xf]
  %v46 = vld [vmem:[%s3] sm:$0xf]
  %v47 = vld [vmem:[%s3 + $0x4] sm:$0xf]
  %v48 = vld [vmem:[%s3 + $0x8] sm:$0xf]
  %v49 = vld [vmem:[%s3 + $0xc] sm:$0xf]
  %v50 = vld [vmem:[%s4] sm:$0x1]
  %v52 = vlaneseq
  %v53 = vshrl.u32 %v52, 7
  %v54 = vsub.s32 0, %v53
  %v55 = vrot.slane %v50, %v54
  %s57 = scalar_lea.vmem %s4, 1
  %v58 = vld [vmem:[%s57] sm:$0x1]
  %v60 = vlaneseq
  %v61 = vshrl.u32 %v60, 7
  %v62 = vsub.s32 0, %v61
  %v63 = vrot.slane %v58, %v62
  %v65 = vld [vmem:[#allocation2] sm:$0x3]
  %v66 = vld [vmem:[#allocation3] sm:$0x3]
  %s67 = scalar_lea.vmem [#allocation2], 2
  %v68 = vld [vmem:[%s67] sm:$0x3]
  %s69 = scalar_lea.vmem [#allocation3], 2
  %v70 = vld [vmem:[%s69] sm:$0x3]
  %v71 = vld [vmem:[%s0] sm:$0x1]
  %v72 = vunpack.c.l.bf16 %v71
  %v73 = vadd.f32 %v72, %v55
  %v74 = vpack.c.bf16 %v65, %v65
  %v79 = vunpack.c.l.b16 %v42
  %v80 = vunpack.c.l.b16 %v43
  %v81 = vunpack.c.l.b16 %v44
  %v82 = vunpack.c.l.b16 %v45
  %v83 = vpack.c.b16 %v80, %v79
  %v84 = vpack.c.b16 %v82, %v81
  %vm87 = vcmask 261120
  %v89 = vsel %vm87, %v74, 0
  %91 = vmatprep.subr.bf16.mxu0 0
  %92 = vmatpush1.bf16.msra.mxu0 %v83
  %93 = vmatprep.subr.bf16.mxu0 0
  %94 = vmatpush1.bf16.msra.mxu0 %v84
  %95 = vmatprep.subr.bf16.mxu0 0
  %96 = vmatpush1.bf16.msra.mxu0 0
  %97 = vmatprep.subr.bf16.mxu0 0
  %98 = vmatpush1.bf16.msra.mxu0 0
  %99 = vmatprep.subr.bf16.mxu0 0
  %100 = vmatpush1.bf16.msra.mxu0 0
  %101 = vmatprep.subr.bf16.mxu0 0
  %102 = vmatpush1.bf16.msra.mxu0 0
  %103 = vmatprep.subr.bf16.mxu0 0
  %104 = vmatpush1.bf16.msra.mxu0 0
  %105 = vmatprep.subr.bf16.mxu0 0
  %106 = vmatpush1.bf16.msra.mxu0 0
  %107 = vmatprep.subr.bf16.mxu0 0
  %108 = vmatpush1.bf16.msra.mxu0 0
  %109 = vmatprep.subr.bf16.mxu0 0
  %110 = vmatpush1.bf16.msra.mxu0 0
  %111 = vmatprep.subr.bf16.mxu0 0
  %112 = vmatpush1.bf16.msra.mxu0 0
  %113 = vmatprep.subr.bf16.mxu0 0
  %114 = vmatpush1.bf16.msra.mxu0 0
  %115 = vmatprep.subr.bf16.mxu0 0
  %116 = vmatpush1.bf16.msra.mxu0 0
  %117 = vmatprep.subr.bf16.mxu0 0
  %118 = vmatpush1.bf16.msra.mxu0 0
  %119 = vmatprep.subr.bf16.mxu0 0
  %120 = vmatpush1.bf16.msra.mxu0 0
  %121 = vmatprep.subr.bf16.mxu0 0
  %122 = vmatpush1.bf16.msra.mxu0 0
  %123 = vmatprep.mubr.bf16.mxu0 0
  %124 = vmatmul.mubr.bf16.gmra.mrb[0].mxu0 %v89
  %v125 = vpop.f32.mrb[0].mxu0
  %v126 = vadd.f32 0.0, %v125
  %v127 = vpop.f32.mrb[0].mxu0
  %v128 = vpop.f32.mrb[0].mxu0
  %v129 = vpop.f32.mrb[0].mxu0
  %130 = vdwg.mxu0
  %v131 = vadd.f32 %v73, %v126
  %v132 = vld [vmem:[%s1] sm:$0x1]
  %v133 = vunpack.c.l.bf16 %v132
  %v134 = vadd.f32 %v133, %v63
  %v135 = vpack.c.bf16 %v68, %v68
  %v140 = vunpack.c.l.b16 %v46
  %v141 = vunpack.c.l.b16 %v47
  %v142 = vunpack.c.l.b16 %v48
  %v143 = vunpack.c.l.b16 %v49
  %v144 = vpack.c.b16 %v141, %v140
  %v145 = vpack.c.b16 %v143, %v142
  %v149 = vsel %vm87, %v135, 0
  %151 = vmatprep.subr.bf16.mxu0 0
  %152 = vmatpush1.bf16.msra.mxu0 %v144
  %153 = vmatprep.subr.bf16.mxu0 0
  %154 = vmatpush1.bf16.msra.mxu0 %v145
  %155 = vmatprep.subr.bf16.mxu0 0
  %156 = vmatpush1.bf16.msra.mxu0 0
  %157 = vmatprep.subr.bf16.mxu0 0
  %158 = vmatpush1.bf16.msra.mxu0 0
  %159 = vmatprep.subr.bf16.mxu0 0
  %160 = vmatpush1.bf16.msra.mxu0 0
  %161 = vmatprep.subr.bf16.mxu0 0
  %162 = vmatpush1.bf16.msra.mxu0 0
  %163 = vmatprep.subr.bf16.mxu0 0
  %164 = vmatpush1.bf16.msra.mxu0 0
  %165 = vmatprep.subr.bf16.mxu0 0
  %166 = vmatpush1.bf16.msra.mxu0 0
  %167 = vmatprep.subr.bf16.mxu0 0
  %168 = vmatpush1.bf16.msra.mxu0 0
  %169 = vmatprep.subr.bf16.mxu0 0
  %170 = vmatpush1.bf16.msra.mxu0 0
  %171 = vmatprep.subr.bf16.mxu0 0
  %172 = vmatpush1.bf16.msra.mxu0 0
  %173 = vmatprep.subr.bf16.mxu0 0
  %174 = vmatpush1.bf16.msra.mxu0 0
  %175 = vmatprep.subr.bf16.mxu0 0
  %176 = vmatpush1.bf16.msra.mxu0 0
  %177 = vmatprep.subr.bf16.mxu0 0
  %178 = vmatpush1.bf16.msra.mxu0 0
  %179 = vmatprep.subr.bf16.mxu0 0
  %180 = vmatpush1.bf16.msra.mxu0 0
  %181 = vmatprep.subr.bf16.mxu0 0
  %182 = vmatpush1.bf16.msra.mxu0 0
  %183 = vmatprep.mubr.bf16.mxu0 0
  %184 = vmatmul.mubr.bf16.gmra.mrb[0].mxu0 %v149
  %v185 = vpop.f32.mrb[0].mxu0
  %v186 = vadd.f32 0.0, %v185
  %v187 = vpop.f32.mrb[0].mxu0
  %v188 = vpop.f32.mrb[0].mxu0
  %v189 = vpop.f32.mrb[0].mxu0
  %190 = vdwg.mxu0
  %v191 = vadd.f32 %v134, %v186
  %v192 = vxor.u32 %v131, 2147483648
  %v193 = vmul.f32 %v192, 1.442695
  %v194 = vpow.pop %v193
  %v195 = vadd.f32 %v194, 1.0
  %v196 = vrcp.pop %v195
  %v197 = vmul.f32 1.0, %v196
  %v198 = vtanh.pop %v131
  %v201 = vunpack.c.l.s4 1983009808
  %v202 = vunpack.c.0.s8 %v201
  %v203 = vlaneseq
  %v204 = vshrl.u32 %v203, 7
  %v205 = vsub.s32 %v202, %v204
  %v206 = vrot.slane %v66, %v205
  %207 = vrot.lane.b32.xlu0 %v206, 32
  %v208 = vpop.permute.xlu0 %207
  %v210 = vmul.f32 %v197, %v208
  %212 = vrot.lane.b32.xlu0 %v198, 64
  %v213 = vpop.permute.xlu0 %212
  %v215 = vmul.f32 %v197, %v213
  %217 = vrot.lane.b32.xlu0 %v215, 32
  %v218 = vpop.permute.xlu0 %217
  %v220 = vadd.f32 %v210, %v218
  %v221 = vtanh.pop %v220
  %223 = vrot.lane.b32.xlu0 %v221, 64
  %v224 = vpop.permute.xlu0 %223
  %v226 = vmul.f32 %v197, %v224
  %v227 = vxor.u32 %v191, 2147483648
  %v228 = vmul.f32 %v227, 1.442695
  %v229 = vpow.pop %v228
  %v230 = vadd.f32 %v229, 1.0
  %v231 = vrcp.pop %v230
  %v232 = vmul.f32 1.0, %v231
  %v233 = vtanh.pop %v191
  %v236 = vunpack.c.l.s4 1983009808
  %v237 = vunpack.c.0.s8 %v236
  %v238 = vlaneseq
  %v239 = vshrl.u32 %v238, 7
  %v240 = vsub.s32 %v237, %v239
  %v241 = vrot.slane %v70, %v240
  %242 = vrot.lane.b32.xlu0 %v241, 32
  %v243 = vpop.permute.xlu0 %242
  %v245 = vmul.f32 %v232, %v243
  %247 = vrot.lane.b32.xlu0 %v233, 64
  %v248 = vpop.permute.xlu0 %247
  %v250 = vmul.f32 %v232, %v248
  %252 = vrot.lane.b32.xlu0 %v250, 32
  %v253 = vpop.permute.xlu0 %252
  %v255 = vadd.f32 %v245, %v253
  %v256 = vtanh.pop %v255
  %258 = vrot.lane.b32.xlu0 %v256, 64
  %v259 = vpop.permute.xlu0 %258
  %v261 = vmul.f32 %v232, %v259
  %v262 = vpack.c.bf16 %v226, %v226
  %v265 = vunpack.c.l.s4 1966171168
  %v266 = vunpack.c.0.s8 %v265
  %v267 = vlaneseq
  %v268 = vshrl.u32 %v267, 7
  %v269 = vsub.s32 %v266, %v268
  %v270 = vrot.slane %v262, %v269
  %v272 = vunpack.c.l.s4 1966171168
  %v273 = vunpack.c.0.s8 %v272
  %v274 = vlaneseq
  %v275 = vshrl.u32 %v274, 7
  %v276 = vsub.s32 %v273, %v275
  %v277 = vrot.slane %v270, %v276
  %278 = vrot.lane.b32.xlu0 %v277, 32
  %v279 = vpop.permute.xlu0 %278
  %vm281 = vcmask 253952
  %282 = vst.msk [vmem:[%s7] sm:$0x1] %vm281, %v279
  %v283 = vpack.c.bf16 %v261, %v261
  %v286 = vunpack.c.l.s4 1966171168
  %v287 = vunpack.c.0.s8 %v286
  %v288 = vlaneseq
  %v289 = vshrl.u32 %v288, 7
  %v290 = vsub.s32 %v287, %v289
  %v291 = vrot.slane %v283, %v290
  %v293 = vunpack.c.l.s4 1966171168
  %v294 = vunpack.c.0.s8 %v293
  %v295 = vlaneseq
  %v296 = vshrl.u32 %v295, 7
  %v297 = vsub.s32 %v294, %v296
  %v298 = vrot.slane %v291, %v297
  %299 = vrot.lane.b32.xlu0 %v298, 32
  %v300 = vpop.permute.xlu0 %299
  %302 = vst.msk [vmem:[%s8] sm:$0x1] %vm281, %v300
  %s303 = scalar_lea.vmem %s0, 1
  %v304 = vld [vmem:[%s303] sm:$0x1]
  %v305 = vunpack.c.l.bf16 %v304
  %v306 = vadd.f32 %v305, %v55
  %307 = vrot.lane.b32.xlu0 %v262, 32
  %v308 = vpop.permute.xlu0 %307
  %v310 = vsel %vm87, %v308, 0
  %312 = vmatprep.subr.bf16.mxu0 0
  %313 = vmatpush1.bf16.msra.mxu0 %v83
  %314 = vmatprep.subr.bf16.mxu0 0
  %315 = vmatpush1.bf16.msra.mxu0 %v84
  %316 = vmatprep.subr.bf16.mxu0 0
  %317 = vmatpush1.bf16.msra.mxu0 0
  %318 = vmatprep.subr.bf16.mxu0 0
  %319 = vmatpush1.bf16.msra.mxu0 0
  %320 = vmatprep.subr.bf16.mxu0 0
  %321 = vmatpush1.bf16.msra.mxu0 0
  %322 = vmatprep.subr.bf16.mxu0 0
  %323 = vmatpush1.bf16.msra.mxu0 0
  %324 = vmatprep.subr.bf16.mxu0 0
  %325 = vmatpush1.bf16.msra.mxu0 0
  %326 = vmatprep.subr.bf16.mxu0 0
  %327 = vmatpush1.bf16.msra.mxu0 0
  %328 = vmatprep.subr.bf16.mxu0 0
  %329 = vmatpush1.bf16.msra.mxu0 0
  %330 = vmatprep.subr.bf16.mxu0 0
  %331 = vmatpush1.bf16.msra.mxu0 0
  %332 = vmatprep.subr.bf16.mxu0 0
  %333 = vmatpush1.bf16.msra.mxu0 0
  %334 = vmatprep.subr.bf16.mxu0 0
  %335 = vmatpush1.bf16.msra.mxu0 0
  %336 = vmatprep.subr.bf16.mxu0 0
  %337 = vmatpush1.bf16.msra.mxu0 0
  %338 = vmatprep.subr.bf16.mxu0 0
  %339 = vmatpush1.bf16.msra.mxu0 0
  %340 = vmatprep.subr.bf16.mxu0 0
  %341 = vmatpush1.bf16.msra.mxu0 0
  %342 = vmatprep.subr.bf16.mxu0 0
  %343 = vmatpush1.bf16.msra.mxu0 0
  %344 = vmatprep.mubr.bf16.mxu0 0
  %345 = vmatmul.mubr.bf16.gmra.mrb[0].mxu0 %v310
  %v346 = vpop.f32.mrb[0].mxu0
  %v347 = vadd.f32 0.0, %v346
  %v348 = vpop.f32.mrb[0].mxu0
  %v349 = vpop.f32.mrb[0].mxu0
  %v350 = vpop.f32.mrb[0].mxu0
  %351 = vdwg.mxu0
  %v352 = vadd.f32 %v306, %v347
  %s353 = scalar_lea.vmem %s1, 1
  %v354 = vld [vmem:[%s353] sm:$0x1]
  %v355 = vunpack.c.l.bf16 %v354
  %v356 = vadd.f32 %v355, %v63
  %357 = vrot.lane.b32.xlu0 %v283, 32
  %v358 = vpop.permute.xlu0 %357
  %v360 = vsel %vm87, %v358, 0
  %362 = vmatprep.subr.bf16.mxu0 0
  %363 = vmatpush1.bf16.msra.mxu0 %v144
  %364 = vmatprep.subr.bf16.mxu0 0
  %365 = vmatpush1.bf16.msra.mxu0 %v145
  %366 = vmatprep.subr.bf16.mxu0 0
  %367 = vmatpush1.bf16.msra.mxu0 0
  %368 = vmatprep.subr.bf16.mxu0 0
  %369 = vmatpush1.bf16.msra.mxu0 0
  %370 = vmatprep.subr.bf16.mxu0 0
  %371 = vmatpush1.bf16.msra.mxu0 0
  %372 = vmatprep.subr.bf16.mxu0 0
  %373 = vmatpush1.bf16.msra.mxu0 0
  %374 = vmatprep.subr.bf16.mxu0 0
  %375 = vmatpush1.bf16.msra.mxu0 0
  %376 = vmatprep.subr.bf16.mxu0 0
  %377 = vmatpush1.bf16.msra.mxu0 0
  %378 = vmatprep.subr.bf16.mxu0 0
  %379 = vmatpush1.bf16.msra.mxu0 0
  %380 = vmatprep.subr.bf16.mxu0 0
  %381 = vmatpush1.bf16.msra.mxu0 0
  %382 = vmatprep.subr.bf16.mxu0 0
  %383 = vmatpush1.bf16.msra.mxu0 0
  %384 = vmatprep.subr.bf16.mxu0 0
  %385 = vmatpush1.bf16.msra.mxu0 0
  %386 = vmatprep.subr.bf16.mxu0 0
  %387 = vmatpush1.bf16.msra.mxu0 0
  %388 = vmatprep.subr.bf16.mxu0 0
  %389 = vmatpush1.bf16.msra.mxu0 0
  %390 = vmatprep.subr.bf16.mxu0 0
  %391 = vmatpush1.bf16.msra.mxu0 0
  %392 = vmatprep.subr.bf16.mxu0 0
  %393 = vmatpush1.bf16.msra.mxu0 0
  %394 = vmatprep.mubr.bf16.mxu0 0
  %395 = vmatmul.mubr.bf16.gmra.mrb[0].mxu0 %v360
  %v396 = vpop.f32.mrb[0].mxu0
  %v397 = vadd.f32 0.0, %v396
  %v398 = vpop.f32.mrb[0].mxu0
  %v399 = vpop.f32.mrb[0].mxu0
  %v400 = vpop.f32.mrb[0].mxu0
  %401 = vdwg.mxu0
  %v402 = vadd.f32 %v356, %v397
  %v403 = vxor.u32 %v352, 2147483648
  %v404 = vmul.f32 %v403, 1.442695
  %v405 = vpow.pop %v404
  %v406 = vadd.f32 %v405, 1.0
  %v407 = vrcp.pop %v406
  %v408 = vmul.f32 1.0, %v407
  %v409 = vtanh.pop %v352
  %v410 = vmul.f32 %v408, %v220
  %412 = vrot.lane.b32.xlu0 %v409, 64
  %v413 = vpop.permute.xlu0 %412
  %v415 = vmul.f32 %v408, %v413
  %417 = vrot.lane.b32.xlu0 %v415, 32
  %v418 = vpop.permute.xlu0 %417
  %v420 = vadd.f32 %v410, %v418
  %v421 = vtanh.pop %v420
  %423 = vrot.lane.b32.xlu0 %v421, 64
  %v424 = vpop.permute.xlu0 %423
  %v426 = vmul.f32 %v408, %v424
  %v427 = vxor.u32 %v402, 2147483648
  %v428 = vmul.f32 %v427, 1.442695
  %v429 = vpow.pop %v428
  %v430 = vadd.f32 %v429, 1.0
  %v431 = vrcp.pop %v430
  %v432 = vmul.f32 1.0, %v431
  %v433 = vtanh.pop %v402
  %v434 = vmul.f32 %v432, %v255
  %436 = vrot.lane.b32.xlu0 %v433, 64
  %v437 = vpop.permute.xlu0 %436
  %v439 = vmul.f32 %v432, %v437
  %441 = vrot.lane.b32.xlu0 %v439, 32
  %v442 = vpop.permute.xlu0 %441
  %v444 = vadd.f32 %v434, %v442
  %v445 = vtanh.pop %v444
  %447 = vrot.lane.b32.xlu0 %v445, 64
  %v448 = vpop.permute.xlu0 %447
  %v450 = vmul.f32 %v432, %v448
  %v451 = vpack.c.bf16 %v426, %v426
  %v454 = vunpack.c.l.s4 1966171168
  %v455 = vunpack.c.0.s8 %v454
  %v456 = vlaneseq
  %v457 = vshrl.u32 %v456, 7
  %v458 = vsub.s32 %v455, %v457
  %v459 = vrot.slane %v451, %v458
  %v461 = vunpack.c.l.s4 1966171168
  %v462 = vunpack.c.0.s8 %v461
  %v463 = vlaneseq
  %v464 = vshrl.u32 %v463, 7
  %v465 = vsub.s32 %v462, %v464
  %v466 = vrot.slane %v459, %v465
  %467 = vrot.lane.b32.xlu0 %v466, 32
  %v468 = vpop.permute.xlu0 %467
  %s470 = scalar_lea.vmem %s7, 1
  %471 = vst.msk [vmem:[%s470] sm:$0x1] %vm281, %v468
  %v472 = vpack.c.bf16 %v450, %v450
  %v475 = vunpack.c.l.s4 1966171168
  %v476 = vunpack.c.0.s8 %v475
  %v477 = vlaneseq
  %v478 = vshrl.u32 %v477, 7
  %v479 = vsub.s32 %v476, %v478
  %v480 = vrot.slane %v472, %v479
  %v482 = vunpack.c.l.s4 1966171168
  %v483 = vunpack.c.0.s8 %v482
  %v484 = vlaneseq
  %v485 = vshrl.u32 %v484, 7
  %v486 = vsub.s32 %v483, %v485
  %v487 = vrot.slane %v480, %v486
  %488 = vrot.lane.b32.xlu0 %v487, 32
  %v489 = vpop.permute.xlu0 %488
  %s491 = scalar_lea.vmem %s8, 1
  %492 = vst.msk [vmem:[%s491] sm:$0x1] %vm281, %v489
  %s493 = scalar_lea.vmem %s0, 2
  %v494 = vld [vmem:[%s493] sm:$0x1]
  %v495 = vunpack.c.l.bf16 %v494
  %v496 = vadd.f32 %v495, %v55
  %497 = vrot.lane.b32.xlu0 %v451, 32
  %v498 = vpop.permute.xlu0 %497
  %v500 = vsel %vm87, %v498, 0
  %502 = vmatprep.subr.bf16.mxu0 0
  %503 = vmatpush1.bf16.msra.mxu0 %v83
  %504 = vmatprep.subr.bf16.mxu0 0
  %505 = vmatpush1.bf16.msra.mxu0 %v84
  %506 = vmatprep.subr.bf16.mxu0 0
  %507 = vmatpush1.bf16.msra.mxu0 0
  %508 = vmatprep.subr.bf16.mxu0 0
  %509 = vmatpush1.bf16.msra.mxu0 0
  %510 = vmatprep.subr.bf16.mxu0 0
  %511 = vmatpush1.bf16.msra.mxu0 0
  %512 = vmatprep.subr.bf16.mxu0 0
  %513 = vmatpush1.bf16.msra.mxu0 0
  %514 = vmatprep.subr.bf16.mxu0 0
  %515 = vmatpush1.bf16.msra.mxu0 0
  %516 = vmatprep.subr.bf16.mxu0 0
  %517 = vmatpush1.bf16.msra.mxu0 0
  %518 = vmatprep.subr.bf16.mxu0 0
  %519 = vmatpush1.bf16.msra.mxu0 0
  %520 = vmatprep.subr.bf16.mxu0 0
  %521 = vmatpush1.bf16.msra.mxu0 0
  %522 = vmatprep.subr.bf16.mxu0 0
  %523 = vmatpush1.bf16.msra.mxu0 0
  %524 = vmatprep.subr.bf16.mxu0 0
  %525 = vmatpush1.bf16.msra.mxu0 0
  %526 = vmatprep.subr.bf16.mxu0 0
  %527 = vmatpush1.bf16.msra.mxu0 0
  %528 = vmatprep.subr.bf16.mxu0 0
  %529 = vmatpush1.bf16.msra.mxu0 0
  %530 = vmatprep.subr.bf16.mxu0 0
  %531 = vmatpush1.bf16.msra.mxu0 0
  %532 = vmatprep.subr.bf16.mxu0 0
  %533 = vmatpush1.bf16.msra.mxu0 0
  %534 = vmatprep.mubr.bf16.mxu0 0
  %535 = vmatmul.mubr.bf16.gmra.mrb[0].mxu0 %v500
  %v536 = vpop.f32.mrb[0].mxu0
  %v537 = vadd.f32 0.0, %v536
  %v538 = vpop.f32.mrb[0].mxu0
  %v539 = vpop.f32.mrb[0].mxu0
  %v540 = vpop.f32.mrb[0].mxu0
  %541 = vdwg.mxu0
  %v542 = vadd.f32 %v496, %v537
  %s543 = scalar_lea.vmem %s1, 2
  %v544 = vld [vmem:[%s543] sm:$0x1]
  %v545 = vunpack.c.l.bf16 %v544
  %v546 = vadd.f32 %v545, %v63
  %547 = vrot.lane.b32.xlu0 %v472, 32
  %v548 = vpop.permute.xlu0 %547
  %v550 = vsel %vm87, %v548, 0
  %552 = vmatprep.subr.bf16.mxu0 0
  %553 = vmatpush1.bf16.msra.mxu0 %v144
  %554 = vmatprep.subr.bf16.mxu0 0
  %555 = vmatpush1.bf16.msra.mxu0 %v145
  %556 = vmatprep.subr.bf16.mxu0 0
  %557 = vmatpush1.bf16.msra.mxu0 0
  %558 = vmatprep.subr.bf16.mxu0 0
  %559 = vmatpush1.bf16.msra.mxu0 0
  %560 = vmatprep.subr.bf16.mxu0 0
  %561 = vmatpush1.bf16.msra.mxu0 0
  %562 = vmatprep.subr.bf16.mxu0 0
  %563 = vmatpush1.bf16.msra.mxu0 0
  %564 = vmatprep.subr.bf16.mxu0 0
  %565 = vmatpush1.bf16.msra.mxu0 0
  %566 = vmatprep.subr.bf16.mxu0 0
  %567 = vmatpush1.bf16.msra.mxu0 0
  %568 = vmatprep.subr.bf16.mxu0 0
  %569 = vmatpush1.bf16.msra.mxu0 0
  %570 = vmatprep.subr.bf16.mxu0 0
  %571 = vmatpush1.bf16.msra.mxu0 0
  %572 = vmatprep.subr.bf16.mxu0 0
  %573 = vmatpush1.bf16.msra.mxu0 0
  %574 = vmatprep.subr.bf16.mxu0 0
  %575 = vmatpush1.bf16.msra.mxu0 0
  %576 = vmatprep.subr.bf16.mxu0 0
  %577 = vmatpush1.bf16.msra.mxu0 0
  %578 = vmatprep.subr.bf16.mxu0 0
  %579 = vmatpush1.bf16.msra.mxu0 0
  %580 = vmatprep.subr.bf16.mxu0 0
  %581 = vmatpush1.bf16.msra.mxu0 0
  %582 = vmatprep.subr.bf16.mxu0 0
  %583 = vmatpush1.bf16.msra.mxu0 0
  %584 = vmatprep.mubr.bf16.mxu0 0
  %585 = vmatmul.mubr.bf16.gmra.mrb[0].mxu0 %v550
  %v586 = vpop.f32.mrb[0].mxu0
  %v587 = vadd.f32 0.0, %v586
  %v588 = vpop.f32.mrb[0].mxu0
  %v589 = vpop.f32.mrb[0].mxu0
  %v590 = vpop.f32.mrb[0].mxu0
  %591 = vdwg.mxu0
  %v592 = vadd.f32 %v546, %v587
  %v593 = vxor.u32 %v542, 2147483648
  %v594 = vmul.f32 %v593, 1.442695
  %v595 = vpow.pop %v594
  %v596 = vadd.f32 %v595, 1.0
  %v597 = vrcp.pop %v596
  %v598 = vmul.f32 1.0, %v597
  %v599 = vtanh.pop %v542
  %v600 = vmul.f32 %v598, %v420
  %602 = vrot.lane.b32.xlu0 %v599, 64
  %v603 = vpop.permute.xlu0 %602
  %v605 = vmul.f32 %v598, %v603
  %607 = vrot.lane.b32.xlu0 %v605, 32
  %v608 = vpop.permute.xlu0 %607
  %v610 = vadd.f32 %v600, %v608
  %v611 = vtanh.pop %v610
  %613 = vrot.lane.b32.xlu0 %v611, 64
  %v614 = vpop.permute.xlu0 %613
  %v616 = vmul.f32 %v598, %v614
  %v617 = vxor.u32 %v592, 2147483648
  %v618 = vmul.f32 %v617, 1.442695
  %v619 = vpow.pop %v618
  %v620 = vadd.f32 %v619, 1.0
  %v621 = vrcp.pop %v620
  %v622 = vmul.f32 1.0, %v621
  %v623 = vtanh.pop %v592
  %v624 = vmul.f32 %v622, %v444
  %626 = vrot.lane.b32.xlu0 %v623, 64
  %v627 = vpop.permute.xlu0 %626
  %v629 = vmul.f32 %v622, %v627
  %631 = vrot.lane.b32.xlu0 %v629, 32
  %v632 = vpop.permute.xlu0 %631
  %v634 = vadd.f32 %v624, %v632
  %v635 = vtanh.pop %v634
  %637 = vrot.lane.b32.xlu0 %v635, 64
  %v638 = vpop.permute.xlu0 %637
  %v640 = vmul.f32 %v622, %v638
  %v641 = vpack.c.bf16 %v616, %v616
  %v644 = vunpack.c.l.s4 1966171168
  %v645 = vunpack.c.0.s8 %v644
  %v646 = vlaneseq
  %v647 = vshrl.u32 %v646, 7
  %v648 = vsub.s32 %v645, %v647
  %v649 = vrot.slane %v641, %v648
  %v651 = vunpack.c.l.s4 1966171168
  %v652 = vunpack.c.0.s8 %v651
  %v653 = vlaneseq
  %v654 = vshrl.u32 %v653, 7
  %v655 = vsub.s32 %v652, %v654
  %v656 = vrot.slane %v649, %v655
  %657 = vrot.lane.b32.xlu0 %v656, 32
  %v658 = vpop.permute.xlu0 %657
  %s660 = scalar_lea.vmem %s7, 2
  %661 = vst.msk [vmem:[%s660] sm:$0x1] %vm281, %v658
  %v662 = vpack.c.bf16 %v640, %v640
  %v665 = vunpack.c.l.s4 1966171168
  %v666 = vunpack.c.0.s8 %v665
  %v667 = vlaneseq
  %v668 = vshrl.u32 %v667, 7
  %v669 = vsub.s32 %v666, %v668
  %v670 = vrot.slane %v662, %v669
  %v672 = vunpack.c.l.s4 1966171168
  %v673 = vunpack.c.0.s8 %v672
  %v674 = vlaneseq
  %v675 = vshrl.u32 %v674, 7
  %v676 = vsub.s32 %v673, %v675
  %v677 = vrot.slane %v670, %v676
  %678 = vrot.lane.b32.xlu0 %v677, 32
  %v679 = vpop.permute.xlu0 %678
  %s681 = scalar_lea.vmem %s8, 2
  %682 = vst.msk [vmem:[%s681] sm:$0x1] %vm281, %v679
  %s683 = scalar_lea.vmem %s0, 3
  %v684 = vld [vmem:[%s683] sm:$0x1]
  %v685 = vunpack.c.l.bf16 %v684
  %v686 = vadd.f32 %v685, %v55
  %687 = vrot.lane.b32.xlu0 %v641, 32
  %v688 = vpop.permute.xlu0 %687
  %v690 = vsel %vm87, %v688, 0
  %692 = vmatprep.subr.bf16.mxu0 0
  %693 = vmatpush1.bf16.msra.mxu0 %v83
  %694 = vmatprep.subr.bf16.mxu0 0
  %695 = vmatpush1.bf16.msra.mxu0 %v84
  %696 = vmatprep.subr.bf16.mxu0 0
  %697 = vmatpush1.bf16.msra.mxu0 0
  %698 = vmatprep.subr.bf16.mxu0 0
  %699 = vmatpush1.bf16.msra.mxu0 0
  %700 = vmatprep.subr.bf16.mxu0 0
  %701 = vmatpush1.bf16.msra.mxu0 0
  %702 = vmatprep.subr.bf16.mxu0 0
  %703 = vmatpush1.bf16.msra.mxu0 0
  %704 = vmatprep.subr.bf16.mxu0 0
  %705 = vmatpush1.bf16.msra.mxu0 0
  %706 = vmatprep.subr.bf16.mxu0 0
  %707 = vmatpush1.bf16.msra.mxu0 0
  %708 = vmatprep.subr.bf16.mxu0 0
  %709 = vmatpush1.bf16.msra.mxu0 0
  %710 = vmatprep.subr.bf16.mxu0 0
  %711 = vmatpush1.bf16.msra.mxu0 0
  %712 = vmatprep.subr.bf16.mxu0 0
  %713 = vmatpush1.bf16.msra.mxu0 0
  %714 = vmatprep.subr.bf16.mxu0 0
  %715 = vmatpush1.bf16.msra.mxu0 0
  %716 = vmatprep.subr.bf16.mxu0 0
  %717 = vmatpush1.bf16.msra.mxu0 0
  %718 = vmatprep.subr.bf16.mxu0 0
  %719 = vmatpush1.bf16.msra.mxu0 0
  %720 = vmatprep.subr.bf16.mxu0 0
  %721 = vmatpush1.bf16.msra.mxu0 0
  %722 = vmatprep.subr.bf16.mxu0 0
  %723 = vmatpush1.bf16.msra.mxu0 0
  %724 = vmatprep.mubr.bf16.mxu0 0
  %725 = vmatmul.mubr.bf16.gmra.mrb[0].mxu0 %v690
  %v726 = vpop.f32.mrb[0].mxu0
  %v727 = vadd.f32 0.0, %v726
  %v728 = vpop.f32.mrb[0].mxu0
  %v729 = vpop.f32.mrb[0].mxu0
  %v730 = vpop.f32.mrb[0].mxu0
  %731 = vdwg.mxu0
  %v732 = vadd.f32 %v686, %v727
  %s733 = scalar_lea.vmem %s1, 3
  %v734 = vld [vmem:[%s733] sm:$0x1]
  %v735 = vunpack.c.l.bf16 %v734
  %v736 = vadd.f32 %v735, %v63
  %737 = vrot.lane.b32.xlu0 %v662, 32
  %v738 = vpop.permute.xlu0 %737
  %v740 = vsel %vm87, %v738, 0
  %742 = vmatprep.subr.bf16.mxu0 0
  %743 = vmatpush1.bf16.msra.mxu0 %v144
  %744 = vmatprep.subr.bf16.mxu0 0
  %745 = vmatpush1.bf16.msra.mxu0 %v145
  %746 = vmatprep.subr.bf16.mxu0 0
  %747 = vmatpush1.bf16.msra.mxu0 0
  %748 = vmatprep.subr.bf16.mxu0 0
  %749 = vmatpush1.bf16.msra.mxu0 0
  %750 = vmatprep.subr.bf16.mxu0 0
  %751 = vmatpush1.bf16.msra.mxu0 0
  %752 = vmatprep.subr.bf16.mxu0 0
  %753 = vmatpush1.bf16.msra.mxu0 0
  %754 = vmatprep.subr.bf16.mxu0 0
  %755 = vmatpush1.bf16.msra.mxu0 0
  %756 = vmatprep.subr.bf16.mxu0 0
  %757 = vmatpush1.bf16.msra.mxu0 0
  %758 = vmatprep.subr.bf16.mxu0 0
  %759 = vmatpush1.bf16.msra.mxu0 0
  %760 = vmatprep.subr.bf16.mxu0 0
  %761 = vmatpush1.bf16.msra.mxu0 0
  %762 = vmatprep.subr.bf16.mxu0 0
  %763 = vmatpush1.bf16.msra.mxu0 0
  %764 = vmatprep.subr.bf16.mxu0 0
  %765 = vmatpush1.bf16.msra.mxu0 0
  %766 = vmatprep.subr.bf16.mxu0 0
  %767 = vmatpush1.bf16.msra.mxu0 0
  %768 = vmatprep.subr.bf16.mxu0 0
  %769 = vmatpush1.bf16.msra.mxu0 0
  %770 = vmatprep.subr.bf16.mxu0 0
  %771 = vmatpush1.bf16.msra.mxu0 0
  %772 = vmatprep.subr.bf16.mxu0 0
  %773 = vmatpush1.bf16.msra.mxu0 0
  %774 = vmatprep.mubr.bf16.mxu0 0
  %775 = vmatmul.mubr.bf16.gmra.mrb[0].mxu0 %v740
  %v776 = vpop.f32.mrb[0].mxu0
  %v777 = vadd.f32 0.0, %v776
  %v778 = vpop.f32.mrb[0].mxu0
  %v779 = vpop.f32.mrb[0].mxu0
  %v780 = vpop.f32.mrb[0].mxu0
  %781 = vdwg.mxu0
  %v782 = vadd.f32 %v736, %v777
  %v783 = vxor.u32 %v732, 2147483648
  %v784 = vmul.f32 %v783, 1.442695
  %v785 = vpow.pop %v784
  %v786 = vadd.f32 %v785, 1.0
  %v787 = vrcp.pop %v786
  %v788 = vmul.f32 1.0, %v787
  %v789 = vtanh.pop %v732
  %v790 = vmul.f32 %v788, %v610
  %792 = vrot.lane.b32.xlu0 %v789, 64
  %v793 = vpop.permute.xlu0 %792
  %v795 = vmul.f32 %v788, %v793
  %797 = vrot.lane.b32.xlu0 %v795, 32
  %v798 = vpop.permute.xlu0 %797
  %v800 = vadd.f32 %v790, %v798
  %v801 = vtanh.pop %v800
  %803 = vrot.lane.b32.xlu0 %v801, 64
  %v804 = vpop.permute.xlu0 %803
  %v806 = vmul.f32 %v788, %v804
  %v807 = vxor.u32 %v782, 2147483648
  %v808 = vmul.f32 %v807, 1.442695
  %v809 = vpow.pop %v808
  %v810 = vadd.f32 %v809, 1.0
  %v811 = vrcp.pop %v810
  %v812 = vmul.f32 1.0, %v811
  %v813 = vtanh.pop %v782
  %v814 = vmul.f32 %v812, %v634
  %816 = vrot.lane.b32.xlu0 %v813, 64
  %v817 = vpop.permute.xlu0 %816
  %v819 = vmul.f32 %v812, %v817
  %821 = vrot.lane.b32.xlu0 %v819, 32
  %v822 = vpop.permute.xlu0 %821
  %v824 = vadd.f32 %v814, %v822
  %v825 = vtanh.pop %v824
  %827 = vrot.lane.b32.xlu0 %v825, 64
  %v828 = vpop.permute.xlu0 %827
  %v830 = vmul.f32 %v812, %v828
  %v831 = vpack.c.bf16 %v806, %v806
  %v834 = vunpack.c.l.s4 1966171168
  %v835 = vunpack.c.0.s8 %v834
  %v836 = vlaneseq
  %v837 = vshrl.u32 %v836, 7
  %v838 = vsub.s32 %v835, %v837
  %v839 = vrot.slane %v831, %v838
  %v841 = vunpack.c.l.s4 1966171168
  %v842 = vunpack.c.0.s8 %v841
  %v843 = vlaneseq
  %v844 = vshrl.u32 %v843, 7
  %v845 = vsub.s32 %v842, %v844
  %v846 = vrot.slane %v839, %v845
  %847 = vrot.lane.b32.xlu0 %v846, 32
  %v848 = vpop.permute.xlu0 %847
  %s850 = scalar_lea.vmem %s7, 3
  %851 = vst.msk [vmem:[%s850] sm:$0x1] %vm281, %v848
  %v852 = vpack.c.bf16 %v830, %v830
  %v855 = vunpack.c.l.s4 1966171168
  %v856 = vunpack.c.0.s8 %v855
  %v857 = vlaneseq
  %v858 = vshrl.u32 %v857, 7
  %v859 = vsub.s32 %v856, %v858
  %v860 = vrot.slane %v852, %v859
  %v862 = vunpack.c.l.s4 1966171168
  %v863 = vunpack.c.0.s8 %v862
  %v864 = vlaneseq
  %v865 = vshrl.u32 %v864, 7
  %v866 = vsub.s32 %v863, %v865
  %v867 = vrot.slane %v860, %v866
  %868 = vrot.lane.b32.xlu0 %v867, 32
  %v869 = vpop.permute.xlu0 %868
  %s871 = scalar_lea.vmem %s8, 3
  %872 = vst.msk [vmem:[%s871] sm:$0x1] %vm281, %v869
  %s873 = scalar_lea.vmem %s0, 4
  %v874 = vld [vmem:[%s873] sm:$0x1]
  %v875 = vunpack.c.l.bf16 %v874
  %v876 = vadd.f32 %v875, %v55
  %877 = vrot.lane.b32.xlu0 %v831, 32
  %v878 = vpop.permute.xlu0 %877
  %v880 = vsel %vm87, %v878, 0
  %882 = vmatprep.subr.bf16.mxu0 0
  %883 = vmatpush1.bf16.msra.mxu0 %v83
  %884 = vmatprep.subr.bf16.mxu0 0
  %885 = vmatpush1.bf16.msra.mxu0 %v84
  %886 = vmatprep.subr.bf16.mxu0 0
  %887 = vmatpush1.bf16.msra.mxu0 0
  %888 = vmatprep.subr.bf16.mxu0 0
  %889 = vmatpush1.bf16.msra.mxu0 0
  %890 = vmatprep.subr.bf16.mxu0 0
  %891 = vmatpush1.bf16.msra.mxu0 0
  %892 = vmatprep.subr.bf16.mxu0 0
  %893 = vmatpush1.bf16.msra.mxu0 0
  %894 = vmatprep.subr.bf16.mxu0 0
  %895 = vmatpush1.bf16.msra.mxu0 0
  %896 = vmatprep.subr.bf16.mxu0 0
  %897 = vmatpush1.bf16.msra.mxu0 0
  %898 = vmatprep.subr.bf16.mxu0 0
  %899 = vmatpush1.bf16.msra.mxu0 0
  %900 = vmatprep.subr.bf16.mxu0 0
  %901 = vmatpush1.bf16.msra.mxu0 0
  %902 = vmatprep.subr.bf16.mxu0 0
  %903 = vmatpush1.bf16.msra.mxu0 0
  %904 = vmatprep.subr.bf16.mxu0 0
  %905 = vmatpush1.bf16.msra.mxu0 0
  %906 = vmatprep.subr.bf16.mxu0 0
  %907 = vmatpush1.bf16.msra.mxu0 0
  %908 = vmatprep.subr.bf16.mxu0 0
  %909 = vmatpush1.bf16.msra.mxu0 0
  %910 = vmatprep.subr.bf16.mxu0 0
  %911 = vmatpush1.bf16.msra.mxu0 0
  %912 = vmatprep.subr.bf16.mxu0 0
  %913 = vmatpush1.bf16.msra.mxu0 0
  %914 = vmatprep.mubr.bf16.mxu0 0
  %915 = vmatmul.mubr.bf16.gmra.mrb[0].mxu0 %v880
  %v916 = vpop.f32.mrb[0].mxu0
  %v917 = vadd.f32 0.0, %v916
  %v918 = vpop.f32.mrb[0].mxu0
  %v919 = vpop.f32.mrb[0].mxu0
  %v920 = vpop.f32.mrb[0].mxu0
  %921 = vdwg.mxu0
  %v922 = vadd.f32 %v876, %v917
  %s923 = scalar_lea.vmem %s1, 4
  %v924 = vld [vmem:[%s923] sm:$0x1]
  %v925 = vunpack.c.l.bf16 %v924
  %v926 = vadd.f32 %v925, %v63
  %927 = vrot.lane.b32.xlu0 %v852, 32
  %v928 = vpop.permute.xlu0 %927
  %v930 = vsel %vm87, %v928, 0
  %932 = vmatprep.subr.bf16.mxu0 0
  %933 = vmatpush1.bf16.msra.mxu0 %v144
  %934 = vmatprep.subr.bf16.mxu0 0
  %935 = vmatpush1.bf16.msra.mxu0 %v145
  %936 = vmatprep.subr.bf16.mxu0 0
  %937 = vmatpush1.bf16.msra.mxu0 0
  %938 = vmatprep.subr.bf16.mxu0 0
  %939 = vmatpush1.bf16.msra.mxu0 0
  %940 = vmatprep.subr.bf16.mxu0 0
  %941 = vmatpush1.bf16.msra.mxu0 0
  %942 = vmatprep.subr.bf16.mxu0 0
  %943 = vmatpush1.bf16.msra.mxu0 0
  %944 = vmatprep.subr.bf16.mxu0 0
  %945 = vmatpush1.bf16.msra.mxu0 0
  %946 = vmatprep.subr.bf16.mxu0 0
  %947 = vmatpush1.bf16.msra.mxu0 0
  %948 = vmatprep.subr.bf16.mxu0 0
  %949 = vmatpush1.bf16.msra.mxu0 0
  %950 = vmatprep.subr.bf16.mxu0 0
  %951 = vmatpush1.bf16.msra.mxu0 0
  %952 = vmatprep.subr.bf16.mxu0 0
  %953 = vmatpush1.bf16.msra.mxu0 0
  %954 = vmatprep.subr.bf16.mxu0 0
  %955 = vmatpush1.bf16.msra.mxu0 0
  %956 = vmatprep.subr.bf16.mxu0 0
  %957 = vmatpush1.bf16.msra.mxu0 0
  %958 = vmatprep.subr.bf16.mxu0 0
  %959 = vmatpush1.bf16.msra.mxu0 0
  %960 = vmatprep.subr.bf16.mxu0 0
  %961 = vmatpush1.bf16.msra.mxu0 0
  %962 = vmatprep.subr.bf16.mxu0 0
  %963 = vmatpush1.bf16.msra.mxu0 0
  %964 = vmatprep.mubr.bf16.mxu0 0
  %965 = vmatmul.mubr.bf16.gmra.mrb[0].mxu0 %v930
  %v966 = vpop.f32.mrb[0].mxu0
  %v967 = vadd.f32 0.0, %v966
  %v968 = vpop.f32.mrb[0].mxu0
  %v969 = vpop.f32.mrb[0].mxu0
  %v970 = vpop.f32.mrb[0].mxu0
  %971 = vdwg.mxu0
  %v972 = vadd.f32 %v926, %v967
  %v973 = vxor.u32 %v922, 2147483648
  %v974 = vmul.f32 %v973, 1.442695
  %v975 = vpow.pop %v974
  %v976 = vadd.f32 %v975, 1.0
  %v977 = vrcp.pop %v976
  %v978 = vmul.f32 1.0, %v977
  %v979 = vtanh.pop %v922
  %v980 = vmul.f32 %v978, %v800
  %982 = vrot.lane.b32.xlu0 %v979, 64
  %v983 = vpop.permute.xlu0 %982
  %v985 = vmul.f32 %v978, %v983
  %987 = vrot.lane.b32.xlu0 %v985, 32
  %v988 = vpop.permute.xlu0 %987
  %v990 = vadd.f32 %v980, %v988
  %v991 = vtanh.pop %v990
  %993 = vrot.lane.b32.xlu0 %v991, 64
  %v994 = vpop.permute.xlu0 %993
  %v996 = vmul.f32 %v978, %v994
  %v997 = vxor.u32 %v972, 2147483648
  %v998 = vmul.f32 %v997, 1.442695
  %v999 = vpow.pop %v998
  %v1000 = vadd.f32 %v999, 1.0
  %v1001 = vrcp.pop %v1000
  %v1002 = vmul.f32 1.0, %v1001
  %v1003 = vtanh.pop %v972
  %v1004 = vmul.f32 %v1002, %v824
  %1006 = vrot.lane.b32.xlu0 %v1003, 64
  %v1007 = vpop.permute.xlu0 %1006
  %v1009 = vmul.f32 %v1002, %v1007
  %1011 = vrot.lane.b32.xlu0 %v1009, 32
  %v1012 = vpop.permute.xlu0 %1011
  %v1014 = vadd.f32 %v1004, %v1012
  %v1015 = vtanh.pop %v1014
  %1017 = vrot.lane.b32.xlu0 %v1015, 64
  %v1018 = vpop.permute.xlu0 %1017
  %v1020 = vmul.f32 %v1002, %v1018
  %v1021 = vpack.c.bf16 %v996, %v996
  %v1024 = vunpack.c.l.s4 1966171168
  %v1025 = vunpack.c.0.s8 %v1024
  %v1026 = vlaneseq
  %v1027 = vshrl.u32 %v1026, 7
  %v1028 = vsub.s32 %v1025, %v1027
  %v1029 = vrot.slane %v1021, %v1028
  %v1031 = vunpack.c.l.s4 1966171168
  %v1032 = vunpack.c.0.s8 %v1031
  %v1033 = vlaneseq
  %v1034 = vshrl.u32 %v1033, 7
  %v1035 = vsub.s32 %v1032, %v1034
  %v1036 = vrot.slane %v1029, %v1035
  %1037 = vrot.lane.b32.xlu0 %v1036, 32
  %v1038 = vpop.permute.xlu0 %1037
  %s1040 = scalar_lea.vmem %s7, 4
  %1041 = vst.msk [vmem:[%s1040] sm:$0x1] %vm281, %v1038
  %v1042 = vpack.c.bf16 %v1020, %v1020
  %v1045 = vunpack.c.l.s4 1966171168
  %v1046 = vunpack.c.0.s8 %v1045
  %v1047 = vlaneseq
  %v1048 = vshrl.u32 %v1047, 7
  %v1049 = vsub.s32 %v1046, %v1048
  %v1050 = vrot.slane %v1042, %v1049
  %v1052 = vunpack.c.l.s4 1966171168
  %v1053 = vunpack.c.0.s8 %v1052
  %v1054 = vlaneseq
  %v1055 = vshrl.u32 %v1054, 7
  %v1056 = vsub.s32 %v1053, %v1055
  %v1057 = vrot.slane %v1050, %v1056
  %1058 = vrot.lane.b32.xlu0 %v1057, 32
  %v1059 = vpop.permute.xlu0 %1058
  %s1061 = scalar_lea.vmem %s8, 4
  %1062 = vst.msk [vmem:[%s1061] sm:$0x1] %vm281, %v1059
  %s1063 = scalar_lea.vmem %s0, 5
  %v1064 = vld [vmem:[%s1063] sm:$0x1]
  %v1065 = vunpack.c.l.bf16 %v1064
  %v1066 = vadd.f32 %v1065, %v55
  %1067 = vrot.lane.b32.xlu0 %v1021, 32
  %v1068 = vpop.permute.xlu0 %1067
  %v1070 = vsel %vm87, %v1068, 0
  %1072 = vmatprep.subr.bf16.mxu0 0
  %1073 = vmatpush1.bf16.msra.mxu0 %v83
  %1074 = vmatprep.subr.bf16.mxu0 0
  %1075 = vmatpush1.bf16.msra.mxu0 %v84
  %1076 = vmatprep.subr.bf16.mxu0 0
  %1077 = vmatpush1.bf16.msra.mxu0 0
  %1078 = vmatprep.subr.bf16.mxu0 0
  %1079 = vmatpush1.bf16.msra.mxu0 0
  %1080 = vmatprep.subr.bf16.mxu0 0
  %1081 = vmatpush1.bf16.msra.mxu0 0
  %1082 = vmatprep.subr.bf16.mxu0 0
  %1083 = vmatpush1.bf16.msra.mxu0 0
  %1084 = vmatprep.subr.bf16.mxu0 0
  %1085 = vmatpush1.bf16.msra.mxu0 0
  %1086 = vmatprep.subr.bf16.mxu0 0
  %1087 = vmatpush1.bf16.msra.mxu0 0
  %1088 = vmatprep.subr.bf16.mxu0 0
  %1089 = vmatpush1.bf16.msra.mxu0 0
  %1090 = vmatprep.subr.bf16.mxu0 0
  %1091 = vmatpush1.bf16.msra.mxu0 0
  %1092 = vmatprep.subr.bf16.mxu0 0
  %1093 = vmatpush1.bf16.msra.mxu0 0
  %1094 = vmatprep.subr.bf16.mxu0 0
  %1095 = vmatpush1.bf16.msra.mxu0 0
  %1096 = vmatprep.subr.bf16.mxu0 0
  %1097 = vmatpush1.bf16.msra.mxu0 0
  %1098 = vmatprep.subr.bf16.mxu0 0
  %1099 = vmatpush1.bf16.msra.mxu0 0
  %1100 = vmatprep.subr.bf16.mxu0 0
  %1101 = vmatpush1.bf16.msra.mxu0 0
  %1102 = vmatprep.subr.bf16.mxu0 0
  %1103 = vmatpush1.bf16.msra.mxu0 0
  %1104 = vmatprep.mubr.bf16.mxu0 0
  %1105 = vmatmul.mubr.bf16.gmra.mrb[0].mxu0 %v1070
  %v1106 = vpop.f32.mrb[0].mxu0
  %v1107 = vadd.f32 0.0, %v1106
  %v1108 = vpop.f32.mrb[0].mxu0
  %v1109 = vpop.f32.mrb[0].mxu0
  %v1110 = vpop.f32.mrb[0].mxu0
  %1111 = vdwg.mxu0
  %v1112 = vadd.f32 %v1066, %v1107
  %s1113 = scalar_lea.vmem %s1, 5
  %v1114 = vld [vmem:[%s1113] sm:$0x1]
  %v1115 = vunpack.c.l.bf16 %v1114
  %v1116 = vadd.f32 %v1115, %v63
  %1117 = vrot.lane.b32.xlu0 %v1042, 32
  %v1118 = vpop.permute.xlu0 %1117
  %v1120 = vsel %vm87, %v1118, 0
  %1122 = vmatprep.subr.bf16.mxu0 0
  %1123 = vmatpush1.bf16.msra.mxu0 %v144
  %1124 = vmatprep.subr.bf16.mxu0 0
  %1125 = vmatpush1.bf16.msra.mxu0 %v145
  %1126 = vmatprep.subr.bf16.mxu0 0
  %1127 = vmatpush1.bf16.msra.mxu0 0
  %1128 = vmatprep.subr.bf16.mxu0 0
  %1129 = vmatpush1.bf16.msra.mxu0 0
  %1130 = vmatprep.subr.bf16.mxu0 0
  %1131 = vmatpush1.bf16.msra.mxu0 0
  %1132 = vmatprep.subr.bf16.mxu0 0
  %1133 = vmatpush1.bf16.msra.mxu0 0
  %1134 = vmatprep.subr.bf16.mxu0 0
  %1135 = vmatpush1.bf16.msra.mxu0 0
  %1136 = vmatprep.subr.bf16.mxu0 0
  %1137 = vmatpush1.bf16.msra.mxu0 0
  %1138 = vmatprep.subr.bf16.mxu0 0
  %1139 = vmatpush1.bf16.msra.mxu0 0
  %1140 = vmatprep.subr.bf16.mxu0 0
  %1141 = vmatpush1.bf16.msra.mxu0 0
  %1142 = vmatprep.subr.bf16.mxu0 0
  %1143 = vmatpush1.bf16.msra.mxu0 0
  %1144 = vmatprep.subr.bf16.mxu0 0
  %1145 = vmatpush1.bf16.msra.mxu0 0
  %1146 = vmatprep.subr.bf16.mxu0 0
  %1147 = vmatpush1.bf16.msra.mxu0 0
  %1148 = vmatprep.subr.bf16.mxu0 0
  %1149 = vmatpush1.bf16.msra.mxu0 0
  %1150 = vmatprep.subr.bf16.mxu0 0
  %1151 = vmatpush1.bf16.msra.mxu0 0
  %1152 = vmatprep.subr.bf16.mxu0 0
  %1153 = vmatpush1.bf16.msra.mxu0 0
  %1154 = vmatprep.mubr.bf16.mxu0 0
  %1155 = vmatmul.mubr.bf16.gmra.mrb[0].mxu0 %v1120
  %v1156 = vpop.f32.mrb[0].mxu0
  %v1157 = vadd.f32 0.0, %v1156
  %v1158 = vpop.f32.mrb[0].mxu0
  %v1159 = vpop.f32.mrb[0].mxu0
  %v1160 = vpop.f32.mrb[0].mxu0
  %1161 = vdwg.mxu0
  %v1162 = vadd.f32 %v1116, %v1157
  %v1163 = vxor.u32 %v1112, 2147483648
  %v1164 = vmul.f32 %v1163, 1.442695
  %v1165 = vpow.pop %v1164
  %v1166 = vadd.f32 %v1165, 1.0
  %v1167 = vrcp.pop %v1166
  %v1168 = vmul.f32 1.0, %v1167
  %v1169 = vtanh.pop %v1112
  %v1170 = vmul.f32 %v1168, %v990
  %1172 = vrot.lane.b32.xlu0 %v1169, 64
  %v1173 = vpop.permute.xlu0 %1172
  %v1175 = vmul.f32 %v1168, %v1173
  %1177 = vrot.lane.b32.xlu0 %v1175, 32
  %v1178 = vpop.permute.xlu0 %1177
  %v1180 = vadd.f32 %v1170, %v1178
  %v1181 = vtanh.pop %v1180
  %1183 = vrot.lane.b32.xlu0 %v1181, 64
  %v1184 = vpop.permute.xlu0 %1183
  %v1186 = vmul.f32 %v1168, %v1184
  %v1187 = vxor.u32 %v1162, 2147483648
  %v1188 = vmul.f32 %v1187, 1.442695
  %v1189 = vpow.pop %v1188
  %v1190 = vadd.f32 %v1189, 1.0
  %v1191 = vrcp.pop %v1190
  %v1192 = vmul.f32 1.0, %v1191
  %v1193 = vtanh.pop %v1162
  %v1194 = vmul.f32 %v1192, %v1014
  %1196 = vrot.lane.b32.xlu0 %v1193, 64
  %v1197 = vpop.permute.xlu0 %1196
  %v1199 = vmul.f32 %v1192, %v1197
  %1201 = vrot.lane.b32.xlu0 %v1199, 32
  %v1202 = vpop.permute.xlu0 %1201
  %v1204 = vadd.f32 %v1194, %v1202
  %v1205 = vtanh.pop %v1204
  %1207 = vrot.lane.b32.xlu0 %v1205, 64
  %v1208 = vpop.permute.xlu0 %1207
  %v1210 = vmul.f32 %v1192, %v1208
  %v1211 = vpack.c.bf16 %v1186, %v1186
  %v1214 = vunpack.c.l.s4 1966171168
  %v1215 = vunpack.c.0.s8 %v1214
  %v1216 = vlaneseq
  %v1217 = vshrl.u32 %v1216, 7
  %v1218 = vsub.s32 %v1215, %v1217
  %v1219 = vrot.slane %v1211, %v1218
  %v1221 = vunpack.c.l.s4 1966171168
  %v1222 = vunpack.c.0.s8 %v1221
  %v1223 = vlaneseq
  %v1224 = vshrl.u32 %v1223, 7
  %v1225 = vsub.s32 %v1222, %v1224
  %v1226 = vrot.slane %v1219, %v1225
  %1227 = vrot.lane.b32.xlu0 %v1226, 32
  %v1228 = vpop.permute.xlu0 %1227
  %s1230 = scalar_lea.vmem %s7, 5
  %1231 = vst.msk [vmem:[%s1230] sm:$0x1] %vm281, %v1228
  %v1232 = vpack.c.bf16 %v1210, %v1210
  %v1235 = vunpack.c.l.s4 1966171168
  %v1236 = vunpack.c.0.s8 %v1235
  %v1237 = vlaneseq
  %v1238 = vshrl.u32 %v1237, 7
  %v1239 = vsub.s32 %v1236, %v1238
  %v1240 = vrot.slane %v1232, %v1239
  %v1242 = vunpack.c.l.s4 1966171168
  %v1243 = vunpack.c.0.s8 %v1242
  %v1244 = vlaneseq
  %v1245 = vshrl.u32 %v1244, 7
  %v1246 = vsub.s32 %v1243, %v1245
  %v1247 = vrot.slane %v1240, %v1246
  %1248 = vrot.lane.b32.xlu0 %v1247, 32
  %v1249 = vpop.permute.xlu0 %1248
  %s1251 = scalar_lea.vmem %s8, 5
  %1252 = vst.msk [vmem:[%s1251] sm:$0x1] %vm281, %v1249
  %s1253 = scalar_lea.vmem %s0, 6
  %v1254 = vld [vmem:[%s1253] sm:$0x1]
  %v1255 = vunpack.c.l.bf16 %v1254
  %v1256 = vadd.f32 %v1255, %v55
  %1257 = vrot.lane.b32.xlu0 %v1211, 32
  %v1258 = vpop.permute.xlu0 %1257
  %v1260 = vsel %vm87, %v1258, 0
  %1262 = vmatprep.subr.bf16.mxu0 0
  %1263 = vmatpush1.bf16.msra.mxu0 %v83
  %1264 = vmatprep.subr.bf16.mxu0 0
  %1265 = vmatpush1.bf16.msra.mxu0 %v84
  %1266 = vmatprep.subr.bf16.mxu0 0
  %1267 = vmatpush1.bf16.msra.mxu0 0
  %1268 = vmatprep.subr.bf16.mxu0 0
  %1269 = vmatpush1.bf16.msra.mxu0 0
  %1270 = vmatprep.subr.bf16.mxu0 0
  %1271 = vmatpush1.bf16.msra.mxu0 0
  %1272 = vmatprep.subr.bf16.mxu0 0
  %1273 = vmatpush1.bf16.msra.mxu0 0
  %1274 = vmatprep.subr.bf16.mxu0 0
  %1275 = vmatpush1.bf16.msra.mxu0 0
  %1276 = vmatprep.subr.bf16.mxu0 0
  %1277 = vmatpush1.bf16.msra.mxu0 0
  %1278 = vmatprep.subr.bf16.mxu0 0
  %1279 = vmatpush1.bf16.msra.mxu0 0
  %1280 = vmatprep.subr.bf16.mxu0 0
  %1281 = vmatpush1.bf16.msra.mxu0 0
  %1282 = vmatprep.subr.bf16.mxu0 0
  %1283 = vmatpush1.bf16.msra.mxu0 0
  %1284 = vmatprep.subr.bf16.mxu0 0
  %1285 = vmatpush1.bf16.msra.mxu0 0
  %1286 = vmatprep.subr.bf16.mxu0 0
  %1287 = vmatpush1.bf16.msra.mxu0 0
  %1288 = vmatprep.subr.bf16.mxu0 0
  %1289 = vmatpush1.bf16.msra.mxu0 0
  %1290 = vmatprep.subr.bf16.mxu0 0
  %1291 = vmatpush1.bf16.msra.mxu0 0
  %1292 = vmatprep.subr.bf16.mxu0 0
  %1293 = vmatpush1.bf16.msra.mxu0 0
  %1294 = vmatprep.mubr.bf16.mxu0 0
  %1295 = vmatmul.mubr.bf16.gmra.mrb[0].mxu0 %v1260
  %v1296 = vpop.f32.mrb[0].mxu0
  %v1297 = vadd.f32 0.0, %v1296
  %v1298 = vpop.f32.mrb[0].mxu0
  %v1299 = vpop.f32.mrb[0].mxu0
  %v1300 = vpop.f32.mrb[0].mxu0
  %1301 = vdwg.mxu0
  %v1302 = vadd.f32 %v1256, %v1297
  %s1303 = scalar_lea.vmem %s1, 6
  %v1304 = vld [vmem:[%s1303] sm:$0x1]
  %v1305 = vunpack.c.l.bf16 %v1304
  %v1306 = vadd.f32 %v1305, %v63
  %1307 = vrot.lane.b32.xlu0 %v1232, 32
  %v1308 = vpop.permute.xlu0 %1307
  %v1310 = vsel %vm87, %v1308, 0
  %1312 = vmatprep.subr.bf16.mxu0 0
  %1313 = vmatpush1.bf16.msra.mxu0 %v144
  %1314 = vmatprep.subr.bf16.mxu0 0
  %1315 = vmatpush1.bf16.msra.mxu0 %v145
  %1316 = vmatprep.subr.bf16.mxu0 0
  %1317 = vmatpush1.bf16.msra.mxu0 0
  %1318 = vmatprep.subr.bf16.mxu0 0
  %1319 = vmatpush1.bf16.msra.mxu0 0
  %1320 = vmatprep.subr.bf16.mxu0 0
  %1321 = vmatpush1.bf16.msra.mxu0 0
  %1322 = vmatprep.subr.bf16.mxu0 0
  %1323 = vmatpush1.bf16.msra.mxu0 0
  %1324 = vmatprep.subr.bf16.mxu0 0
  %1325 = vmatpush1.bf16.msra.mxu0 0
  %1326 = vmatprep.subr.bf16.mxu0 0
  %1327 = vmatpush1.bf16.msra.mxu0 0
  %1328 = vmatprep.subr.bf16.mxu0 0
  %1329 = vmatpush1.bf16.msra.mxu0 0
  %1330 = vmatprep.subr.bf16.mxu0 0
  %1331 = vmatpush1.bf16.msra.mxu0 0
  %1332 = vmatprep.subr.bf16.mxu0 0
  %1333 = vmatpush1.bf16.msra.mxu0 0
  %1334 = vmatprep.subr.bf16.mxu0 0
  %1335 = vmatpush1.bf16.msra.mxu0 0
  %1336 = vmatprep.subr.bf16.mxu0 0
  %1337 = vmatpush1.bf16.msra.mxu0 0
  %1338 = vmatprep.subr.bf16.mxu0 0
  %1339 = vmatpush1.bf16.msra.mxu0 0
  %1340 = vmatprep.subr.bf16.mxu0 0
  %1341 = vmatpush1.bf16.msra.mxu0 0
  %1342 = vmatprep.subr.bf16.mxu0 0
  %1343 = vmatpush1.bf16.msra.mxu0 0
  %1344 = vmatprep.mubr.bf16.mxu0 0
  %1345 = vmatmul.mubr.bf16.gmra.mrb[0].mxu0 %v1310
  %v1346 = vpop.f32.mrb[0].mxu0
  %v1347 = vadd.f32 0.0, %v1346
  %v1348 = vpop.f32.mrb[0].mxu0
  %v1349 = vpop.f32.mrb[0].mxu0
  %v1350 = vpop.f32.mrb[0].mxu0
  %1351 = vdwg.mxu0
  %v1352 = vadd.f32 %v1306, %v1347
  %v1353 = vxor.u32 %v1302, 2147483648
  %v1354 = vmul.f32 %v1353, 1.442695
  %v1355 = vpow.pop %v1354
  %v1356 = vadd.f32 %v1355, 1.0
  %v1357 = vrcp.pop %v1356
  %v1358 = vmul.f32 1.0, %v1357
  %v1359 = vtanh.pop %v1302
  %v1360 = vmul.f32 %v1358, %v1180
  %1362 = vrot.lane.b32.xlu0 %v1359, 64
  %v1363 = vpop.permute.xlu0 %1362
  %v1365 = vmul.f32 %v1358, %v1363
  %1367 = vrot.lane.b32.xlu0 %v1365, 32
  %v1368 = vpop.permute.xlu0 %1367
  %v1370 = vadd.f32 %v1360, %v1368
  %v1371 = vtanh.pop %v1370
  %1373 = vrot.lane.b32.xlu0 %v1371, 64
  %v1374 = vpop.permute.xlu0 %1373
  %v1376 = vmul.f32 %v1358, %v1374
  %v1377 = vxor.u32 %v1352, 2147483648
  %v1378 = vmul.f32 %v1377, 1.442695
  %v1379 = vpow.pop %v1378
  %v1380 = vadd.f32 %v1379, 1.0
  %v1381 = vrcp.pop %v1380
  %v1382 = vmul.f32 1.0, %v1381
  %v1383 = vtanh.pop %v1352
  %v1384 = vmul.f32 %v1382, %v1204
  %1386 = vrot.lane.b32.xlu0 %v1383, 64
  %v1387 = vpop.permute.xlu0 %1386
  %v1389 = vmul.f32 %v1382, %v1387
  %1391 = vrot.lane.b32.xlu0 %v1389, 32
  %v1392 = vpop.permute.xlu0 %1391
  %v1394 = vadd.f32 %v1384, %v1392
  %v1395 = vtanh.pop %v1394
  %1397 = vrot.lane.b32.xlu0 %v1395, 64
  %v1398 = vpop.permute.xlu0 %1397
  %v1400 = vmul.f32 %v1382, %v1398
  %v1401 = vpack.c.bf16 %v1376, %v1376
  %v1404 = vunpack.c.l.s4 1966171168
  %v1405 = vunpack.c.0.s8 %v1404
  %v1406 = vlaneseq
  %v1407 = vshrl.u32 %v1406, 7
  %v1408 = vsub.s32 %v1405, %v1407
  %v1409 = vrot.slane %v1401, %v1408
  %v1411 = vunpack.c.l.s4 1966171168
  %v1412 = vunpack.c.0.s8 %v1411
  %v1413 = vlaneseq
  %v1414 = vshrl.u32 %v1413, 7
  %v1415 = vsub.s32 %v1412, %v1414
  %v1416 = vrot.slane %v1409, %v1415
  %1417 = vrot.lane.b32.xlu0 %v1416, 32
  %v1418 = vpop.permute.xlu0 %1417
  %s1420 = scalar_lea.vmem %s7, 6
  %1421 = vst.msk [vmem:[%s1420] sm:$0x1] %vm281, %v1418
  %v1422 = vpack.c.bf16 %v1400, %v1400
  %v1425 = vunpack.c.l.s4 1966171168
  %v1426 = vunpack.c.0.s8 %v1425
  %v1427 = vlaneseq
  %v1428 = vshrl.u32 %v1427, 7
  %v1429 = vsub.s32 %v1426, %v1428
  %v1430 = vrot.slane %v1422, %v1429
  %v1432 = vunpack.c.l.s4 1966171168
  %v1433 = vunpack.c.0.s8 %v1432
  %v1434 = vlaneseq
  %v1435 = vshrl.u32 %v1434, 7
  %v1436 = vsub.s32 %v1433, %v1435
  %v1437 = vrot.slane %v1430, %v1436
  %1438 = vrot.lane.b32.xlu0 %v1437, 32
  %v1439 = vpop.permute.xlu0 %1438
  %s1441 = scalar_lea.vmem %s8, 6
  %1442 = vst.msk [vmem:[%s1441] sm:$0x1] %vm281, %v1439
  %s1443 = scalar_lea.vmem %s0, 7
  %v1444 = vld [vmem:[%s1443] sm:$0x1]
  %v1445 = vunpack.c.l.bf16 %v1444
  %v1446 = vadd.f32 %v1445, %v55
  %1447 = vrot.lane.b32.xlu0 %v1401, 32
  %v1448 = vpop.permute.xlu0 %1447
  %v1450 = vsel %vm87, %v1448, 0
  %1452 = vmatprep.subr.bf16.mxu0 0
  %1453 = vmatpush1.bf16.msra.mxu0 %v83
  %1454 = vmatprep.subr.bf16.mxu0 0
  %1455 = vmatpush1.bf16.msra.mxu0 %v84
  %1456 = vmatprep.subr.bf16.mxu0 0
  %1457 = vmatpush1.bf16.msra.mxu0 0
  %1458 = vmatprep.subr.bf16.mxu0 0
  %1459 = vmatpush1.bf16.msra.mxu0 0
  %1460 = vmatprep.subr.bf16.mxu0 0
  %1461 = vmatpush1.bf16.msra.mxu0 0
  %1462 = vmatprep.subr.bf16.mxu0 0
  %1463 = vmatpush1.bf16.msra.mxu0 0
  %1464 = vmatprep.subr.bf16.mxu0 0
  %1465 = vmatpush1.bf16.msra.mxu0 0
  %1466 = vmatprep.subr.bf16.mxu0 0
  %1467 = vmatpush1.bf16.msra.mxu0 0
  %1468 = vmatprep.subr.bf16.mxu0 0
  %1469 = vmatpush1.bf16.msra.mxu0 0
  %1470 = vmatprep.subr.bf16.mxu0 0
  %1471 = vmatpush1.bf16.msra.mxu0 0
  %1472 = vmatprep.subr.bf16.mxu0 0
  %1473 = vmatpush1.bf16.msra.mxu0 0
  %1474 = vmatprep.subr.bf16.mxu0 0
  %1475 = vmatpush1.bf16.msra.mxu0 0
  %1476 = vmatprep.subr.bf16.mxu0 0
  %1477 = vmatpush1.bf16.msra.mxu0 0
  %1478 = vmatprep.subr.bf16.mxu0 0
  %1479 = vmatpush1.bf16.msra.mxu0 0
  %1480 = vmatprep.subr.bf16.mxu0 0
  %1481 = vmatpush1.bf16.msra.mxu0 0
  %1482 = vmatprep.subr.bf16.mxu0 0
  %1483 = vmatpush1.bf16.msra.mxu0 0
  %1484 = vmatprep.mubr.bf16.mxu0 0
  %1485 = vmatmul.mubr.bf16.gmra.mrb[0].mxu0 %v1450
  %v1486 = vpop.f32.mrb[0].mxu0
  %v1487 = vadd.f32 0.0, %v1486
  %v1488 = vpop.f32.mrb[0].mxu0
  %v1489 = vpop.f32.mrb[0].mxu0
  %v1490 = vpop.f32.mrb[0].mxu0
  %1491 = vdwg.mxu0
  %v1492 = vadd.f32 %v1446, %v1487
  %s1493 = scalar_lea.vmem %s1, 7
  %v1494 = vld [vmem:[%s1493] sm:$0x1]
  %v1495 = vunpack.c.l.bf16 %v1494
  %v1496 = vadd.f32 %v1495, %v63
  %1497 = vrot.lane.b32.xlu0 %v1422, 32
  %v1498 = vpop.permute.xlu0 %1497
  %v1500 = vsel %vm87, %v1498, 0
  %1502 = vmatprep.subr.bf16.mxu0 0
  %1503 = vmatpush1.bf16.msra.mxu0 %v144
  %1504 = vmatprep.subr.bf16.mxu0 0
  %1505 = vmatpush1.bf16.msra.mxu0 %v145
  %1506 = vmatprep.subr.bf16.mxu0 0
  %1507 = vmatpush1.bf16.msra.mxu0 0
  %1508 = vmatprep.subr.bf16.mxu0 0
  %1509 = vmatpush1.bf16.msra.mxu0 0
  %1510 = vmatprep.subr.bf16.mxu0 0
  %1511 = vmatpush1.bf16.msra.mxu0 0
  %1512 = vmatprep.subr.bf16.mxu0 0
  %1513 = vmatpush1.bf16.msra.mxu0 0
  %1514 = vmatprep.subr.bf16.mxu0 0
  %1515 = vmatpush1.bf16.msra.mxu0 0
  %1516 = vmatprep.subr.bf16.mxu0 0
  %1517 = vmatpush1.bf16.msra.mxu0 0
  %1518 = vmatprep.subr.bf16.mxu0 0
  %1519 = vmatpush1.bf16.msra.mxu0 0
  %1520 = vmatprep.subr.bf16.mxu0 0
  %1521 = vmatpush1.bf16.msra.mxu0 0
  %1522 = vmatprep.subr.bf16.mxu0 0
  %1523 = vmatpush1.bf16.msra.mxu0 0
  %1524 = vmatprep.subr.bf16.mxu0 0
  %1525 = vmatpush1.bf16.msra.mxu0 0
  %1526 = vmatprep.subr.bf16.mxu0 0
  %1527 = vmatpush1.bf16.msra.mxu0 0
  %1528 = vmatprep.subr.bf16.mxu0 0
  %1529 = vmatpush1.bf16.msra.mxu0 0
  %1530 = vmatprep.subr.bf16.mxu0 0
  %1531 = vmatpush1.bf16.msra.mxu0 0
  %1532 = vmatprep.subr.bf16.mxu0 0
  %1533 = vmatpush1.bf16.msra.mxu0 0
  %1534 = vmatprep.mubr.bf16.mxu0 0
  %1535 = vmatmul.mubr.bf16.gmra.mrb[0].mxu0 %v1500
  %v1536 = vpop.f32.mrb[0].mxu0
  %v1537 = vadd.f32 0.0, %v1536
  %v1538 = vpop.f32.mrb[0].mxu0
  %v1539 = vpop.f32.mrb[0].mxu0
  %v1540 = vpop.f32.mrb[0].mxu0
  %1541 = vdwg.mxu0
  %v1542 = vadd.f32 %v1496, %v1537
  %v1543 = vxor.u32 %v1492, 2147483648
  %v1544 = vmul.f32 %v1543, 1.442695
  %v1545 = vpow.pop %v1544
  %v1546 = vadd.f32 %v1545, 1.0
  %v1547 = vrcp.pop %v1546
  %v1548 = vmul.f32 1.0, %v1547
  %v1549 = vtanh.pop %v1492
  %v1550 = vmul.f32 %v1548, %v1370
  %1552 = vrot.lane.b32.xlu0 %v1549, 64
  %v1553 = vpop.permute.xlu0 %1552
  %v1555 = vmul.f32 %v1548, %v1553
  %1557 = vrot.lane.b32.xlu0 %v1555, 32
  %v1558 = vpop.permute.xlu0 %1557
  %v1560 = vadd.f32 %v1550, %v1558
  %v1561 = vtanh.pop %v1560
  %1563 = vrot.lane.b32.xlu0 %v1561, 64
  %v1564 = vpop.permute.xlu0 %1563
  %v1566 = vmul.f32 %v1548, %v1564
  %v1567 = vxor.u32 %v1542, 2147483648
  %v1568 = vmul.f32 %v1567, 1.442695
  %v1569 = vpow.pop %v1568
  %v1570 = vadd.f32 %v1569, 1.0
  %v1571 = vrcp.pop %v1570
  %v1572 = vmul.f32 1.0, %v1571
  %v1573 = vtanh.pop %v1542
  %v1574 = vmul.f32 %v1572, %v1394
  %1576 = vrot.lane.b32.xlu0 %v1573, 64
  %v1577 = vpop.permute.xlu0 %1576
  %v1579 = vmul.f32 %v1572, %v1577
  %1581 = vrot.lane.b32.xlu0 %v1579, 32
  %v1582 = vpop.permute.xlu0 %1581
  %v1584 = vadd.f32 %v1574, %v1582
  %v1585 = vtanh.pop %v1584
  %1587 = vrot.lane.b32.xlu0 %v1585, 64
  %v1588 = vpop.permute.xlu0 %1587
  %v1590 = vmul.f32 %v1572, %v1588
  %v1591 = vpack.c.bf16 %v1566, %v1566
  %v1594 = vunpack.c.l.s4 1966171168
  %v1595 = vunpack.c.0.s8 %v1594
  %v1596 = vlaneseq
  %v1597 = vshrl.u32 %v1596, 7
  %v1598 = vsub.s32 %v1595, %v1597
  %v1599 = vrot.slane %v1591, %v1598
  %v1601 = vunpack.c.l.s4 1966171168
  %v1602 = vunpack.c.0.s8 %v1601
  %v1603 = vlaneseq
  %v1604 = vshrl.u32 %v1603, 7
  %v1605 = vsub.s32 %v1602, %v1604
  %v1606 = vrot.slane %v1599, %v1605
  %1607 = vrot.lane.b32.xlu0 %v1606, 32
  %v1608 = vpop.permute.xlu0 %1607
  %s1610 = scalar_lea.vmem %s7, 7
  %1611 = vst.msk [vmem:[%s1610] sm:$0x1] %vm281, %v1608
  %v1612 = vpack.c.bf16 %v1590, %v1590
  %v1615 = vunpack.c.l.s4 1966171168
  %v1616 = vunpack.c.0.s8 %v1615
  %v1617 = vlaneseq
  %v1618 = vshrl.u32 %v1617, 7
  %v1619 = vsub.s32 %v1616, %v1618
  %v1620 = vrot.slane %v1612, %v1619
  %v1622 = vunpack.c.l.s4 1966171168
  %v1623 = vunpack.c.0.s8 %v1622
  %v1624 = vlaneseq
  %v1625 = vshrl.u32 %v1624, 7
  %v1626 = vsub.s32 %v1623, %v1625
  %v1627 = vrot.slane %v1620, %v1626
  %1628 = vrot.lane.b32.xlu0 %v1627, 32
  %v1629 = vpop.permute.xlu0 %1628
  %s1631 = scalar_lea.vmem %s8, 7
  %1632 = vst.msk [vmem:[%s1631] sm:$0x1] %vm281, %v1629
  %v1635 = vunpack.c.l.s4 1983009808
  %v1636 = vunpack.c.0.s8 %v1635
  %v1637 = vlaneseq
  %v1638 = vshrl.u32 %v1637, 7
  %v1639 = vsub.s32 %v1636, %v1638
  %v1640 = vrot.slane %v1566, %v1639
  %1641 = vrot.lane.b32.xlu0 %v1640, 32
  %v1642 = vpop.permute.xlu0 %1641
  %vm1644 = vcmask 254976
  %1645 = vst.msk [vmem:[#allocation2] sm:$0x3] %vm1644, %v1642
  %v1648 = vunpack.c.l.s4 1983009808
  %v1649 = vunpack.c.0.s8 %v1648
  %v1650 = vlaneseq
  %v1651 = vshrl.u32 %v1650, 7
  %v1652 = vsub.s32 %v1649, %v1651
  %v1653 = vrot.slane %v1560, %v1652
  %1654 = vrot.lane.b32.xlu0 %v1653, 96
  %v1655 = vpop.permute.xlu0 %1654
  %1657 = vst.msk [vmem:[#allocation3] sm:$0x3] %vm1644, %v1655
  %v1660 = vunpack.c.l.s4 1983009808
  %v1661 = vunpack.c.0.s8 %v1660
  %v1662 = vlaneseq
  %v1663 = vshrl.u32 %v1662, 7
  %v1664 = vsub.s32 %v1661, %v1663
  %v1665 = vrot.slane %v1590, %v1664
  %1666 = vrot.lane.b32.xlu0 %v1665, 32
  %v1667 = vpop.permute.xlu0 %1666
  %1669 = vst.msk [vmem:[%s67] sm:$0x3] %vm1644, %v1667
  %v1672 = vunpack.c.l.s4 1983009808
  %v1673 = vunpack.c.0.s8 %v1672
  %v1674 = vlaneseq
  %v1675 = vshrl.u32 %v1674, 7
  %v1676 = vsub.s32 %v1673, %v1675
  %v1677 = vrot.slane %v1584, %v1676
  %1678 = vrot.lane.b32.xlu0 %v1677, 96
  %v1679 = vpop.permute.xlu0 %1678
  %1681 = vst.msk [vmem:[%s69] sm:$0x3] %vm1644, %v1679
  // Predicated region
  $region34: #{a_call__.6} parent=0 // pred_check
    _
  $region35: #{a_call__.6} parent=0 // pred_check_branch
    %1683 = sbr.rel (0) target = $region37
  $region36: #{a_call__.6} parent=0 // pred_region
    _
  $region37: #{a_call__.6} parent=0 // pred_fallthru
    _
  // Predicated region
  $region38: #{a_call__.6} parent=0 // pred_check
    _
  $region39: #{a_call__.6} parent=0 // pred_check_branch
    %1685 = sbr.rel (0) target = $region41
  $region40: #{a_call__.6} parent=0 // pred_region
    _
  $region41: #{a_call__.6} parent=0 // pred_fallthru
    _
  // Predicated region
  $region42: #{a_call__.6} parent=0 // pred_check
    _
  $region43: #{a_call__.6} parent=0 // pred_check_branch
    %1687 = sbr.rel (0) target = $region45
  $region44: #{a_call__.6} parent=0 // pred_region
    _
  $region45: #{a_call__.6} parent=0 // pred_fallthru
    _
  // Predicated region
  $region46: #{a_call__.6} parent=0 // pred_check
    _
  $region47: #{a_call__.6} parent=0 // pred_check_branch
    %1689 = sbr.rel (0) target = $region49
  $region48: #{a_call__.6} parent=0 // pred_region
    _
  $region49: #{a_call__.6} parent=0 // pred_fallthru
    _

</llo_original>
